<compile_context>
chip_gen: v7x
topology: tpu7x:2x2x1
jax: 0.10.0
libtpu: 0.0.40
codegen_flags: <defaults>
</compile_context>

<pallas_src>
import functools

import jax
import jax.numpy as jnp
from jax.experimental import pallas as pl
from jax.experimental.pallas import tpu as pltpu

INPUT_SIZE = 5460
HIDDEN1 = 256
HIDDEN2 = 128
HIDDEN3 = 128
OUTPUT_SIZE = 1


def _round_up(x, m):
    return (x + m - 1) // m * m


# bf16 bytes of the whole resident weight set (W1..W4 + biases are tiny).
_WEIGHT_BYTES_BF16 = 2 * (INPUT_SIZE * HIDDEN1 + HIDDEN1 * HIDDEN2
                          + HIDDEN2 * HIDDEN3 + HIDDEN3 * OUTPUT_SIZE)


def _device_config():
    """(default_tile_m, min_batch_tiles, vmem_limit_bytes) per TPU generation."""
    try:
        kind = jax.devices()[0].device_kind.lower()
    except Exception:
        kind = ""
    if "v5 lite" in kind or "v5lite" in kind or "v5e" in kind:
        return 512, 1, 100 << 20          # 128 MiB physical VMEM, 1 TC
    if "v6" in kind:
        return 1024, 1, 100 << 20         # 128 MiB physical VMEM, 1 TC, mem-bound
    # v7x and anything unknown (v4/v5p megacore): assume 2 TensorCores and a
    # tight (64 MiB-class) VMEM budget.  Misdetection is harmless (just
    # conservative).
    return 512, 2, 48 << 20


def _vmem_estimate(tm):
    """Generous VMEM footprint estimate for a batch tile of tm rows."""
    x_block = tm * INPUT_SIZE * 4          # f32 x tile (double-buffered)
    x_bf16 = tm * INPUT_SIZE * 2           # in-kernel bf16 copy of the tile
    acts = 4 * tm * HIDDEN1 * 4            # f32 intermediates (generous)
    out = 2 * tm * 4
    return 2 * x_block + x_bf16 + 2 * _WEIGHT_BYTES_BF16 + acts + out + (6 << 20)


def _mlp_kernel(x_ref, w1_ref, b1_ref, w2_ref, b2_ref, w3_ref, b3_ref,
                w4_ref, b4_ref, o_ref):
    # fc1 + ReLU.  The f32 -> bf16 cast of x is fused here (saves a full
    # HBM pass in the wrapper); MXU contraction in bf16, f32 accumulation.
    x = x_ref[...].astype(jnp.bfloat16)                       # (tm, 5460)
    h = jnp.dot(x, w1_ref[...], preferred_element_type=jnp.float32)
    h = jnp.maximum(h + b1_ref[...], 0.0)
    # TODO(synk): nn.Dropout(p=0.1) is identity here (eval/inference mode).

    # fc2 + ReLU
    h = jnp.dot(h.astype(jnp.bfloat16), w2_ref[...],
                preferred_element_type=jnp.float32)
    h = jnp.maximum(h + b2_ref[...], 0.0)

    # fc3 + ReLU
    h = jnp.dot(h.astype(jnp.bfloat16), w3_ref[...],
                preferred_element_type=jnp.float32)
    h = jnp.maximum(h + b3_ref[...], 0.0)

    # fc4 (single output unit) + sigmoid, emitted lane-dense: contract the
    # feature dim against the fc4 weight *row* so the result is a (1, tm)
    # row (unmasked stores) instead of a masked (tm, 1) column.
    logits = jax.lax.dot_general(
        w4_ref[...], h.astype(jnp.bfloat16),
        dimension_numbers=(((1,), (1,)), ((), ())),
        preferred_element_type=jnp.float32)                   # (1, tm)
    logits = logits + b4_ref[...]                             # b4 is (1, 1)
    o_ref[0] = jax.nn.sigmoid(logits).astype(o_ref.dtype)     # block (1, 1, tm)


def _const_spec(shape):
    # Same full block at every grid step: weights stay resident in VMEM and
    # are never re-fetched by the pipeline.
    return pl.BlockSpec(shape, lambda i: (0,) * len(shape))


@functools.partial(jax.jit, static_argnames=("tile_m", "min_tiles", "vmem_limit"))
def _forward_jit(x, w1, b1, w2, b2, w3, b3, w4, b4, *,
                 tile_m, min_tiles, vmem_limit):
    B, K = x.shape

    # --- static batch-tile arithmetic (no padding of x anywhere) ----------
    align = 16 if B >= 16 else 8
    tm = max(align, _round_up(min(tile_m, B), align))
    n_tiles = pl.cdiv(B, tm)
    if n_tiles < min_tiles and B >= 2 * align:
        n_tiles = min_tiles                       # keep both TensorCores busy
    tm = max(align, _round_up(pl.cdiv(B, n_tiles), align))   # balance tiles
    while tm > align and _vmem_estimate(tm) > vmem_limit:    # fit under VMEM cap
        tm = max(align, _round_up(tm // 2, align))
    n_tiles = pl.cdiv(B, tm)

    # --- weight prep (tiny, one cast each; no pass over x) ----------------
    w1b = w1.astype(jnp.bfloat16)                  # (5460, 256)
    w2b = w2.astype(jnp.bfloat16)                  # (256, 128)
    w3b = w3.astype(jnp.bfloat16)                  # (128, 128)
    w4b = w4.T.astype(jnp.bfloat16)                # (1, 128) row for the NT dot
    b1f = b1.astype(jnp.float32)
    b2f = b2.astype(jnp.float32)
    b3f = b3.astype(jnp.float32)
    b4f = b4.astype(jnp.float32)

    out = pl.pallas_call(
        _mlp_kernel,
        out_shape=jax.ShapeDtypeStruct((n_tiles, 1, tm), jnp.float32),
        grid_spec=pltpu.PrefetchScalarGridSpec(
            num_scalar_prefetch=0,
            grid=(n_tiles,),
            in_specs=[
                # x batch tile: full-extent K (== 5460, equals array dim),
                # partial last batch tile handled by Pallas block padding.
                pl.BlockSpec((tm, K), lambda i: (i, 0)),
                _const_spec((INPUT_SIZE, HIDDEN1)),   # W1
                _const_spec((1, HIDDEN1)),            # b1
                _const_spec((HIDDEN1, HIDDEN2)),      # W2
                _const_spec((1, HIDDEN2)),            # b2
                _const_spec((HIDDEN2, HIDDEN3)),      # W3
                _const_spec((1, HIDDEN3)),            # b3
                _const_spec((1, HIDDEN3)),            # w4 as a row
                _const_spec((1, OUTPUT_SIZE)),        # b4
            ],
            out_specs=pl.BlockSpec((1, 1, tm), lambda i: (i, 0, 0)),
        ),
        compiler_params=pltpu.CompilerParams(
            dimension_semantics=("parallel",),   # batch tiles shard across TCs
            vmem_limit_bytes=int(vmem_limit),
        ),
    )(x, w1b, b1f, w2b, b2f, w3b, b3f, w4b, b4f)

    # (n_tiles, 1, tm) lane-dense rows -> (B, 1) column (tiny reshape/slice).
    return out.reshape(-1)[:B].reshape(B, 1)


def complex_nn_forward(x, params, *, tile_m=None):
    """x: (B, 5460) float32 -> (B, 1) float32 sigmoid probabilities."""
    default_tm, min_tiles, vmem_limit = _device_config()
    if tile_m is None:
        tile_m = default_tm
    w1, b1, w2, b2, w3, b3, w4, b4 = params
    assert x.shape[1] == INPUT_SIZE
    return _forward_jit(x, w1, b1, w2, b2, w3, b3, w4, b4,
                        tile_m=int(tile_m), min_tiles=int(min_tiles),
                        vmem_limit=int(vmem_limit))


def init_params(key):
    """nn.Linear default init: U(-1/sqrt(fan_in), 1/sqrt(fan_in)).
    Weights stored transposed as (in_features, out_features), so y = x @ W + b
    matches PyTorch's x @ W.T + b."""
    dims = [(INPUT_SIZE, HIDDEN1), (HIDDEN1, HIDDEN2),
            (HIDDEN2, HIDDEN3), (HIDDEN3, OUTPUT_SIZE)]
    params = []
    for fan_in, fan_out in dims:
        key, kw, kb = jax.random.split(key, 3)
        bound = 1.0 / jnp.sqrt(jnp.float32(fan_in))
        w = jax.random.uniform(kw, (fan_in, fan_out), jnp.float32, -bound, bound)
        b = jax.random.uniform(kb, (1, fan_out), jnp.float32, -bound, bound)
        params += [w, b]
    return tuple(params)


def reference_forward(x, params):
    """Pure-JAX reference with matching numerics (bf16 operands, f32 accum).
    Note: bf16 operands differ from a pure-f32 PyTorch ComplexNN by bf16
    rounding on the 5460-wide fc1 reduction (fine for inference)."""
    w1, b1, w2, b2, w3, b3, w4, b4 = params

    def dot_bf16(a, w):
        return jnp.dot(a.astype(jnp.bfloat16), w.astype(jnp.bfloat16),
                       preferred_element_type=jnp.float32)

    h = jnp.maximum(dot_bf16(x, w1) + b1, 0.0)
    h = jnp.maximum(dot_bf16(h, w2) + b2, 0.0)
    h = jnp.maximum(dot_bf16(h, w3) + b3, 0.0)
    return jax.nn.sigmoid(dot_bf16(h, w4) + b4)


if __name__ == "__main__":
    key = jax.random.PRNGKey(0)
    key, kx = jax.random.split(key)
    params = init_params(key)

    # (1) tiny batch, per-generation default tile -> single grid step,
    #     no batch padding anywhere.
    x_small = jax.random.normal(kx, (8, INPUT_SIZE), jnp.float32)
    out_small = jax.block_until_ready(complex_nn_forward(x_small, params))
    ref_small = reference_forward(x_small, params)
    assert out_small.shape == (8, OUTPUT_SIZE)
    assert jnp.allclose(out_small, ref_small, atol=5e-3, rtol=0.0), "mismatch (small)"

    # (2) batch not divisible by the tile -> multi-tile "parallel" grid with
    #     a partial last block (exercises Pallas block padding).
    key, kx2 = jax.random.split(key)
    x_big = jax.random.normal(kx2, (50, INPUT_SIZE), jnp.float32)
    out_big = jax.block_until_ready(complex_nn_forward(x_big, params, tile_m=32))
    ref_big = reference_forward(x_big, params)
    assert out_big.shape == (50, OUTPUT_SIZE)
    assert jnp.allclose(out_big, ref_big, atol=5e-3, rtol=0.0), "mismatch (big)"

    print("KERNEL_OK")
</pallas_src>

<mosaic_0001>
module attributes {stable_mosaic.version = 11 : i64} {
  func.func @_mlp_kernel(%arg0: i32, %arg1: memref<8x5460xf32, #tpu.memory_space<vmem>>, %arg2: memref<5460x256xbf16, #tpu.memory_space<vmem>>, %arg3: memref<1x256xf32, #tpu.memory_space<vmem>>, %arg4: memref<256x128xbf16, #tpu.memory_space<vmem>>, %arg5: memref<1x128xf32, #tpu.memory_space<vmem>>, %arg6: memref<128x128xbf16, #tpu.memory_space<vmem>>, %arg7: memref<1x128xf32, #tpu.memory_space<vmem>>, %arg8: memref<1x128xbf16, #tpu.memory_space<vmem>>, %arg9: memref<1x1xf32, #tpu.memory_space<vmem>>, %arg10: memref<1x1x8xf32, #tpu.memory_space<vmem>>) attributes {dimension_semantics = [#tpu.dimension_semantics<parallel>], iteration_bounds = array<i64: 1>, scalar_prefetch = 0 : i64, scratch_operands = 0 : i64, tpu.core_type = #tpu.core_type<tc>, window_params = [{transform_indices = @transform_0, window_bounds = array<i64: 8, 5460>}, {pipeline_mode = #tpu.pipeline_mode<synchronous>, transform_indices = @transform_1, window_bounds = array<i64: 5460, 256>}, {pipeline_mode = #tpu.pipeline_mode<synchronous>, transform_indices = @transform_2, window_bounds = array<i64: 1, 256>}, {pipeline_mode = #tpu.pipeline_mode<synchronous>, transform_indices = @transform_3, window_bounds = array<i64: 256, 128>}, {pipeline_mode = #tpu.pipeline_mode<synchronous>, transform_indices = @transform_4, window_bounds = array<i64: 1, 128>}, {pipeline_mode = #tpu.pipeline_mode<synchronous>, transform_indices = @transform_5, window_bounds = array<i64: 128, 128>}, {pipeline_mode = #tpu.pipeline_mode<synchronous>, transform_indices = @transform_6, window_bounds = array<i64: 1, 128>}, {pipeline_mode = #tpu.pipeline_mode<synchronous>, transform_indices = @transform_7, window_bounds = array<i64: 1, 128>}, {pipeline_mode = #tpu.pipeline_mode<synchronous>, transform_indices = @transform_8, window_bounds = array<i64: 1, 1>}, {transform_indices = @transform_9, window_bounds = array<i64: 1, 1, 8>}]} {
    %c0 = arith.constant 0 : index
    %c0_0 = arith.constant 0 : index
    %0 = vector.load %arg1[%c0, %c0_0] : memref<8x5460xf32, #tpu.memory_space<vmem>>, vector<8x5460xf32>
    %1 = arith.truncf %0 : vector<8x5460xf32> to vector<8x5460xbf16>
    %c0_1 = arith.constant 0 : index
    %c0_2 = arith.constant 0 : index
    %2 = vector.load %arg2[%c0_1, %c0_2] : memref<5460x256xbf16, #tpu.memory_space<vmem>>, vector<5460x256xbf16>
    %cst = arith.constant dense<0.000000e+00> : vector<8x256xf32>
    %3 = tpu.matmul %1, %2, %cst {dimension_numbers = #tpu.dot_dimension_numbers<[1], [0], [0], [1], [0, 0, 1, 1], [], []>} : vector<8x5460xbf16>, vector<5460x256xbf16>, vector<8x256xf32> -> vector<8x256xf32>
    %c0_3 = arith.constant 0 : index
    %c0_4 = arith.constant 0 : index
    %4 = vector.load %arg3[%c0_3, %c0_4] : memref<1x256xf32, #tpu.memory_space<vmem>>, vector<1x256xf32>
    %5 = vector.broadcast %4 : vector<1x256xf32> to vector<8x256xf32>
    %6 = arith.addf %3, %5 : vector<8x256xf32>
    %cst_5 = arith.constant 0.000000e+00 : f32
    %7 = vector.broadcast %cst_5 : f32 to vector<8x256xf32>
    %8 = arith.maximumf %6, %7 : vector<8x256xf32>
    %9 = arith.truncf %8 : vector<8x256xf32> to vector<8x256xbf16>
    %c0_6 = arith.constant 0 : index
    %c0_7 = arith.constant 0 : index
    %10 = vector.load %arg4[%c0_6, %c0_7] : memref<256x128xbf16, #tpu.memory_space<vmem>>, vector<256x128xbf16>
    %cst_8 = arith.constant dense<0.000000e+00> : vector<8x128xf32>
    %11 = tpu.matmul %9, %10, %cst_8 {dimension_numbers = #tpu.dot_dimension_numbers<[1], [0], [0], [1], [0, 0, 1, 1], [], []>} : vector<8x256xbf16>, vector<256x128xbf16>, vector<8x128xf32> -> vector<8x128xf32>
    %c0_9 = arith.constant 0 : index
    %c0_10 = arith.constant 0 : index
    %12 = vector.load %arg5[%c0_9, %c0_10] : memref<1x128xf32, #tpu.memory_space<vmem>>, vector<1x128xf32>
    %13 = vector.broadcast %12 : vector<1x128xf32> to vector<8x128xf32>
    %14 = arith.addf %11, %13 : vector<8x128xf32>
    %cst_11 = arith.constant 0.000000e+00 : f32
    %15 = vector.broadcast %cst_11 : f32 to vector<8x128xf32>
    %16 = arith.maximumf %14, %15 : vector<8x128xf32>
    %17 = arith.truncf %16 : vector<8x128xf32> to vector<8x128xbf16>
    %c0_12 = arith.constant 0 : index
    %c0_13 = arith.constant 0 : index
    %18 = vector.load %arg6[%c0_12, %c0_13] : memref<128x128xbf16, #tpu.memory_space<vmem>>, vector<128x128xbf16>
    %cst_14 = arith.constant dense<0.000000e+00> : vector<8x128xf32>
    %19 = tpu.matmul %17, %18, %cst_14 {dimension_numbers = #tpu.dot_dimension_numbers<[1], [0], [0], [1], [0, 0, 1, 1], [], []>} : vector<8x128xbf16>, vector<128x128xbf16>, vector<8x128xf32> -> vector<8x128xf32>
    %c0_15 = arith.constant 0 : index
    %c0_16 = arith.constant 0 : index
    %20 = vector.load %arg7[%c0_15, %c0_16] : memref<1x128xf32, #tpu.memory_space<vmem>>, vector<1x128xf32>
    %21 = vector.broadcast %20 : vector<1x128xf32> to vector<8x128xf32>
    %22 = arith.addf %19, %21 : vector<8x128xf32>
    %cst_17 = arith.constant 0.000000e+00 : f32
    %23 = vector.broadcast %cst_17 : f32 to vector<8x128xf32>
    %24 = arith.maximumf %22, %23 : vector<8x128xf32>
    %c0_18 = arith.constant 0 : index
    %c0_19 = arith.constant 0 : index
    %25 = vector.load %arg8[%c0_18, %c0_19] : memref<1x128xbf16, #tpu.memory_space<vmem>>, vector<1x128xbf16>
    %26 = arith.truncf %24 : vector<8x128xf32> to vector<8x128xbf16>
    %cst_20 = arith.constant dense<0.000000e+00> : vector<1x8xf32>
    %27 = tpu.matmul %25, %26, %cst_20 {dimension_numbers = #tpu.dot_dimension_numbers<[1], [1], [0], [0], [0, 0, 1, 0], [], []>} : vector<1x128xbf16>, vector<8x128xbf16>, vector<1x8xf32> -> vector<1x8xf32>
    %c0_21 = arith.constant 0 : index
    %c0_22 = arith.constant 0 : index
    %28 = vector.load %arg9[%c0_21, %c0_22] : memref<1x1xf32, #tpu.memory_space<vmem>>, vector<1x1xf32>
    %29 = vector.broadcast %28 : vector<1x1xf32> to vector<1x8xf32>
    %30 = arith.addf %27, %29 : vector<1x8xf32>
    %31 = arith.negf %30 : vector<1x8xf32>
    %32 = math.exp %31 : vector<1x8xf32>
    %cst_23 = arith.constant 1.000000e+00 : f32
    %33 = vector.broadcast %cst_23 : f32 to vector<1x8xf32>
    %34 = arith.addf %33, %32 : vector<1x8xf32>
    %35 = arith.divf %33, %34 : vector<1x8xf32>
    %c0_24 = arith.constant 0 : index
    %c0_25 = arith.constant 0 : index
    %c0_26 = arith.constant 0 : index
    %36 = vector.load %arg10[%c0_24, %c0_25, %c0_26] : memref<1x1x8xf32, #tpu.memory_space<vmem>>, vector<1x1x8xf32>
    %37 = vector.shape_cast %36 : vector<1x1x8xf32> to vector<1x8xf32>
    %38 = vector.shape_cast %35 : vector<1x8xf32> to vector<1x1x8xf32>
    tpu.vector_store %arg10[%c0_24, %c0_25, %c0_26], %38 {strides = array<i32>} : memref<1x1x8xf32, #tpu.memory_space<vmem>>, vector<1x1x8xf32>,
    return
  }
  func.func @transform_0(%arg0: i32) -> (i32, i32) {
    %c0_i32 = arith.constant 0 : i32
    %c0_i32_0 = arith.constant 0 : i32
    return %arg0, %c0_i32 : i32, i32
  }
  func.func @transform_1(%arg0: i32) -> (i32, i32) {
    %c0_i32 = arith.constant 0 : i32
    %c0_i32_0 = arith.constant 0 : i32
    %c0_i32_1 = arith.constant 0 : i32
    return %c0_i32, %c0_i32_0 : i32, i32
  }
  func.func @transform_2(%arg0: i32) -> (i32, i32) {
    %c0_i32 = arith.constant 0 : i32
    %c0_i32_0 = arith.constant 0 : i32
    %c0_i32_1 = arith.constant 0 : i32
    return %c0_i32, %c0_i32_0 : i32, i32
  }
  func.func @transform_3(%arg0: i32) -> (i32, i32) {
    %c0_i32 = arith.constant 0 : i32
    %c0_i32_0 = arith.constant 0 : i32
    %c0_i32_1 = arith.constant 0 : i32
    return %c0_i32, %c0_i32_0 : i32, i32
  }
  func.func @transform_4(%arg0: i32) -> (i32, i32) {
    %c0_i32 = arith.constant 0 : i32
    %c0_i32_0 = arith.constant 0 : i32
    %c0_i32_1 = arith.constant 0 : i32
    return %c0_i32, %c0_i32_0 : i32, i32
  }
  func.func @transform_5(%arg0: i32) -> (i32, i32) {
    %c0_i32 = arith.constant 0 : i32
    %c0_i32_0 = arith.constant 0 : i32
    %c0_i32_1 = arith.constant 0 : i32
    return %c0_i32, %c0_i32_0 : i32, i32
  }
  func.func @transform_6(%arg0: i32) -> (i32, i32) {
    %c0_i32 = arith.constant 0 : i32
    %c0_i32_0 = arith.constant 0 : i32
    %c0_i32_1 = arith.constant 0 : i32
    return %c0_i32, %c0_i32_0 : i32, i32
  }
  func.func @transform_7(%arg0: i32) -> (i32, i32) {
    %c0_i32 = arith.constant 0 : i32
    %c0_i32_0 = arith.constant 0 : i32
    %c0_i32_1 = arith.constant 0 : i32
    return %c0_i32, %c0_i32_0 : i32, i32
  }
  func.func @transform_8(%arg0: i32) -> (i32, i32) {
    %c0_i32 = arith.constant 0 : i32
    %c0_i32_0 = arith.constant 0 : i32
    %c0_i32_1 = arith.constant 0 : i32
    return %c0_i32, %c0_i32_0 : i32, i32
  }
  func.func @transform_9(%arg0: i32) -> (i32, i32, i32) {
    %c0_i32 = arith.constant 0 : i32
    %c0_i32_0 = arith.constant 0 : i32
    %c0_i32_1 = arith.constant 0 : i32
    return %arg0, %c0_i32, %c0_i32_0 : i32, i32, i32
  }
}

</mosaic_0001>

<llo_original>
// kernel: _forward_jit.1
$region0: #{_forward_jit.1}
  #allocation0 [shape = 'u32[]', space=smem, size = 0x4, offset = 0x4, fixed_abs, tag = 'smem constant byte address 0x4 - core index']
  #allocation1 [shape = 'u32[144,128]{1,0:T(1,128)}', space=vmem, size = 0x12000, scoped, tag = 'internal scratch']
  #allocation2 [shape = 'f32[1,1]{1,0:T(1,128)S(1)}', space=vmem, size = 0x200, scoped, tag = 'scoped memory for _forward_jit.1']
  %s0 = inlined_call_operand.vmem [shape: f32[8,5460], index: 0, kind: input, shape index: {}]
  %s1 = inlined_call_operand.vmem [shape: bf16[5460,256], index: 1, kind: input, shape index: {}]
  %s2 = inlined_call_operand.vmem [shape: f32[1,256], index: 2, kind: input, shape index: {}]
  %s3 = inlined_call_operand.vmem [shape: bf16[256,128], index: 3, kind: input, shape index: {}]
  %s4 = inlined_call_operand.vmem [shape: f32[1,128], index: 4, kind: input, shape index: {}]
  %s5 = inlined_call_operand.vmem [shape: bf16[128,128], index: 5, kind: input, shape index: {}]
  %s6 = inlined_call_operand.vmem [shape: f32[1,128], index: 6, kind: input, shape index: {}]
  %s7 = inlined_call_operand.vmem [shape: bf16[1,128], index: 7, kind: input, shape index: {}]
  %s8 = inlined_call_operand.<no memory space> [shape: f32[1,1], index: 8, kind: input, shape index: {}]
  %s9 = inlined_call_operand.hbm [shape: f32[1,1,8], index: 9, kind: output, shape index: {}]
  %s10 = sld [smem:[#allocation0]]
  $region46: #{_forward_jit.1} parent=0
    _
  %s12 = ssub.s32 1, %s10
  %s13 = scalar_select 0, %s12, %s10
  %v14 = vstv %s8
  %15 = vst [vmem:[#allocation2] sm:$0x1] %v14
  $region1: #{_forward_jit.1} parent=0
    #allocation3 [shape = 'u8[512]{0}', space=vmem, size = 0x400, scoped, tag = 'output window, operand 0, single buffered']
    #allocation4 [shape = 's32[1]{0}', space=sflag, size = 0x4, scoped, tag = 'scoped memory for _forward_jit.1']
    %16 = vsyncpa [#allocation4], 0
    // Predicated region
    $region2: #{_forward_jit.1} parent=1 // pred_check
      _
    $region3: #{_forward_jit.1} parent=1 // pred_check_branch
      %18 = sbr.rel (0) target = $region5
    $region4: #{_forward_jit.1} parent=1 // pred_region
      _
    $region5: #{_forward_jit.1} parent=1 // pred_fallthru
      _
    // Predicated region
    $region6: #{_forward_jit.1} parent=1 // pred_check
      _
    $region7: #{_forward_jit.1} parent=1 // pred_check_branch
      %20 = sbr.rel (0) target = $region9
    $region8: #{_forward_jit.1} parent=1 // pred_region
      _
    $region9: #{_forward_jit.1} parent=1 // pred_fallthru
      _
    // Predicated region
    $region10: #{_forward_jit.1} parent=1 // pred_check
      _
    $region11: #{_forward_jit.1} parent=1 // pred_check_branch
      %22 = sbr.rel (0) target = $region13
    $region12: #{_forward_jit.1} parent=1 // pred_region
      _
    $region13: #{_forward_jit.1} parent=1 // pred_fallthru
      _
    // Predicated region
    $region14: #{_forward_jit.1} parent=1 // pred_check
      _
    $region15: #{_forward_jit.1} parent=1 // pred_check_branch
      %24 = sbr.rel (0) target = $region17
    $region16: #{_forward_jit.1} parent=1 // pred_region
      _
    $region17: #{_forward_jit.1} parent=1 // pred_fallthru
      _
    // Predicated region
    $region18: #{_forward_jit.1} parent=1 // pred_check
      _
    $region19: #{_forward_jit.1} parent=1 // pred_check_branch
      %26 = sbr.rel (0) target = $region21
    $region20: #{_forward_jit.1} parent=1 // pred_region
      _
    $region21: #{_forward_jit.1} parent=1 // pred_fallthru
      _
    // Predicated region
    $region22: #{_forward_jit.1} parent=1 // pred_check
      _
    $region23: #{_forward_jit.1} parent=1 // pred_check_branch
      %28 = sbr.rel (0) target = $region25
    $region24: #{_forward_jit.1} parent=1 // pred_region
      _
    $region25: #{_forward_jit.1} parent=1 // pred_fallthru
      _
    // Predicated region
    $region26: #{_forward_jit.1} parent=1 // pred_check
      _
    $region27: #{_forward_jit.1} parent=1 // pred_check_branch
      %30 = sbr.rel (0) target = $region29
    $region28: #{_forward_jit.1} parent=1 // pred_region
      _
    $region29: #{_forward_jit.1} parent=1 // pred_fallthru
      _
    // Predicated region
    $region30: #{_forward_jit.1} parent=1 // pred_check
      _
    $region31: #{_forward_jit.1} parent=1 // pred_check_branch
      %32 = sbr.rel (0) target = $region33
    $region32: #{_forward_jit.1} parent=1 // pred_region
      _
    $region33: #{_forward_jit.1} parent=1 // pred_fallthru
      _
    // Predicated region
    $region34: #{_forward_jit.1} parent=1 // pred_check
      _
    $region35: #{_forward_jit.1} parent=1 // pred_check_branch
      %34 = sbr.rel (0) target = $region37
    $region36: #{_forward_jit.1} parent=1 // pred_region
      _
    $region37: #{_forward_jit.1} parent=1 // pred_fallthru
      _
    %v36 = vld [vmem:[%s0] sm:$0xff]
    %v37 = vld [vmem:[%s0 + $0x8] sm:$0xff]
    %v38 = vld [vmem:[%s0 + $0x10] sm:$0xff]
    %v39 = vld [vmem:[%s0 + $0x18] sm:$0xff]
    %v40 = vld [vmem:[%s0 + $0x20] sm:$0xff]
    %v41 = vld [vmem:[%s0 + $0x28] sm:$0xff]
    %v42 = vld [vmem:[%s0 + $0x30] sm:$0xff]
    %v43 = vld [vmem:[%s0 + $0x38] sm:$0xff]
    %v44 = vld [vmem:[%s0 + $0x40] sm:$0xff]
    %v45 = vld [vmem:[%s0 + $0x48] sm:$0xff]
    %v46 = vld [vmem:[%s0 + $0x50] sm:$0xff]
    %v47 = vld [vmem:[%s0 + $0x58] sm:$0xff]
    %v48 = vld [vmem:[%s0 + $0x60] sm:$0xff]
    %v49 = vld [vmem:[%s0 + $0x68] sm:$0xff]
    %v50 = vld [vmem:[%s0 + $0x70] sm:$0xff]
    %v51 = vld [vmem:[%s0 + $0x78] sm:$0xff]
    %v52 = vld [vmem:[%s0 + $0x80] sm:$0xff]
    %v53 = vld [vmem:[%s0 + $0x88] sm:$0xff]
    %v54 = vld [vmem:[%s0 + $0x90] sm:$0xff]
    %v55 = vld [vmem:[%s0 + $0x98] sm:$0xff]
    %v56 = vld [vmem:[%s0 + $0xa0] sm:$0xff]
    %v57 = vld [vmem:[%s0 + $0xa8] sm:$0xff]
    %v58 = vld [vmem:[%s0 + $0xb0] sm:$0xff]
    %v59 = vld [vmem:[%s0 + $0xb8] sm:$0xff]
    %v60 = vld [vmem:[%s0 + $0xc0] sm:$0xff]
    %v61 = vld [vmem:[%s0 + $0xc8] sm:$0xff]
    %v62 = vld [vmem:[%s0 + $0xd0] sm:$0xff]
    %v63 = vld [vmem:[%s0 + $0xd8] sm:$0xff]
    %v64 = vld [vmem:[%s0 + $0xe0] sm:$0xff]
    %v65 = vld [vmem:[%s0 + $0xe8] sm:$0xff]
    %v66 = vld [vmem:[%s0 + $0xf0] sm:$0xff]
    %v67 = vld [vmem:[%s0 + $0xf8] sm:$0xff]
    %v68 = vld [vmem:[%s0 + $0x100] sm:$0xff]
    %v69 = vld [vmem:[%s0 + $0x108] sm:$0xff]
    %v70 = vld [vmem:[%s0 + $0x110] sm:$0xff]
    %v71 = vld [vmem:[%s0 + $0x118] sm:$0xff]
    %v72 = vld [vmem:[%s0 + $0x120] sm:$0xff]
    %v73 = vld [vmem:[%s0 + $0x128] sm:$0xff]
    %v74 = vld [vmem:[%s0 + $0x130] sm:$0xff]
    %v75 = vld [vmem:[%s0 + $0x138] sm:$0xff]
    %v76 = vld [vmem:[%s0 + $0x140] sm:$0xff]
    %v77 = vld [vmem:[%s0 + $0x148] sm:$0xff]
    %v78 = vld [vmem:[%s0 + $0x150] sm:$0xff]
    %v79 = vpack.c.bf16 %v36, %v36
    %v80 = vpack.c.bf16 %v37, %v37
    %v81 = vpack.c.bf16 %v38, %v38
    %v82 = vpack.c.bf16 %v39, %v39
    %v83 = vpack.c.bf16 %v40, %v40
    %v84 = vpack.c.bf16 %v41, %v41
    %v85 = vpack.c.bf16 %v42, %v42
    %v86 = vpack.c.bf16 %v43, %v43
    %v87 = vpack.c.bf16 %v44, %v44
    %v88 = vpack.c.bf16 %v45, %v45
    %v89 = vpack.c.bf16 %v46, %v46
    %v90 = vpack.c.bf16 %v47, %v47
    %v91 = vpack.c.bf16 %v48, %v48
    %v92 = vpack.c.bf16 %v49, %v49
    %v93 = vpack.c.bf16 %v50, %v50
    %v94 = vpack.c.bf16 %v51, %v51
    %v95 = vpack.c.bf16 %v52, %v52
    %v96 = vpack.c.bf16 %v53, %v53
    %v97 = vpack.c.bf16 %v54, %v54
    %v98 = vpack.c.bf16 %v55, %v55
    %v99 = vpack.c.bf16 %v56, %v56
    %v100 = vpack.c.bf16 %v57, %v57
    %v101 = vpack.c.bf16 %v58, %v58
    %v102 = vpack.c.bf16 %v59, %v59
    %v103 = vpack.c.bf16 %v60, %v60
    %v104 = vpack.c.bf16 %v61, %v61
    %v105 = vpack.c.bf16 %v62, %v62
    %v106 = vpack.c.bf16 %v63, %v63
    %v107 = vpack.c.bf16 %v64, %v64
    %v108 = vpack.c.bf16 %v65, %v65
    %v109 = vpack.c.bf16 %v66, %v66
    %v110 = vpack.c.bf16 %v67, %v67
    %v111 = vpack.c.bf16 %v68, %v68
    %v112 = vpack.c.bf16 %v69, %v69
    %v113 = vpack.c.bf16 %v70, %v70
    %v114 = vpack.c.bf16 %v71, %v71
    %v115 = vpack.c.bf16 %v72, %v72
    %v116 = vpack.c.bf16 %v73, %v73
    %v117 = vpack.c.bf16 %v74, %v74
    %v118 = vpack.c.bf16 %v75, %v75
    %v119 = vpack.c.bf16 %v76, %v76
    %v120 = vpack.c.bf16 %v77, %v77
    %v121 = vpack.c.bf16 %v78, %v78
    %v122 = vld [vmem:[%s1] sm:$0xff]
    %v123 = vld [vmem:[%s1 + $0x8] sm:$0xff]
    %v124 = vld [vmem:[%s1 + $0x10] sm:$0xff]
    %v125 = vld [vmem:[%s1 + $0x18] sm:$0xff]
    %v126 = vld [vmem:[%s1 + $0x20] sm:$0xff]
    %v127 = vld [vmem:[%s1 + $0x28] sm:$0xff]
    %v128 = vld [vmem:[%s1 + $0x30] sm:$0xff]
    %v129 = vld [vmem:[%s1 + $0x38] sm:$0xff]
    %v130 = vld [vmem:[%s1 + $0x40] sm:$0xff]
    %v131 = vld [vmem:[%s1 + $0x48] sm:$0xff]
    %v132 = vld [vmem:[%s1 + $0x50] sm:$0xff]
    %v133 = vld [vmem:[%s1 + $0x58] sm:$0xff]
    %v134 = vld [vmem:[%s1 + $0x60] sm:$0xff]
    %v135 = vld [vmem:[%s1 + $0x68] sm:$0xff]
    %v136 = vld [vmem:[%s1 + $0x70] sm:$0xff]
    %v137 = vld [vmem:[%s1 + $0x78] sm:$0xff]
    %v138 = vld [vmem:[%s1 + $0x80] sm:$0xff]
    %v139 = vld [vmem:[%s1 + $0x88] sm:$0xff]
    %v140 = vld [vmem:[%s1 + $0x90] sm:$0xff]
    %v141 = vld [vmem:[%s1 + $0x98] sm:$0xff]
    %v142 = vld [vmem:[%s1 + $0xa0] sm:$0xff]
    %v143 = vld [vmem:[%s1 + $0xa8] sm:$0xff]
    %v144 = vld [vmem:[%s1 + $0xb0] sm:$0xff]
    %v145 = vld [vmem:[%s1 + $0xb8] sm:$0xff]
    %v146 = vld [vmem:[%s1 + $0xc0] sm:$0xff]
    %v147 = vld [vmem:[%s1 + $0xc8] sm:$0xff]
    %v148 = vld [vmem:[%s1 + $0xd0] sm:$0xff]
    %v149 = vld [vmem:[%s1 + $0xd8] sm:$0xff]
    %v150 = vld [vmem:[%s1 + $0xe0] sm:$0xff]
    %v151 = vld [vmem:[%s1 + $0xe8] sm:$0xff]
    %v152 = vld [vmem:[%s1 + $0xf0] sm:$0xff]
    %v153 = vld [vmem:[%s1 + $0xf8] sm:$0xff]
    %v154 = vld [vmem:[%s1 + $0x100] sm:$0xff]
    %v155 = vld [vmem:[%s1 + $0x108] sm:$0xff]
    %v156 = vld [vmem:[%s1 + $0x110] sm:$0xff]
    %v157 = vld [vmem:[%s1 + $0x118] sm:$0xff]
    %v158 = vld [vmem:[%s1 + $0x120] sm:$0xff]
    %v159 = vld [vmem:[%s1 + $0x128] sm:$0xff]
    %v160 = vld [vmem:[%s1 + $0x130] sm:$0xff]
    %v161 = vld [vmem:[%s1 + $0x138] sm:$0xff]
    %v162 = vld [vmem:[%s1 + $0x140] sm:$0xff]
    %v163 = vld [vmem:[%s1 + $0x148] sm:$0xff]
    %v164 = vld [vmem:[%s1 + $0x150] sm:$0xff]
    %v165 = vld [vmem:[%s1 + $0x158] sm:$0xff]
    %v166 = vld [vmem:[%s1 + $0x160] sm:$0xff]
    %v167 = vld [vmem:[%s1 + $0x168] sm:$0xff]
    %v168 = vld [vmem:[%s1 + $0x170] sm:$0xff]
    %v169 = vld [vmem:[%s1 + $0x178] sm:$0xff]
    %v170 = vld [vmem:[%s1 + $0x180] sm:$0xff]
    %v171 = vld [vmem:[%s1 + $0x188] sm:$0xff]
    %v172 = vld [vmem:[%s1 + $0x190] sm:$0xff]
    %v173 = vld [vmem:[%s1 + $0x198] sm:$0xff]
    %v174 = vld [vmem:[%s1 + $0x1a0] sm:$0xff]
    %v175 = vld [vmem:[%s1 + $0x1a8] sm:$0xff]
    %v176 = vld [vmem:[%s1 + $0x1b0] sm:$0xff]
    %v177 = vld [vmem:[%s1 + $0x1b8] sm:$0xff]
    %v178 = vld [vmem:[%s1 + $0x1c0] sm:$0xff]
    %v179 = vld [vmem:[%s1 + $0x1c8] sm:$0xff]
    %v180 = vld [vmem:[%s1 + $0x1d0] sm:$0xff]
    %v181 = vld [vmem:[%s1 + $0x1d8] sm:$0xff]
    %v182 = vld [vmem:[%s1 + $0x1e0] sm:$0xff]
    %v183 = vld [vmem:[%s1 + $0x1e8] sm:$0xff]
    %v184 = vld [vmem:[%s1 + $0x1f0] sm:$0xff]
    %v185 = vld [vmem:[%s1 + $0x1f8] sm:$0xff]
    %v186 = vld [vmem:[%s1 + $0x200] sm:$0xff]
    %v187 = vld [vmem:[%s1 + $0x208] sm:$0xff]
    %v188 = vld [vmem:[%s1 + $0x210] sm:$0xff]
    %v189 = vld [vmem:[%s1 + $0x218] sm:$0xff]
    %v190 = vld [vmem:[%s1 + $0x220] sm:$0xff]
    %v191 = vld [vmem:[%s1 + $0x228] sm:$0xff]
    %v192 = vld [vmem:[%s1 + $0x230] sm:$0xff]
    %v193 = vld [vmem:[%s1 + $0x238] sm:$0xff]
    %v194 = vld [vmem:[%s1 + $0x240] sm:$0xff]
    %v195 = vld [vmem:[%s1 + $0x248] sm:$0xff]
    %v196 = vld [vmem:[%s1 + $0x250] sm:$0xff]
    %v197 = vld [vmem:[%s1 + $0x258] sm:$0xff]
    %v198 = vld [vmem:[%s1 + $0x260] sm:$0xff]
    %v199 = vld [vmem:[%s1 + $0x268] sm:$0xff]
    %v200 = vld [vmem:[%s1 + $0x270] sm:$0xff]
    %v201 = vld [vmem:[%s1 + $0x278] sm:$0xff]
    %v202 = vld [vmem:[%s1 + $0x280] sm:$0xff]
    %v203 = vld [vmem:[%s1 + $0x288] sm:$0xff]
    %v204 = vld [vmem:[%s1 + $0x290] sm:$0xff]
    %v205 = vld [vmem:[%s1 + $0x298] sm:$0xff]
    %v206 = vld [vmem:[%s1 + $0x2a0] sm:$0xff]
    %v207 = vld [vmem:[%s1 + $0x2a8] sm:$0xff]
    %v208 = vld [vmem:[%s1 + $0x2b0] sm:$0xff]
    %v209 = vld [vmem:[%s1 + $0x2b8] sm:$0xff]
    %v210 = vld [vmem:[%s1 + $0x2c0] sm:$0xff]
    %v211 = vld [vmem:[%s1 + $0x2c8] sm:$0xff]
    %v212 = vld [vmem:[%s1 + $0x2d0] sm:$0xff]
    %v213 = vld [vmem:[%s1 + $0x2d8] sm:$0xff]
    %v214 = vld [vmem:[%s1 + $0x2e0] sm:$0xff]
    %v215 = vld [vmem:[%s1 + $0x2e8] sm:$0xff]
    %v216 = vld [vmem:[%s1 + $0x2f0] sm:$0xff]
    %v217 = vld [vmem:[%s1 + $0x2f8] sm:$0xff]
    %v218 = vld [vmem:[%s1 + $0x300] sm:$0xff]
    %v219 = vld [vmem:[%s1 + $0x308] sm:$0xff]
    %v220 = vld [vmem:[%s1 + $0x310] sm:$0xff]
    %v221 = vld [vmem:[%s1 + $0x318] sm:$0xff]
    %v222 = vld [vmem:[%s1 + $0x320] sm:$0xff]
    %v223 = vld [vmem:[%s1 + $0x328] sm:$0xff]
    %v224 = vld [vmem:[%s1 + $0x330] sm:$0xff]
    %v225 = vld [vmem:[%s1 + $0x338] sm:$0xff]
    %v226 = vld [vmem:[%s1 + $0x340] sm:$0xff]
    %v227 = vld [vmem:[%s1 + $0x348] sm:$0xff]
    %v228 = vld [vmem:[%s1 + $0x350] sm:$0xff]
    %v229 = vld [vmem:[%s1 + $0x358] sm:$0xff]
    %v230 = vld [vmem:[%s1 + $0x360] sm:$0xff]
    %v231 = vld [vmem:[%s1 + $0x368] sm:$0xff]
    %v232 = vld [vmem:[%s1 + $0x370] sm:$0xff]
    %v233 = vld [vmem:[%s1 + $0x378] sm:$0xff]
    %v234 = vld [vmem:[%s1 + $0x380] sm:$0xff]
    %v235 = vld [vmem:[%s1 + $0x388] sm:$0xff]
    %v236 = vld [vmem:[%s1 + $0x390] sm:$0xff]
    %v237 = vld [vmem:[%s1 + $0x398] sm:$0xff]
    %v238 = vld [vmem:[%s1 + $0x3a0] sm:$0xff]
    %v239 = vld [vmem:[%s1 + $0x3a8] sm:$0xff]
    %v240 = vld [vmem:[%s1 + $0x3b0] sm:$0xff]
    %v241 = vld [vmem:[%s1 + $0x3b8] sm:$0xff]
    %v242 = vld [vmem:[%s1 + $0x3c0] sm:$0xff]
    %v243 = vld [vmem:[%s1 + $0x3c8] sm:$0xff]
    %v244 = vld [vmem:[%s1 + $0x3d0] sm:$0xff]
    %v245 = vld [vmem:[%s1 + $0x3d8] sm:$0xff]
    %v246 = vld [vmem:[%s1 + $0x3e0] sm:$0xff]
    %v247 = vld [vmem:[%s1 + $0x3e8] sm:$0xff]
    %v248 = vld [vmem:[%s1 + $0x3f0] sm:$0xff]
    %v249 = vld [vmem:[%s1 + $0x3f8] sm:$0xff]
    %v250 = vld [vmem:[%s1 + $0x400] sm:$0xff]
    %v251 = vld [vmem:[%s1 + $0x408] sm:$0xff]
    %v252 = vld [vmem:[%s1 + $0x410] sm:$0xff]
    %v253 = vld [vmem:[%s1 + $0x418] sm:$0xff]
    %v254 = vld [vmem:[%s1 + $0x420] sm:$0xff]
    %v255 = vld [vmem:[%s1 + $0x428] sm:$0xff]
    %v256 = vld [vmem:[%s1 + $0x430] sm:$0xff]
    %v257 = vld [vmem:[%s1 + $0x438] sm:$0xff]
    %v258 = vld [vmem:[%s1 + $0x440] sm:$0xff]
    %v259 = vld [vmem:[%s1 + $0x448] sm:$0xff]
    %v260 = vld [vmem:[%s1 + $0x450] sm:$0xff]
    %v261 = vld [vmem:[%s1 + $0x458] sm:$0xff]
    %v262 = vld [vmem:[%s1 + $0x460] sm:$0xff]
    %v263 = vld [vmem:[%s1 + $0x468] sm:$0xff]
    %v264 = vld [vmem:[%s1 + $0x470] sm:$0xff]
    %v265 = vld [vmem:[%s1 + $0x478] sm:$0xff]
    %v266 = vld [vmem:[%s1 + $0x480] sm:$0xff]
    %v267 = vld [vmem:[%s1 + $0x488] sm:$0xff]
    %v268 = vld [vmem:[%s1 + $0x490] sm:$0xff]
    %v269 = vld [vmem:[%s1 + $0x498] sm:$0xff]
    %v270 = vld [vmem:[%s1 + $0x4a0] sm:$0xff]
    %v271 = vld [vmem:[%s1 + $0x4a8] sm:$0xff]
    %v272 = vld [vmem:[%s1 + $0x4b0] sm:$0xff]
    %v273 = vld [vmem:[%s1 + $0x4b8] sm:$0xff]
    %v274 = vld [vmem:[%s1 + $0x4c0] sm:$0xff]
    %v275 = vld [vmem:[%s1 + $0x4c8] sm:$0xff]
    %v276 = vld [vmem:[%s1 + $0x4d0] sm:$0xff]
    %v277 = vld [vmem:[%s1 + $0x4d8] sm:$0xff]
    %v278 = vld [vmem:[%s1 + $0x4e0] sm:$0xff]
    %v279 = vld [vmem:[%s1 + $0x4e8] sm:$0xff]
    %v280 = vld [vmem:[%s1 + $0x4f0] sm:$0xff]
    %v281 = vld [vmem:[%s1 + $0x4f8] sm:$0xff]
    %v282 = vld [vmem:[%s1 + $0x500] sm:$0xff]
    %v283 = vld [vmem:[%s1 + $0x508] sm:$0xff]
    %v284 = vld [vmem:[%s1 + $0x510] sm:$0xff]
    %v285 = vld [vmem:[%s1 + $0x518] sm:$0xff]
    %v286 = vld [vmem:[%s1 + $0x520] sm:$0xff]
    %v287 = vld [vmem:[%s1 + $0x528] sm:$0xff]
    %v288 = vld [vmem:[%s1 + $0x530] sm:$0xff]
    %v289 = vld [vmem:[%s1 + $0x538] sm:$0xff]
    %v290 = vld [vmem:[%s1 + $0x540] sm:$0xff]
    %v291 = vld [vmem:[%s1 + $0x548] sm:$0xff]
    %v292 = vld [vmem:[%s1 + $0x550] sm:$0xff]
    %v293 = vld [vmem:[%s1 + $0x558] sm:$0xff]
    %v294 = vld [vmem:[%s1 + $0x560] sm:$0xff]
    %v295 = vld [vmem:[%s1 + $0x568] sm:$0xff]
    %v296 = vld [vmem:[%s1 + $0x570] sm:$0xff]
    %v297 = vld [vmem:[%s1 + $0x578] sm:$0xff]
    %v298 = vld [vmem:[%s1 + $0x580] sm:$0xff]
    %v299 = vld [vmem:[%s1 + $0x588] sm:$0xff]
    %v300 = vld [vmem:[%s1 + $0x590] sm:$0xff]
    %v301 = vld [vmem:[%s1 + $0x598] sm:$0xff]
    %v302 = vld [vmem:[%s1 + $0x5a0] sm:$0xff]
    %v303 = vld [vmem:[%s1 + $0x5a8] sm:$0xff]
    %v304 = vld [vmem:[%s1 + $0x5b0] sm:$0xff]
    %v305 = vld [vmem:[%s1 + $0x5b8] sm:$0xff]
    %v306 = vld [vmem:[%s1 + $0x5c0] sm:$0xff]
    %v307 = vld [vmem:[%s1 + $0x5c8] sm:$0xff]
    %v308 = vld [vmem:[%s1 + $0x5d0] sm:$0xff]
    %v309 = vld [vmem:[%s1 + $0x5d8] sm:$0xff]
    %v310 = vld [vmem:[%s1 + $0x5e0] sm:$0xff]
    %v311 = vld [vmem:[%s1 + $0x5e8] sm:$0xff]
    %v312 = vld [vmem:[%s1 + $0x5f0] sm:$0xff]
    %v313 = vld [vmem:[%s1 + $0x5f8] sm:$0xff]
    %v314 = vld [vmem:[%s1 + $0x600] sm:$0xff]
    %v315 = vld [vmem:[%s1 + $0x608] sm:$0xff]
    %v316 = vld [vmem:[%s1 + $0x610] sm:$0xff]
    %v317 = vld [vmem:[%s1 + $0x618] sm:$0xff]
    %v318 = vld [vmem:[%s1 + $0x620] sm:$0xff]
    %v319 = vld [vmem:[%s1 + $0x628] sm:$0xff]
    %v320 = vld [vmem:[%s1 + $0x630] sm:$0xff]
    %v321 = vld [vmem:[%s1 + $0x638] sm:$0xff]
    %v322 = vld [vmem:[%s1 + $0x640] sm:$0xff]
    %v323 = vld [vmem:[%s1 + $0x648] sm:$0xff]
    %v324 = vld [vmem:[%s1 + $0x650] sm:$0xff]
    %v325 = vld [vmem:[%s1 + $0x658] sm:$0xff]
    %v326 = vld [vmem:[%s1 + $0x660] sm:$0xff]
    %v327 = vld [vmem:[%s1 + $0x668] sm:$0xff]
    %v328 = vld [vmem:[%s1 + $0x670] sm:$0xff]
    %v329 = vld [vmem:[%s1 + $0x678] sm:$0xff]
    %v330 = vld [vmem:[%s1 + $0x680] sm:$0xff]
    %v331 = vld [vmem:[%s1 + $0x688] sm:$0xff]
    %v332 = vld [vmem:[%s1 + $0x690] sm:$0xff]
    %v333 = vld [vmem:[%s1 + $0x698] sm:$0xff]
    %v334 = vld [vmem:[%s1 + $0x6a0] sm:$0xff]
    %v335 = vld [vmem:[%s1 + $0x6a8] sm:$0xff]
    %v336 = vld [vmem:[%s1 + $0x6b0] sm:$0xff]
    %v337 = vld [vmem:[%s1 + $0x6b8] sm:$0xff]
    %v338 = vld [vmem:[%s1 + $0x6c0] sm:$0xff]
    %v339 = vld [vmem:[%s1 + $0x6c8] sm:$0xff]
    %v340 = vld [vmem:[%s1 + $0x6d0] sm:$0xff]
    %v341 = vld [vmem:[%s1 + $0x6d8] sm:$0xff]
    %v342 = vld [vmem:[%s1 + $0x6e0] sm:$0xff]
    %v343 = vld [vmem:[%s1 + $0x6e8] sm:$0xff]
    %v344 = vld [vmem:[%s1 + $0x6f0] sm:$0xff]
    %v345 = vld [vmem:[%s1 + $0x6f8] sm:$0xff]
    %v346 = vld [vmem:[%s1 + $0x700] sm:$0xff]
    %v347 = vld [vmem:[%s1 + $0x708] sm:$0xff]
    %v348 = vld [vmem:[%s1 + $0x710] sm:$0xff]
    %v349 = vld [vmem:[%s1 + $0x718] sm:$0xff]
    %v350 = vld [vmem:[%s1 + $0x720] sm:$0xff]
    %v351 = vld [vmem:[%s1 + $0x728] sm:$0xff]
    %v352 = vld [vmem:[%s1 + $0x730] sm:$0xff]
    %v353 = vld [vmem:[%s1 + $0x738] sm:$0xff]
    %v354 = vld [vmem:[%s1 + $0x740] sm:$0xff]
    %v355 = vld [vmem:[%s1 + $0x748] sm:$0xff]
    %v356 = vld [vmem:[%s1 + $0x750] sm:$0xff]
    %v357 = vld [vmem:[%s1 + $0x758] sm:$0xff]
    %v358 = vld [vmem:[%s1 + $0x760] sm:$0xff]
    %v359 = vld [vmem:[%s1 + $0x768] sm:$0xff]
    %v360 = vld [vmem:[%s1 + $0x770] sm:$0xff]
    %v361 = vld [vmem:[%s1 + $0x778] sm:$0xff]
    %v362 = vld [vmem:[%s1 + $0x780] sm:$0xff]
    %v363 = vld [vmem:[%s1 + $0x788] sm:$0xff]
    %v364 = vld [vmem:[%s1 + $0x790] sm:$0xff]
    %v365 = vld [vmem:[%s1 + $0x798] sm:$0xff]
    %v366 = vld [vmem:[%s1 + $0x7a0] sm:$0xff]
    %v367 = vld [vmem:[%s1 + $0x7a8] sm:$0xff]
    %v368 = vld [vmem:[%s1 + $0x7b0] sm:$0xff]
    %v369 = vld [vmem:[%s1 + $0x7b8] sm:$0xff]
    %v370 = vld [vmem:[%s1 + $0x7c0] sm:$0xff]
    %v371 = vld [vmem:[%s1 + $0x7c8] sm:$0xff]
    %v372 = vld [vmem:[%s1 + $0x7d0] sm:$0xff]
    %v373 = vld [vmem:[%s1 + $0x7d8] sm:$0xff]
    %v374 = vld [vmem:[%s1 + $0x7e0] sm:$0xff]
    %v375 = vld [vmem:[%s1 + $0x7e8] sm:$0xff]
    %v376 = vld [vmem:[%s1 + $0x7f0] sm:$0xff]
    %v377 = vld [vmem:[%s1 + $0x7f8] sm:$0xff]
    %v378 = vld [vmem:[%s1 + $0x800] sm:$0xff]
    %v379 = vld [vmem:[%s1 + $0x808] sm:$0xff]
    %v380 = vld [vmem:[%s1 + $0x810] sm:$0xff]
    %v381 = vld [vmem:[%s1 + $0x818] sm:$0xff]
    %v382 = vld [vmem:[%s1 + $0x820] sm:$0xff]
    %v383 = vld [vmem:[%s1 + $0x828] sm:$0xff]
    %v384 = vld [vmem:[%s1 + $0x830] sm:$0xff]
    %v385 = vld [vmem:[%s1 + $0x838] sm:$0xff]
    %v386 = vld [vmem:[%s1 + $0x840] sm:$0xff]
    %v387 = vld [vmem:[%s1 + $0x848] sm:$0xff]
    %v388 = vld [vmem:[%s1 + $0x850] sm:$0xff]
    %v389 = vld [vmem:[%s1 + $0x858] sm:$0xff]
    %v390 = vld [vmem:[%s1 + $0x860] sm:$0xff]
    %v391 = vld [vmem:[%s1 + $0x868] sm:$0xff]
    %v392 = vld [vmem:[%s1 + $0x870] sm:$0xff]
    %v393 = vld [vmem:[%s1 + $0x878] sm:$0xff]
    %v394 = vld [vmem:[%s1 + $0x880] sm:$0xff]
    %v395 = vld [vmem:[%s1 + $0x888] sm:$0xff]
    %v396 = vld [vmem:[%s1 + $0x890] sm:$0xff]
    %v397 = vld [vmem:[%s1 + $0x898] sm:$0xff]
    %v398 = vld [vmem:[%s1 + $0x8a0] sm:$0xff]
    %v399 = vld [vmem:[%s1 + $0x8a8] sm:$0xff]
    %v400 = vld [vmem:[%s1 + $0x8b0] sm:$0xff]
    %v401 = vld [vmem:[%s1 + $0x8b8] sm:$0xff]
    %v402 = vld [vmem:[%s1 + $0x8c0] sm:$0xff]
    %v403 = vld [vmem:[%s1 + $0x8c8] sm:$0xff]
    %v404 = vld [vmem:[%s1 + $0x8d0] sm:$0xff]
    %v405 = vld [vmem:[%s1 + $0x8d8] sm:$0xff]
    %v406 = vld [vmem:[%s1 + $0x8e0] sm:$0xff]
    %v407 = vld [vmem:[%s1 + $0x8e8] sm:$0xff]
    %v408 = vld [vmem:[%s1 + $0x8f0] sm:$0xff]
    %v409 = vld [vmem:[%s1 + $0x8f8] sm:$0xff]
    %v410 = vld [vmem:[%s1 + $0x900] sm:$0xff]
    %v411 = vld [vmem:[%s1 + $0x908] sm:$0xff]
    %v412 = vld [vmem:[%s1 + $0x910] sm:$0xff]
    %v413 = vld [vmem:[%s1 + $0x918] sm:$0xff]
    %v414 = vld [vmem:[%s1 + $0x920] sm:$0xff]
    %v415 = vld [vmem:[%s1 + $0x928] sm:$0xff]
    %v416 = vld [vmem:[%s1 + $0x930] sm:$0xff]
    %v417 = vld [vmem:[%s1 + $0x938] sm:$0xff]
    %v418 = vld [vmem:[%s1 + $0x940] sm:$0xff]
    %v419 = vld [vmem:[%s1 + $0x948] sm:$0xff]
    %v420 = vld [vmem:[%s1 + $0x950] sm:$0xff]
    %v421 = vld [vmem:[%s1 + $0x958] sm:$0xff]
    %v422 = vld [vmem:[%s1 + $0x960] sm:$0xff]
    %v423 = vld [vmem:[%s1 + $0x968] sm:$0xff]
    %v424 = vld [vmem:[%s1 + $0x970] sm:$0xff]
    %v425 = vld [vmem:[%s1 + $0x978] sm:$0xff]
    %v426 = vld [vmem:[%s1 + $0x980] sm:$0xff]
    %v427 = vld [vmem:[%s1 + $0x988] sm:$0xff]
    %v428 = vld [vmem:[%s1 + $0x990] sm:$0xff]
    %v429 = vld [vmem:[%s1 + $0x998] sm:$0xff]
    %v430 = vld [vmem:[%s1 + $0x9a0] sm:$0xff]
    %v431 = vld [vmem:[%s1 + $0x9a8] sm:$0xff]
    %v432 = vld [vmem:[%s1 + $0x9b0] sm:$0xff]
    %v433 = vld [vmem:[%s1 + $0x9b8] sm:$0xff]
    %v434 = vld [vmem:[%s1 + $0x9c0] sm:$0xff]
    %v435 = vld [vmem:[%s1 + $0x9c8] sm:$0xff]
    %v436 = vld [vmem:[%s1 + $0x9d0] sm:$0xff]
    %v437 = vld [vmem:[%s1 + $0x9d8] sm:$0xff]
    %v438 = vld [vmem:[%s1 + $0x9e0] sm:$0xff]
    %v439 = vld [vmem:[%s1 + $0x9e8] sm:$0xff]
    %v440 = vld [vmem:[%s1 + $0x9f0] sm:$0xff]
    %v441 = vld [vmem:[%s1 + $0x9f8] sm:$0xff]
    %v442 = vld [vmem:[%s1 + $0xa00] sm:$0xff]
    %v443 = vld [vmem:[%s1 + $0xa08] sm:$0xff]
    %v444 = vld [vmem:[%s1 + $0xa10] sm:$0xff]
    %v445 = vld [vmem:[%s1 + $0xa18] sm:$0xff]
    %v446 = vld [vmem:[%s1 + $0xa20] sm:$0xff]
    %v447 = vld [vmem:[%s1 + $0xa28] sm:$0xff]
    %v448 = vld [vmem:[%s1 + $0xa30] sm:$0xff]
    %v449 = vld [vmem:[%s1 + $0xa38] sm:$0xff]
    %v450 = vld [vmem:[%s1 + $0xa40] sm:$0xff]
    %v451 = vld [vmem:[%s1 + $0xa48] sm:$0xff]
    %v452 = vld [vmem:[%s1 + $0xa50] sm:$0xff]
    %v453 = vld [vmem:[%s1 + $0xa58] sm:$0xff]
    %v454 = vld [vmem:[%s1 + $0xa60] sm:$0xff]
    %v455 = vld [vmem:[%s1 + $0xa68] sm:$0xff]
    %v456 = vld [vmem:[%s1 + $0xa70] sm:$0xff]
    %v457 = vld [vmem:[%s1 + $0xa78] sm:$0xff]
    %v458 = vld [vmem:[%s1 + $0xa80] sm:$0xff]
    %v459 = vld [vmem:[%s1 + $0xa88] sm:$0xff]
    %v460 = vld [vmem:[%s1 + $0xa90] sm:$0xff]
    %v461 = vld [vmem:[%s1 + $0xa98] sm:$0xff]
    %v462 = vld [vmem:[%s1 + $0xaa0] sm:$0xff]
    %v463 = vld [vmem:[%s1 + $0xaa8] sm:$0xff]
    %v464 = vld [vmem:[%s1 + $0xab0] sm:$0xff]
    %v465 = vld [vmem:[%s1 + $0xab8] sm:$0xff]
    %v466 = vld [vmem:[%s1 + $0xac0] sm:$0xff]
    %v467 = vld [vmem:[%s1 + $0xac8] sm:$0xff]
    %v468 = vld [vmem:[%s1 + $0xad0] sm:$0xff]
    %v469 = vld [vmem:[%s1 + $0xad8] sm:$0xff]
    %v470 = vld [vmem:[%s1 + $0xae0] sm:$0xff]
    %v471 = vld [vmem:[%s1 + $0xae8] sm:$0xff]
    %v472 = vld [vmem:[%s1 + $0xaf0] sm:$0xff]
    %v473 = vld [vmem:[%s1 + $0xaf8] sm:$0xff]
    %v474 = vld [vmem:[%s1 + $0xb00] sm:$0xff]
    %v475 = vld [vmem:[%s1 + $0xb08] sm:$0xff]
    %v476 = vld [vmem:[%s1 + $0xb10] sm:$0xff]
    %v477 = vld [vmem:[%s1 + $0xb18] sm:$0xff]
    %v478 = vld [vmem:[%s1 + $0xb20] sm:$0xff]
    %v479 = vld [vmem:[%s1 + $0xb28] sm:$0xff]
    %v480 = vld [vmem:[%s1 + $0xb30] sm:$0xff]
    %v481 = vld [vmem:[%s1 + $0xb38] sm:$0xff]
    %v482 = vld [vmem:[%s1 + $0xb40] sm:$0xff]
    %v483 = vld [vmem:[%s1 + $0xb48] sm:$0xff]
    %v484 = vld [vmem:[%s1 + $0xb50] sm:$0xff]
    %v485 = vld [vmem:[%s1 + $0xb58] sm:$0xff]
    %v486 = vld [vmem:[%s1 + $0xb60] sm:$0xff]
    %v487 = vld [vmem:[%s1 + $0xb68] sm:$0xff]
    %v488 = vld [vmem:[%s1 + $0xb70] sm:$0xff]
    %v489 = vld [vmem:[%s1 + $0xb78] sm:$0xff]
    %v490 = vld [vmem:[%s1 + $0xb80] sm:$0xff]
    %v491 = vld [vmem:[%s1 + $0xb88] sm:$0xff]
    %v492 = vld [vmem:[%s1 + $0xb90] sm:$0xff]
    %v493 = vld [vmem:[%s1 + $0xb98] sm:$0xff]
    %v494 = vld [vmem:[%s1 + $0xba0] sm:$0xff]
    %v495 = vld [vmem:[%s1 + $0xba8] sm:$0xff]
    %v496 = vld [vmem:[%s1 + $0xbb0] sm:$0xff]
    %v497 = vld [vmem:[%s1 + $0xbb8] sm:$0xff]
    %v498 = vld [vmem:[%s1 + $0xbc0] sm:$0xff]
    %v499 = vld [vmem:[%s1 + $0xbc8] sm:$0xff]
    %v500 = vld [vmem:[%s1 + $0xbd0] sm:$0xff]
    %v501 = vld [vmem:[%s1 + $0xbd8] sm:$0xff]
    %v502 = vld [vmem:[%s1 + $0xbe0] sm:$0xff]
    %v503 = vld [vmem:[%s1 + $0xbe8] sm:$0xff]
    %v504 = vld [vmem:[%s1 + $0xbf0] sm:$0xff]
    %v505 = vld [vmem:[%s1 + $0xbf8] sm:$0xff]
    %v506 = vld [vmem:[%s1 + $0xc00] sm:$0xff]
    %v507 = vld [vmem:[%s1 + $0xc08] sm:$0xff]
    %v508 = vld [vmem:[%s1 + $0xc10] sm:$0xff]
    %v509 = vld [vmem:[%s1 + $0xc18] sm:$0xff]
    %v510 = vld [vmem:[%s1 + $0xc20] sm:$0xff]
    %v511 = vld [vmem:[%s1 + $0xc28] sm:$0xff]
    %v512 = vld [vmem:[%s1 + $0xc30] sm:$0xff]
    %v513 = vld [vmem:[%s1 + $0xc38] sm:$0xff]
    %v514 = vld [vmem:[%s1 + $0xc40] sm:$0xff]
    %v515 = vld [vmem:[%s1 + $0xc48] sm:$0xff]
    %v516 = vld [vmem:[%s1 + $0xc50] sm:$0xff]
    %v517 = vld [vmem:[%s1 + $0xc58] sm:$0xff]
    %v518 = vld [vmem:[%s1 + $0xc60] sm:$0xff]
    %v519 = vld [vmem:[%s1 + $0xc68] sm:$0xff]
    %v520 = vld [vmem:[%s1 + $0xc70] sm:$0xff]
    %v521 = vld [vmem:[%s1 + $0xc78] sm:$0xff]
    %v522 = vld [vmem:[%s1 + $0xc80] sm:$0xff]
    %v523 = vld [vmem:[%s1 + $0xc88] sm:$0xff]
    %v524 = vld [vmem:[%s1 + $0xc90] sm:$0xff]
    %v525 = vld [vmem:[%s1 + $0xc98] sm:$0xff]
    %v526 = vld [vmem:[%s1 + $0xca0] sm:$0xff]
    %v527 = vld [vmem:[%s1 + $0xca8] sm:$0xff]
    %v528 = vld [vmem:[%s1 + $0xcb0] sm:$0xff]
    %v529 = vld [vmem:[%s1 + $0xcb8] sm:$0xff]
    %v530 = vld [vmem:[%s1 + $0xcc0] sm:$0xff]
    %v531 = vld [vmem:[%s1 + $0xcc8] sm:$0xff]
    %v532 = vld [vmem:[%s1 + $0xcd0] sm:$0xff]
    %v533 = vld [vmem:[%s1 + $0xcd8] sm:$0xff]
    %v534 = vld [vmem:[%s1 + $0xce0] sm:$0xff]
    %v535 = vld [vmem:[%s1 + $0xce8] sm:$0xff]
    %v536 = vld [vmem:[%s1 + $0xcf0] sm:$0xff]
    %v537 = vld [vmem:[%s1 + $0xcf8] sm:$0xff]
    %v538 = vld [vmem:[%s1 + $0xd00] sm:$0xff]
    %v539 = vld [vmem:[%s1 + $0xd08] sm:$0xff]
    %v540 = vld [vmem:[%s1 + $0xd10] sm:$0xff]
    %v541 = vld [vmem:[%s1 + $0xd18] sm:$0xff]
    %v542 = vld [vmem:[%s1 + $0xd20] sm:$0xff]
    %v543 = vld [vmem:[%s1 + $0xd28] sm:$0xff]
    %v544 = vld [vmem:[%s1 + $0xd30] sm:$0xff]
    %v545 = vld [vmem:[%s1 + $0xd38] sm:$0xff]
    %v546 = vld [vmem:[%s1 + $0xd40] sm:$0xff]
    %v547 = vld [vmem:[%s1 + $0xd48] sm:$0xff]
    %v548 = vld [vmem:[%s1 + $0xd50] sm:$0xff]
    %v549 = vld [vmem:[%s1 + $0xd58] sm:$0xff]
    %v550 = vld [vmem:[%s1 + $0xd60] sm:$0xff]
    %v551 = vld [vmem:[%s1 + $0xd68] sm:$0xff]
    %v552 = vld [vmem:[%s1 + $0xd70] sm:$0xff]
    %v553 = vld [vmem:[%s1 + $0xd78] sm:$0xff]
    %v554 = vld [vmem:[%s1 + $0xd80] sm:$0xff]
    %v555 = vld [vmem:[%s1 + $0xd88] sm:$0xff]
    %v556 = vld [vmem:[%s1 + $0xd90] sm:$0xff]
    %v557 = vld [vmem:[%s1 + $0xd98] sm:$0xff]
    %v558 = vld [vmem:[%s1 + $0xda0] sm:$0xff]
    %v559 = vld [vmem:[%s1 + $0xda8] sm:$0xff]
    %v560 = vld [vmem:[%s1 + $0xdb0] sm:$0xff]
    %v561 = vld [vmem:[%s1 + $0xdb8] sm:$0xff]
    %v562 = vld [vmem:[%s1 + $0xdc0] sm:$0xff]
    %v563 = vld [vmem:[%s1 + $0xdc8] sm:$0xff]
    %v564 = vld [vmem:[%s1 + $0xdd0] sm:$0xff]
    %v565 = vld [vmem:[%s1 + $0xdd8] sm:$0xff]
    %v566 = vld [vmem:[%s1 + $0xde0] sm:$0xff]
    %v567 = vld [vmem:[%s1 + $0xde8] sm:$0xff]
    %v568 = vld [vmem:[%s1 + $0xdf0] sm:$0xff]
    %v569 = vld [vmem:[%s1 + $0xdf8] sm:$0xff]
    %v570 = vld [vmem:[%s1 + $0xe00] sm:$0xff]
    %v571 = vld [vmem:[%s1 + $0xe08] sm:$0xff]
    %v572 = vld [vmem:[%s1 + $0xe10] sm:$0xff]
    %v573 = vld [vmem:[%s1 + $0xe18] sm:$0xff]
    %v574 = vld [vmem:[%s1 + $0xe20] sm:$0xff]
    %v575 = vld [vmem:[%s1 + $0xe28] sm:$0xff]
    %v576 = vld [vmem:[%s1 + $0xe30] sm:$0xff]
    %v577 = vld [vmem:[%s1 + $0xe38] sm:$0xff]
    %v578 = vld [vmem:[%s1 + $0xe40] sm:$0xff]
    %v579 = vld [vmem:[%s1 + $0xe48] sm:$0xff]
    %v580 = vld [vmem:[%s1 + $0xe50] sm:$0xff]
    %v581 = vld [vmem:[%s1 + $0xe58] sm:$0xff]
    %v582 = vld [vmem:[%s1 + $0xe60] sm:$0xff]
    %v583 = vld [vmem:[%s1 + $0xe68] sm:$0xff]
    %v584 = vld [vmem:[%s1 + $0xe70] sm:$0xff]
    %v585 = vld [vmem:[%s1 + $0xe78] sm:$0xff]
    %v586 = vld [vmem:[%s1 + $0xe80] sm:$0xff]
    %v587 = vld [vmem:[%s1 + $0xe88] sm:$0xff]
    %v588 = vld [vmem:[%s1 + $0xe90] sm:$0xff]
    %v589 = vld [vmem:[%s1 + $0xe98] sm:$0xff]
    %v590 = vld [vmem:[%s1 + $0xea0] sm:$0xff]
    %v591 = vld [vmem:[%s1 + $0xea8] sm:$0xff]
    %v592 = vld [vmem:[%s1 + $0xeb0] sm:$0xff]
    %v593 = vld [vmem:[%s1 + $0xeb8] sm:$0xff]
    %v594 = vld [vmem:[%s1 + $0xec0] sm:$0xff]
    %v595 = vld [vmem:[%s1 + $0xec8] sm:$0xff]
    %v596 = vld [vmem:[%s1 + $0xed0] sm:$0xff]
    %v597 = vld [vmem:[%s1 + $0xed8] sm:$0xff]
    %v598 = vld [vmem:[%s1 + $0xee0] sm:$0xff]
    %v599 = vld [vmem:[%s1 + $0xee8] sm:$0xff]
    %v600 = vld [vmem:[%s1 + $0xef0] sm:$0xff]
    %v601 = vld [vmem:[%s1 + $0xef8] sm:$0xff]
    %v602 = vld [vmem:[%s1 + $0xf00] sm:$0xff]
    %v603 = vld [vmem:[%s1 + $0xf08] sm:$0xff]
    %v604 = vld [vmem:[%s1 + $0xf10] sm:$0xff]
    %v605 = vld [vmem:[%s1 + $0xf18] sm:$0xff]
    %v606 = vld [vmem:[%s1 + $0xf20] sm:$0xff]
    %v607 = vld [vmem:[%s1 + $0xf28] sm:$0xff]
    %v608 = vld [vmem:[%s1 + $0xf30] sm:$0xff]
    %v609 = vld [vmem:[%s1 + $0xf38] sm:$0xff]
    %v610 = vld [vmem:[%s1 + $0xf40] sm:$0xff]
    %v611 = vld [vmem:[%s1 + $0xf48] sm:$0xff]
    %v612 = vld [vmem:[%s1 + $0xf50] sm:$0xff]
    %v613 = vld [vmem:[%s1 + $0xf58] sm:$0xff]
    %v614 = vld [vmem:[%s1 + $0xf60] sm:$0xff]
    %v615 = vld [vmem:[%s1 + $0xf68] sm:$0xff]
    %v616 = vld [vmem:[%s1 + $0xf70] sm:$0xff]
    %v617 = vld [vmem:[%s1 + $0xf78] sm:$0xff]
    %v618 = vld [vmem:[%s1 + $0xf80] sm:$0xff]
    %v619 = vld [vmem:[%s1 + $0xf88] sm:$0xff]
    %v620 = vld [vmem:[%s1 + $0xf90] sm:$0xff]
    %v621 = vld [vmem:[%s1 + $0xf98] sm:$0xff]
    %v622 = vld [vmem:[%s1 + $0xfa0] sm:$0xff]
    %v623 = vld [vmem:[%s1 + $0xfa8] sm:$0xff]
    %v624 = vld [vmem:[%s1 + $0xfb0] sm:$0xff]
    %v625 = vld [vmem:[%s1 + $0xfb8] sm:$0xff]
    %v626 = vld [vmem:[%s1 + $0xfc0] sm:$0xff]
    %v627 = vld [vmem:[%s1 + $0xfc8] sm:$0xff]
    %v628 = vld [vmem:[%s1 + $0xfd0] sm:$0xff]
    %v629 = vld [vmem:[%s1 + $0xfd8] sm:$0xff]
    %v630 = vld [vmem:[%s1 + $0xfe0] sm:$0xff]
    %v631 = vld [vmem:[%s1 + $0xfe8] sm:$0xff]
    %v632 = vld [vmem:[%s1 + $0xff0] sm:$0xff]
    %v633 = vld [vmem:[%s1 + $0xff8] sm:$0xff]
    %v634 = vld [vmem:[%s1 + $0x1000] sm:$0xff]
    %v635 = vld [vmem:[%s1 + $0x1008] sm:$0xff]
    %v636 = vld [vmem:[%s1 + $0x1010] sm:$0xff]
    %v637 = vld [vmem:[%s1 + $0x1018] sm:$0xff]
    %v638 = vld [vmem:[%s1 + $0x1020] sm:$0xff]
    %v639 = vld [vmem:[%s1 + $0x1028] sm:$0xff]
    %v640 = vld [vmem:[%s1 + $0x1030] sm:$0xff]
    %v641 = vld [vmem:[%s1 + $0x1038] sm:$0xff]
    %v642 = vld [vmem:[%s1 + $0x1040] sm:$0xff]
    %v643 = vld [vmem:[%s1 + $0x1048] sm:$0xff]
    %v644 = vld [vmem:[%s1 + $0x1050] sm:$0xff]
    %v645 = vld [vmem:[%s1 + $0x1058] sm:$0xff]
    %v646 = vld [vmem:[%s1 + $0x1060] sm:$0xff]
    %v647 = vld [vmem:[%s1 + $0x1068] sm:$0xff]
    %v648 = vld [vmem:[%s1 + $0x1070] sm:$0xff]
    %v649 = vld [vmem:[%s1 + $0x1078] sm:$0xff]
    %v650 = vld [vmem:[%s1 + $0x1080] sm:$0xff]
    %v651 = vld [vmem:[%s1 + $0x1088] sm:$0xff]
    %v652 = vld [vmem:[%s1 + $0x1090] sm:$0xff]
    %v653 = vld [vmem:[%s1 + $0x1098] sm:$0xff]
    %v654 = vld [vmem:[%s1 + $0x10a0] sm:$0xff]
    %v655 = vld [vmem:[%s1 + $0x10a8] sm:$0xff]
    %v656 = vld [vmem:[%s1 + $0x10b0] sm:$0xff]
    %v657 = vld [vmem:[%s1 + $0x10b8] sm:$0xff]
    %v658 = vld [vmem:[%s1 + $0x10c0] sm:$0xff]
    %v659 = vld [vmem:[%s1 + $0x10c8] sm:$0xff]
    %v660 = vld [vmem:[%s1 + $0x10d0] sm:$0xff]
    %v661 = vld [vmem:[%s1 + $0x10d8] sm:$0xff]
    %v662 = vld [vmem:[%s1 + $0x10e0] sm:$0xff]
    %v663 = vld [vmem:[%s1 + $0x10e8] sm:$0xff]
    %v664 = vld [vmem:[%s1 + $0x10f0] sm:$0xff]
    %v665 = vld [vmem:[%s1 + $0x10f8] sm:$0xff]
    %v666 = vld [vmem:[%s1 + $0x1100] sm:$0xff]
    %v667 = vld [vmem:[%s1 + $0x1108] sm:$0xff]
    %v668 = vld [vmem:[%s1 + $0x1110] sm:$0xff]
    %v669 = vld [vmem:[%s1 + $0x1118] sm:$0xff]
    %v670 = vld [vmem:[%s1 + $0x1120] sm:$0xff]
    %v671 = vld [vmem:[%s1 + $0x1128] sm:$0xff]
    %v672 = vld [vmem:[%s1 + $0x1130] sm:$0xff]
    %v673 = vld [vmem:[%s1 + $0x1138] sm:$0xff]
    %v674 = vld [vmem:[%s1 + $0x1140] sm:$0xff]
    %v675 = vld [vmem:[%s1 + $0x1148] sm:$0xff]
    %v676 = vld [vmem:[%s1 + $0x1150] sm:$0xff]
    %v677 = vld [vmem:[%s1 + $0x1158] sm:$0xff]
    %v678 = vld [vmem:[%s1 + $0x1160] sm:$0xff]
    %v679 = vld [vmem:[%s1 + $0x1168] sm:$0xff]
    %v680 = vld [vmem:[%s1 + $0x1170] sm:$0xff]
    %v681 = vld [vmem:[%s1 + $0x1178] sm:$0xff]
    %v682 = vld [vmem:[%s1 + $0x1180] sm:$0xff]
    %v683 = vld [vmem:[%s1 + $0x1188] sm:$0xff]
    %v684 = vld [vmem:[%s1 + $0x1190] sm:$0xff]
    %v685 = vld [vmem:[%s1 + $0x1198] sm:$0xff]
    %v686 = vld [vmem:[%s1 + $0x11a0] sm:$0xff]
    %v687 = vld [vmem:[%s1 + $0x11a8] sm:$0xff]
    %v688 = vld [vmem:[%s1 + $0x11b0] sm:$0xff]
    %v689 = vld [vmem:[%s1 + $0x11b8] sm:$0xff]
    %v690 = vld [vmem:[%s1 + $0x11c0] sm:$0xff]
    %v691 = vld [vmem:[%s1 + $0x11c8] sm:$0xff]
    %v692 = vld [vmem:[%s1 + $0x11d0] sm:$0xff]
    %v693 = vld [vmem:[%s1 + $0x11d8] sm:$0xff]
    %v694 = vld [vmem:[%s1 + $0x11e0] sm:$0xff]
    %v695 = vld [vmem:[%s1 + $0x11e8] sm:$0xff]
    %v696 = vld [vmem:[%s1 + $0x11f0] sm:$0xff]
    %v697 = vld [vmem:[%s1 + $0x11f8] sm:$0xff]
    %v698 = vld [vmem:[%s1 + $0x1200] sm:$0xff]
    %v699 = vld [vmem:[%s1 + $0x1208] sm:$0xff]
    %v700 = vld [vmem:[%s1 + $0x1210] sm:$0xff]
    %v701 = vld [vmem:[%s1 + $0x1218] sm:$0xff]
    %v702 = vld [vmem:[%s1 + $0x1220] sm:$0xff]
    %v703 = vld [vmem:[%s1 + $0x1228] sm:$0xff]
    %v704 = vld [vmem:[%s1 + $0x1230] sm:$0xff]
    %v705 = vld [vmem:[%s1 + $0x1238] sm:$0xff]
    %v706 = vld [vmem:[%s1 + $0x1240] sm:$0xff]
    %v707 = vld [vmem:[%s1 + $0x1248] sm:$0xff]
    %v708 = vld [vmem:[%s1 + $0x1250] sm:$0xff]
    %v709 = vld [vmem:[%s1 + $0x1258] sm:$0xff]
    %v710 = vld [vmem:[%s1 + $0x1260] sm:$0xff]
    %v711 = vld [vmem:[%s1 + $0x1268] sm:$0xff]
    %v712 = vld [vmem:[%s1 + $0x1270] sm:$0xff]
    %v713 = vld [vmem:[%s1 + $0x1278] sm:$0xff]
    %v714 = vld [vmem:[%s1 + $0x1280] sm:$0xff]
    %v715 = vld [vmem:[%s1 + $0x1288] sm:$0xff]
    %v716 = vld [vmem:[%s1 + $0x1290] sm:$0xff]
    %v717 = vld [vmem:[%s1 + $0x1298] sm:$0xff]
    %v718 = vld [vmem:[%s1 + $0x12a0] sm:$0xff]
    %v719 = vld [vmem:[%s1 + $0x12a8] sm:$0xff]
    %v720 = vld [vmem:[%s1 + $0x12b0] sm:$0xff]
    %v721 = vld [vmem:[%s1 + $0x12b8] sm:$0xff]
    %v722 = vld [vmem:[%s1 + $0x12c0] sm:$0xff]
    %v723 = vld [vmem:[%s1 + $0x12c8] sm:$0xff]
    %v724 = vld [vmem:[%s1 + $0x12d0] sm:$0xff]
    %v725 = vld [vmem:[%s1 + $0x12d8] sm:$0xff]
    %v726 = vld [vmem:[%s1 + $0x12e0] sm:$0xff]
    %v727 = vld [vmem:[%s1 + $0x12e8] sm:$0xff]
    %v728 = vld [vmem:[%s1 + $0x12f0] sm:$0xff]
    %v729 = vld [vmem:[%s1 + $0x12f8] sm:$0xff]
    %v730 = vld [vmem:[%s1 + $0x1300] sm:$0xff]
    %v731 = vld [vmem:[%s1 + $0x1308] sm:$0xff]
    %v732 = vld [vmem:[%s1 + $0x1310] sm:$0xff]
    %v733 = vld [vmem:[%s1 + $0x1318] sm:$0xff]
    %v734 = vld [vmem:[%s1 + $0x1320] sm:$0xff]
    %v735 = vld [vmem:[%s1 + $0x1328] sm:$0xff]
    %v736 = vld [vmem:[%s1 + $0x1330] sm:$0xff]
    %v737 = vld [vmem:[%s1 + $0x1338] sm:$0xff]
    %v738 = vld [vmem:[%s1 + $0x1340] sm:$0xff]
    %v739 = vld [vmem:[%s1 + $0x1348] sm:$0xff]
    %v740 = vld [vmem:[%s1 + $0x1350] sm:$0xff]
    %v741 = vld [vmem:[%s1 + $0x1358] sm:$0xff]
    %v742 = vld [vmem:[%s1 + $0x1360] sm:$0xff]
    %v743 = vld [vmem:[%s1 + $0x1368] sm:$0xff]
    %v744 = vld [vmem:[%s1 + $0x1370] sm:$0xff]
    %v745 = vld [vmem:[%s1 + $0x1378] sm:$0xff]
    %v746 = vld [vmem:[%s1 + $0x1380] sm:$0xff]
    %v747 = vld [vmem:[%s1 + $0x1388] sm:$0xff]
    %v748 = vld [vmem:[%s1 + $0x1390] sm:$0xff]
    %v749 = vld [vmem:[%s1 + $0x1398] sm:$0xff]
    %v750 = vld [vmem:[%s1 + $0x13a0] sm:$0xff]
    %v751 = vld [vmem:[%s1 + $0x13a8] sm:$0xff]
    %v752 = vld [vmem:[%s1 + $0x13b0] sm:$0xff]
    %v753 = vld [vmem:[%s1 + $0x13b8] sm:$0xff]
    %v754 = vld [vmem:[%s1 + $0x13c0] sm:$0xff]
    %v755 = vld [vmem:[%s1 + $0x13c8] sm:$0xff]
    %v756 = vld [vmem:[%s1 + $0x13d0] sm:$0xff]
    %v757 = vld [vmem:[%s1 + $0x13d8] sm:$0xff]
    %v758 = vld [vmem:[%s1 + $0x13e0] sm:$0xff]
    %v759 = vld [vmem:[%s1 + $0x13e8] sm:$0xff]
    %v760 = vld [vmem:[%s1 + $0x13f0] sm:$0xff]
    %v761 = vld [vmem:[%s1 + $0x13f8] sm:$0xff]
    %v762 = vld [vmem:[%s1 + $0x1400] sm:$0xff]
    %v763 = vld [vmem:[%s1 + $0x1408] sm:$0xff]
    %v764 = vld [vmem:[%s1 + $0x1410] sm:$0xff]
    %v765 = vld [vmem:[%s1 + $0x1418] sm:$0xff]
    %v766 = vld [vmem:[%s1 + $0x1420] sm:$0xff]
    %v767 = vld [vmem:[%s1 + $0x1428] sm:$0xff]
    %v768 = vld [vmem:[%s1 + $0x1430] sm:$0xff]
    %v769 = vld [vmem:[%s1 + $0x1438] sm:$0xff]
    %v770 = vld [vmem:[%s1 + $0x1440] sm:$0xff]
    %v771 = vld [vmem:[%s1 + $0x1448] sm:$0xff]
    %v772 = vld [vmem:[%s1 + $0x1450] sm:$0xff]
    %v773 = vld [vmem:[%s1 + $0x1458] sm:$0xff]
    %v774 = vld [vmem:[%s1 + $0x1460] sm:$0xff]
    %v775 = vld [vmem:[%s1 + $0x1468] sm:$0xff]
    %v776 = vld [vmem:[%s1 + $0x1470] sm:$0xff]
    %v777 = vld [vmem:[%s1 + $0x1478] sm:$0xff]
    %v778 = vld [vmem:[%s1 + $0x1480] sm:$0xff]
    %v779 = vld [vmem:[%s1 + $0x1488] sm:$0xff]
    %v780 = vld [vmem:[%s1 + $0x1490] sm:$0xff]
    %v781 = vld [vmem:[%s1 + $0x1498] sm:$0xff]
    %v782 = vld [vmem:[%s1 + $0x14a0] sm:$0xff]
    %v783 = vld [vmem:[%s1 + $0x14a8] sm:$0xff]
    %v784 = vld [vmem:[%s1 + $0x14b0] sm:$0xff]
    %v785 = vld [vmem:[%s1 + $0x14b8] sm:$0xff]
    %v786 = vld [vmem:[%s1 + $0x14c0] sm:$0xff]
    %v787 = vld [vmem:[%s1 + $0x14c8] sm:$0xff]
    %v788 = vld [vmem:[%s1 + $0x14d0] sm:$0xff]
    %v789 = vld [vmem:[%s1 + $0x14d8] sm:$0xff]
    %v790 = vld [vmem:[%s1 + $0x14e0] sm:$0xff]
    %v791 = vld [vmem:[%s1 + $0x14e8] sm:$0xff]
    %v792 = vld [vmem:[%s1 + $0x14f0] sm:$0xff]
    %v793 = vld [vmem:[%s1 + $0x14f8] sm:$0xff]
    %v794 = vld [vmem:[%s1 + $0x1500] sm:$0xff]
    %v795 = vld [vmem:[%s1 + $0x1508] sm:$0xff]
    %v796 = vld [vmem:[%s1 + $0x1510] sm:$0xff]
    %v797 = vld [vmem:[%s1 + $0x1518] sm:$0xff]
    %v798 = vld [vmem:[%s1 + $0x1520] sm:$0xff]
    %v799 = vld [vmem:[%s1 + $0x1528] sm:$0xff]
    %v800 = vld [vmem:[%s1 + $0x1530] sm:$0xff]
    %v801 = vld [vmem:[%s1 + $0x1538] sm:$0xff]
    %v802 = vld [vmem:[%s1 + $0x1540] sm:$0xff]
    %v803 = vld [vmem:[%s1 + $0x1548] sm:$0xff]
    %v804 = vld [vmem:[%s1 + $0x1550] sm:$0x33]
    %v805 = vld [vmem:[%s2] sm:$0x3]
    %v807 = vlaneseq
    %v808 = vshrl.u32 %v807, 7
    %v809 = vsub.s32 0, %v808
    %v810 = vrot.slane %v805, %v809
    %v811 = vlaneseq
    %v812 = vshrl.u32 %v811, 7
    %v813 = vsub.s32 1, %v812
    %v814 = vrot.slane %v805, %v813
    %v1500 = vunpack.c.l.b16 %v122
    %v1501 = vunpack.c.h.b16 %v122
    %v1502 = vunpack.c.l.b16 %v123
    %v1503 = vunpack.c.h.b16 %v123
    %v1504 = vunpack.c.l.b16 %v124
    %v1505 = vunpack.c.h.b16 %v124
    %v1506 = vunpack.c.l.b16 %v125
    %v1507 = vunpack.c.h.b16 %v125
    %v1508 = vunpack.c.l.b16 %v126
    %v1509 = vunpack.c.h.b16 %v126
    %v1510 = vunpack.c.l.b16 %v127
    %v1511 = vunpack.c.h.b16 %v127
    %v1512 = vunpack.c.l.b16 %v128
    %v1513 = vunpack.c.h.b16 %v128
    %v1514 = vunpack.c.l.b16 %v129
    %v1515 = vunpack.c.h.b16 %v129
    %v1516 = vunpack.c.l.b16 %v130
    %v1517 = vunpack.c.h.b16 %v130
    %v1518 = vunpack.c.l.b16 %v131
    %v1519 = vunpack.c.h.b16 %v131
    %v1520 = vunpack.c.l.b16 %v132
    %v1521 = vunpack.c.h.b16 %v132
    %v1522 = vunpack.c.l.b16 %v133
    %v1523 = vunpack.c.h.b16 %v133
    %v1524 = vunpack.c.l.b16 %v134
    %v1525 = vunpack.c.h.b16 %v134
    %v1526 = vunpack.c.l.b16 %v135
    %v1527 = vunpack.c.h.b16 %v135
    %v1528 = vunpack.c.l.b16 %v136
    %v1529 = vunpack.c.h.b16 %v136
    %v1530 = vunpack.c.l.b16 %v137
    %v1531 = vunpack.c.h.b16 %v137
    %v1532 = vunpack.c.l.b16 %v138
    %v1533 = vunpack.c.h.b16 %v138
    %v1534 = vunpack.c.l.b16 %v139
    %v1535 = vunpack.c.h.b16 %v139
    %v1536 = vunpack.c.l.b16 %v140
    %v1537 = vunpack.c.h.b16 %v140
    %v1538 = vunpack.c.l.b16 %v141
    %v1539 = vunpack.c.h.b16 %v141
    %v1540 = vunpack.c.l.b16 %v142
    %v1541 = vunpack.c.h.b16 %v142
    %v1542 = vunpack.c.l.b16 %v143
    %v1543 = vunpack.c.h.b16 %v143
    %v1544 = vunpack.c.l.b16 %v144
    %v1545 = vunpack.c.h.b16 %v144
    %v1546 = vunpack.c.l.b16 %v145
    %v1547 = vunpack.c.h.b16 %v145
    %v1548 = vunpack.c.l.b16 %v146
    %v1549 = vunpack.c.h.b16 %v146
    %v1550 = vunpack.c.l.b16 %v147
    %v1551 = vunpack.c.h.b16 %v147
    %v1552 = vunpack.c.l.b16 %v148
    %v1553 = vunpack.c.h.b16 %v148
    %v1554 = vunpack.c.l.b16 %v149
    %v1555 = vunpack.c.h.b16 %v149
    %v1556 = vunpack.c.l.b16 %v150
    %v1557 = vunpack.c.h.b16 %v150
    %v1558 = vunpack.c.l.b16 %v151
    %v1559 = vunpack.c.h.b16 %v151
    %v1560 = vunpack.c.l.b16 %v152
    %v1561 = vunpack.c.h.b16 %v152
    %v1562 = vunpack.c.l.b16 %v153
    %v1563 = vunpack.c.h.b16 %v153
    %v1564 = vunpack.c.l.b16 %v154
    %v1565 = vunpack.c.h.b16 %v154
    %v1566 = vunpack.c.l.b16 %v155
    %v1567 = vunpack.c.h.b16 %v155
    %v1568 = vunpack.c.l.b16 %v156
    %v1569 = vunpack.c.h.b16 %v156
    %v1570 = vunpack.c.l.b16 %v157
    %v1571 = vunpack.c.h.b16 %v157
    %v1572 = vunpack.c.l.b16 %v158
    %v1573 = vunpack.c.h.b16 %v158
    %v1574 = vunpack.c.l.b16 %v159
    %v1575 = vunpack.c.h.b16 %v159
    %v1576 = vunpack.c.l.b16 %v160
    %v1577 = vunpack.c.h.b16 %v160
    %v1578 = vunpack.c.l.b16 %v161
    %v1579 = vunpack.c.h.b16 %v161
    %v1580 = vunpack.c.l.b16 %v162
    %v1581 = vunpack.c.h.b16 %v162
    %v1582 = vunpack.c.l.b16 %v163
    %v1583 = vunpack.c.h.b16 %v163
    %v1584 = vunpack.c.l.b16 %v164
    %v1585 = vunpack.c.h.b16 %v164
    %v1586 = vunpack.c.l.b16 %v165
    %v1587 = vunpack.c.h.b16 %v165
    %v1588 = vunpack.c.l.b16 %v166
    %v1589 = vunpack.c.h.b16 %v166
    %v1590 = vunpack.c.l.b16 %v167
    %v1591 = vunpack.c.h.b16 %v167
    %v1592 = vunpack.c.l.b16 %v168
    %v1593 = vunpack.c.h.b16 %v168
    %v1594 = vunpack.c.l.b16 %v169
    %v1595 = vunpack.c.h.b16 %v169
    %v1596 = vunpack.c.l.b16 %v170
    %v1597 = vunpack.c.h.b16 %v170
    %v1598 = vunpack.c.l.b16 %v171
    %v1599 = vunpack.c.h.b16 %v171
    %v1600 = vunpack.c.l.b16 %v172
    %v1601 = vunpack.c.h.b16 %v172
    %v1602 = vunpack.c.l.b16 %v173
    %v1603 = vunpack.c.h.b16 %v173
    %v1604 = vunpack.c.l.b16 %v174
    %v1605 = vunpack.c.h.b16 %v174
    %v1606 = vunpack.c.l.b16 %v175
    %v1607 = vunpack.c.h.b16 %v175
    %v1608 = vunpack.c.l.b16 %v176
    %v1609 = vunpack.c.h.b16 %v176
    %v1610 = vunpack.c.l.b16 %v177
    %v1611 = vunpack.c.h.b16 %v177
    %v1612 = vunpack.c.l.b16 %v178
    %v1613 = vunpack.c.h.b16 %v178
    %v1614 = vunpack.c.l.b16 %v179
    %v1615 = vunpack.c.h.b16 %v179
    %v1616 = vunpack.c.l.b16 %v180
    %v1617 = vunpack.c.h.b16 %v180
    %v1618 = vunpack.c.l.b16 %v181
    %v1619 = vunpack.c.h.b16 %v181
    %v1620 = vunpack.c.l.b16 %v182
    %v1621 = vunpack.c.h.b16 %v182
    %v1622 = vunpack.c.l.b16 %v183
    %v1623 = vunpack.c.h.b16 %v183
    %v1624 = vunpack.c.l.b16 %v184
    %v1625 = vunpack.c.h.b16 %v184
    %v1626 = vunpack.c.l.b16 %v185
    %v1627 = vunpack.c.h.b16 %v185
    %v1628 = vunpack.c.l.b16 %v186
    %v1629 = vunpack.c.h.b16 %v186
    %v1630 = vunpack.c.l.b16 %v187
    %v1631 = vunpack.c.h.b16 %v187
    %v1632 = vunpack.c.l.b16 %v188
    %v1633 = vunpack.c.h.b16 %v188
    %v1634 = vunpack.c.l.b16 %v189
    %v1635 = vunpack.c.h.b16 %v189
    %v1636 = vunpack.c.l.b16 %v190
    %v1637 = vunpack.c.h.b16 %v190
    %v1638 = vunpack.c.l.b16 %v191
    %v1639 = vunpack.c.h.b16 %v191
    %v1640 = vunpack.c.l.b16 %v192
    %v1641 = vunpack.c.h.b16 %v192
    %v1642 = vunpack.c.l.b16 %v193
    %v1643 = vunpack.c.h.b16 %v193
    %v1644 = vunpack.c.l.b16 %v194
    %v1645 = vunpack.c.h.b16 %v194
    %v1646 = vunpack.c.l.b16 %v195
    %v1647 = vunpack.c.h.b16 %v195
    %v1648 = vunpack.c.l.b16 %v196
    %v1649 = vunpack.c.h.b16 %v196
    %v1650 = vunpack.c.l.b16 %v197
    %v1651 = vunpack.c.h.b16 %v197
    %v1652 = vunpack.c.l.b16 %v198
    %v1653 = vunpack.c.h.b16 %v198
    %v1654 = vunpack.c.l.b16 %v199
    %v1655 = vunpack.c.h.b16 %v199
    %v1656 = vunpack.c.l.b16 %v200
    %v1657 = vunpack.c.h.b16 %v200
    %v1658 = vunpack.c.l.b16 %v201
    %v1659 = vunpack.c.h.b16 %v201
    %v1660 = vunpack.c.l.b16 %v202
    %v1661 = vunpack.c.h.b16 %v202
    %v1662 = vunpack.c.l.b16 %v203
    %v1663 = vunpack.c.h.b16 %v203
    %v1664 = vunpack.c.l.b16 %v204
    %v1665 = vunpack.c.h.b16 %v204
    %v1666 = vunpack.c.l.b16 %v205
    %v1667 = vunpack.c.h.b16 %v205
    %v1668 = vunpack.c.l.b16 %v206
    %v1669 = vunpack.c.h.b16 %v206
    %v1670 = vunpack.c.l.b16 %v207
    %v1671 = vunpack.c.h.b16 %v207
    %v1672 = vunpack.c.l.b16 %v208
    %v1673 = vunpack.c.h.b16 %v208
    %v1674 = vunpack.c.l.b16 %v209
    %v1675 = vunpack.c.h.b16 %v209
    %v1676 = vunpack.c.l.b16 %v210
    %v1677 = vunpack.c.h.b16 %v210
    %v1678 = vunpack.c.l.b16 %v211
    %v1679 = vunpack.c.h.b16 %v211
    %v1680 = vunpack.c.l.b16 %v212
    %v1681 = vunpack.c.h.b16 %v212
    %v1682 = vunpack.c.l.b16 %v213
    %v1683 = vunpack.c.h.b16 %v213
    %v1684 = vunpack.c.l.b16 %v214
    %v1685 = vunpack.c.h.b16 %v214
    %v1686 = vunpack.c.l.b16 %v215
    %v1687 = vunpack.c.h.b16 %v215
    %v1688 = vunpack.c.l.b16 %v216
    %v1689 = vunpack.c.h.b16 %v216
    %v1690 = vunpack.c.l.b16 %v217
    %v1691 = vunpack.c.h.b16 %v217
    %v1692 = vunpack.c.l.b16 %v218
    %v1693 = vunpack.c.h.b16 %v218
    %v1694 = vunpack.c.l.b16 %v219
    %v1695 = vunpack.c.h.b16 %v219
    %v1696 = vunpack.c.l.b16 %v220
    %v1697 = vunpack.c.h.b16 %v220
    %v1698 = vunpack.c.l.b16 %v221
    %v1699 = vunpack.c.h.b16 %v221
    %v1700 = vunpack.c.l.b16 %v222
    %v1701 = vunpack.c.h.b16 %v222
    %v1702 = vunpack.c.l.b16 %v223
    %v1703 = vunpack.c.h.b16 %v223
    %v1704 = vunpack.c.l.b16 %v224
    %v1705 = vunpack.c.h.b16 %v224
    %v1706 = vunpack.c.l.b16 %v225
    %v1707 = vunpack.c.h.b16 %v225
    %v1708 = vunpack.c.l.b16 %v226
    %v1709 = vunpack.c.h.b16 %v226
    %v1710 = vunpack.c.l.b16 %v227
    %v1711 = vunpack.c.h.b16 %v227
    %v1712 = vunpack.c.l.b16 %v228
    %v1713 = vunpack.c.h.b16 %v228
    %v1714 = vunpack.c.l.b16 %v229
    %v1715 = vunpack.c.h.b16 %v229
    %v1716 = vunpack.c.l.b16 %v230
    %v1717 = vunpack.c.h.b16 %v230
    %v1718 = vunpack.c.l.b16 %v231
    %v1719 = vunpack.c.h.b16 %v231
    %v1720 = vunpack.c.l.b16 %v232
    %v1721 = vunpack.c.h.b16 %v232
    %v1722 = vunpack.c.l.b16 %v233
    %v1723 = vunpack.c.h.b16 %v233
    %v1724 = vunpack.c.l.b16 %v234
    %v1725 = vunpack.c.h.b16 %v234
    %v1726 = vunpack.c.l.b16 %v235
    %v1727 = vunpack.c.h.b16 %v235
    %v1728 = vunpack.c.l.b16 %v236
    %v1729 = vunpack.c.h.b16 %v236
    %v1730 = vunpack.c.l.b16 %v237
    %v1731 = vunpack.c.h.b16 %v237
    %v1732 = vunpack.c.l.b16 %v238
    %v1733 = vunpack.c.h.b16 %v238
    %v1734 = vunpack.c.l.b16 %v239
    %v1735 = vunpack.c.h.b16 %v239
    %v1736 = vunpack.c.l.b16 %v240
    %v1737 = vunpack.c.h.b16 %v240
    %v1738 = vunpack.c.l.b16 %v241
    %v1739 = vunpack.c.h.b16 %v241
    %v1740 = vunpack.c.l.b16 %v242
    %v1741 = vunpack.c.h.b16 %v242
    %v1742 = vunpack.c.l.b16 %v243
    %v1743 = vunpack.c.h.b16 %v243
    %v1744 = vunpack.c.l.b16 %v244
    %v1745 = vunpack.c.h.b16 %v244
    %v1746 = vunpack.c.l.b16 %v245
    %v1747 = vunpack.c.h.b16 %v245
    %v1748 = vunpack.c.l.b16 %v246
    %v1749 = vunpack.c.h.b16 %v246
    %v1750 = vunpack.c.l.b16 %v247
    %v1751 = vunpack.c.h.b16 %v247
    %v1752 = vunpack.c.l.b16 %v248
    %v1753 = vunpack.c.h.b16 %v248
    %v1754 = vunpack.c.l.b16 %v249
    %v1755 = vunpack.c.h.b16 %v249
    %v1756 = vunpack.c.l.b16 %v250
    %v1757 = vunpack.c.h.b16 %v250
    %v1758 = vunpack.c.l.b16 %v251
    %v1759 = vunpack.c.h.b16 %v251
    %v1760 = vunpack.c.l.b16 %v252
    %v1761 = vunpack.c.h.b16 %v252
    %v1762 = vunpack.c.l.b16 %v253
    %v1763 = vunpack.c.h.b16 %v253
    %v1764 = vunpack.c.l.b16 %v254
    %v1765 = vunpack.c.h.b16 %v254
    %v1766 = vunpack.c.l.b16 %v255
    %v1767 = vunpack.c.h.b16 %v255
    %v1768 = vunpack.c.l.b16 %v256
    %v1769 = vunpack.c.h.b16 %v256
    %v1770 = vunpack.c.l.b16 %v257
    %v1771 = vunpack.c.h.b16 %v257
    %v1772 = vunpack.c.l.b16 %v258
    %v1773 = vunpack.c.h.b16 %v258
    %v1774 = vunpack.c.l.b16 %v259
    %v1775 = vunpack.c.h.b16 %v259
    %v1776 = vunpack.c.l.b16 %v260
    %v1777 = vunpack.c.h.b16 %v260
    %v1778 = vunpack.c.l.b16 %v261
    %v1779 = vunpack.c.h.b16 %v261
    %v1780 = vunpack.c.l.b16 %v262
    %v1781 = vunpack.c.h.b16 %v262
    %v1782 = vunpack.c.l.b16 %v263
    %v1783 = vunpack.c.h.b16 %v263
    %v1784 = vunpack.c.l.b16 %v264
    %v1785 = vunpack.c.h.b16 %v264
    %v1786 = vunpack.c.l.b16 %v265
    %v1787 = vunpack.c.h.b16 %v265
    %v1788 = vunpack.c.l.b16 %v266
    %v1789 = vunpack.c.h.b16 %v266
    %v1790 = vunpack.c.l.b16 %v267
    %v1791 = vunpack.c.h.b16 %v267
    %v1792 = vunpack.c.l.b16 %v268
    %v1793 = vunpack.c.h.b16 %v268
    %v1794 = vunpack.c.l.b16 %v269
    %v1795 = vunpack.c.h.b16 %v269
    %v1796 = vunpack.c.l.b16 %v270
    %v1797 = vunpack.c.h.b16 %v270
    %v1798 = vunpack.c.l.b16 %v271
    %v1799 = vunpack.c.h.b16 %v271
    %v1800 = vunpack.c.l.b16 %v272
    %v1801 = vunpack.c.h.b16 %v272
    %v1802 = vunpack.c.l.b16 %v273
    %v1803 = vunpack.c.h.b16 %v273
    %v1804 = vunpack.c.l.b16 %v274
    %v1805 = vunpack.c.h.b16 %v274
    %v1806 = vunpack.c.l.b16 %v275
    %v1807 = vunpack.c.h.b16 %v275
    %v1808 = vunpack.c.l.b16 %v276
    %v1809 = vunpack.c.h.b16 %v276
    %v1810 = vunpack.c.l.b16 %v277
    %v1811 = vunpack.c.h.b16 %v277
    %v1812 = vunpack.c.l.b16 %v278
    %v1813 = vunpack.c.h.b16 %v278
    %v1814 = vunpack.c.l.b16 %v279
    %v1815 = vunpack.c.h.b16 %v279
    %v1816 = vunpack.c.l.b16 %v280
    %v1817 = vunpack.c.h.b16 %v280
    %v1818 = vunpack.c.l.b16 %v281
    %v1819 = vunpack.c.h.b16 %v281
    %v1820 = vunpack.c.l.b16 %v282
    %v1821 = vunpack.c.h.b16 %v282
    %v1822 = vunpack.c.l.b16 %v283
    %v1823 = vunpack.c.h.b16 %v283
    %v1824 = vunpack.c.l.b16 %v284
    %v1825 = vunpack.c.h.b16 %v284
    %v1826 = vunpack.c.l.b16 %v285
    %v1827 = vunpack.c.h.b16 %v285
    %v1828 = vunpack.c.l.b16 %v286
    %v1829 = vunpack.c.h.b16 %v286
    %v1830 = vunpack.c.l.b16 %v287
    %v1831 = vunpack.c.h.b16 %v287
    %v1832 = vunpack.c.l.b16 %v288
    %v1833 = vunpack.c.h.b16 %v288
    %v1834 = vunpack.c.l.b16 %v289
    %v1835 = vunpack.c.h.b16 %v289
    %v1836 = vunpack.c.l.b16 %v290
    %v1837 = vunpack.c.h.b16 %v290
    %v1838 = vunpack.c.l.b16 %v291
    %v1839 = vunpack.c.h.b16 %v291
    %v1840 = vunpack.c.l.b16 %v292
    %v1841 = vunpack.c.h.b16 %v292
    %v1842 = vunpack.c.l.b16 %v293
    %v1843 = vunpack.c.h.b16 %v293
    %v1844 = vunpack.c.l.b16 %v294
    %v1845 = vunpack.c.h.b16 %v294
    %v1846 = vunpack.c.l.b16 %v295
    %v1847 = vunpack.c.h.b16 %v295
    %v1848 = vunpack.c.l.b16 %v296
    %v1849 = vunpack.c.h.b16 %v296
    %v1850 = vunpack.c.l.b16 %v297
    %v1851 = vunpack.c.h.b16 %v297
    %v1852 = vunpack.c.l.b16 %v298
    %v1853 = vunpack.c.h.b16 %v298
    %v1854 = vunpack.c.l.b16 %v299
    %v1855 = vunpack.c.h.b16 %v299
    %v1856 = vunpack.c.l.b16 %v300
    %v1857 = vunpack.c.h.b16 %v300
    %v1858 = vunpack.c.l.b16 %v301
    %v1859 = vunpack.c.h.b16 %v301
    %v1860 = vunpack.c.l.b16 %v302
    %v1861 = vunpack.c.h.b16 %v302
    %v1862 = vunpack.c.l.b16 %v303
    %v1863 = vunpack.c.h.b16 %v303
    %v1864 = vunpack.c.l.b16 %v304
    %v1865 = vunpack.c.h.b16 %v304
    %v1866 = vunpack.c.l.b16 %v305
    %v1867 = vunpack.c.h.b16 %v305
    %v1868 = vunpack.c.l.b16 %v306
    %v1869 = vunpack.c.h.b16 %v306
    %v1870 = vunpack.c.l.b16 %v307
    %v1871 = vunpack.c.h.b16 %v307
    %v1872 = vunpack.c.l.b16 %v308
    %v1873 = vunpack.c.h.b16 %v308
    %v1874 = vunpack.c.l.b16 %v309
    %v1875 = vunpack.c.h.b16 %v309
    %v1876 = vunpack.c.l.b16 %v310
    %v1877 = vunpack.c.h.b16 %v310
    %v1878 = vunpack.c.l.b16 %v311
    %v1879 = vunpack.c.h.b16 %v311
    %v1880 = vunpack.c.l.b16 %v312
    %v1881 = vunpack.c.h.b16 %v312
    %v1882 = vunpack.c.l.b16 %v313
    %v1883 = vunpack.c.h.b16 %v313
    %v1884 = vunpack.c.l.b16 %v314
    %v1885 = vunpack.c.h.b16 %v314
    %v1886 = vunpack.c.l.b16 %v315
    %v1887 = vunpack.c.h.b16 %v315
    %v1888 = vunpack.c.l.b16 %v316
    %v1889 = vunpack.c.h.b16 %v316
    %v1890 = vunpack.c.l.b16 %v317
    %v1891 = vunpack.c.h.b16 %v317
    %v1892 = vunpack.c.l.b16 %v318
    %v1893 = vunpack.c.h.b16 %v318
    %v1894 = vunpack.c.l.b16 %v319
    %v1895 = vunpack.c.h.b16 %v319
    %v1896 = vunpack.c.l.b16 %v320
    %v1897 = vunpack.c.h.b16 %v320
    %v1898 = vunpack.c.l.b16 %v321
    %v1899 = vunpack.c.h.b16 %v321
    %v1900 = vunpack.c.l.b16 %v322
    %v1901 = vunpack.c.h.b16 %v322
    %v1902 = vunpack.c.l.b16 %v323
    %v1903 = vunpack.c.h.b16 %v323
    %v1904 = vunpack.c.l.b16 %v324
    %v1905 = vunpack.c.h.b16 %v324
    %v1906 = vunpack.c.l.b16 %v325
    %v1907 = vunpack.c.h.b16 %v325
    %v1908 = vunpack.c.l.b16 %v326
    %v1909 = vunpack.c.h.b16 %v326
    %v1910 = vunpack.c.l.b16 %v327
    %v1911 = vunpack.c.h.b16 %v327
    %v1912 = vunpack.c.l.b16 %v328
    %v1913 = vunpack.c.h.b16 %v328
    %v1914 = vunpack.c.l.b16 %v329
    %v1915 = vunpack.c.h.b16 %v329
    %v1916 = vunpack.c.l.b16 %v330
    %v1917 = vunpack.c.h.b16 %v330
    %v1918 = vunpack.c.l.b16 %v331
    %v1919 = vunpack.c.h.b16 %v331
    %v1920 = vunpack.c.l.b16 %v332
    %v1921 = vunpack.c.h.b16 %v332
    %v1922 = vunpack.c.l.b16 %v333
    %v1923 = vunpack.c.h.b16 %v333
    %v1924 = vunpack.c.l.b16 %v334
    %v1925 = vunpack.c.h.b16 %v334
    %v1926 = vunpack.c.l.b16 %v335
    %v1927 = vunpack.c.h.b16 %v335
    %v1928 = vunpack.c.l.b16 %v336
    %v1929 = vunpack.c.h.b16 %v336
    %v1930 = vunpack.c.l.b16 %v337
    %v1931 = vunpack.c.h.b16 %v337
    %v1932 = vunpack.c.l.b16 %v338
    %v1933 = vunpack.c.h.b16 %v338
    %v1934 = vunpack.c.l.b16 %v339
    %v1935 = vunpack.c.h.b16 %v339
    %v1936 = vunpack.c.l.b16 %v340
    %v1937 = vunpack.c.h.b16 %v340
    %v1938 = vunpack.c.l.b16 %v341
    %v1939 = vunpack.c.h.b16 %v341
    %v1940 = vunpack.c.l.b16 %v342
    %v1941 = vunpack.c.h.b16 %v342
    %v1942 = vunpack.c.l.b16 %v343
    %v1943 = vunpack.c.h.b16 %v343
    %v1944 = vunpack.c.l.b16 %v344
    %v1945 = vunpack.c.h.b16 %v344
    %v1946 = vunpack.c.l.b16 %v345
    %v1947 = vunpack.c.h.b16 %v345
    %v1948 = vunpack.c.l.b16 %v346
    %v1949 = vunpack.c.h.b16 %v346
    %v1950 = vunpack.c.l.b16 %v347
    %v1951 = vunpack.c.h.b16 %v347
    %v1952 = vunpack.c.l.b16 %v348
    %v1953 = vunpack.c.h.b16 %v348
    %v1954 = vunpack.c.l.b16 %v349
    %v1955 = vunpack.c.h.b16 %v349
    %v1956 = vunpack.c.l.b16 %v350
    %v1957 = vunpack.c.h.b16 %v350
    %v1958 = vunpack.c.l.b16 %v351
    %v1959 = vunpack.c.h.b16 %v351
    %v1960 = vunpack.c.l.b16 %v352
    %v1961 = vunpack.c.h.b16 %v352
    %v1962 = vunpack.c.l.b16 %v353
    %v1963 = vunpack.c.h.b16 %v353
    %v1964 = vunpack.c.l.b16 %v354
    %v1965 = vunpack.c.h.b16 %v354
    %v1966 = vunpack.c.l.b16 %v355
    %v1967 = vunpack.c.h.b16 %v355
    %v1968 = vunpack.c.l.b16 %v356
    %v1969 = vunpack.c.h.b16 %v356
    %v1970 = vunpack.c.l.b16 %v357
    %v1971 = vunpack.c.h.b16 %v357
    %v1972 = vunpack.c.l.b16 %v358
    %v1973 = vunpack.c.h.b16 %v358
    %v1974 = vunpack.c.l.b16 %v359
    %v1975 = vunpack.c.h.b16 %v359
    %v1976 = vunpack.c.l.b16 %v360
    %v1977 = vunpack.c.h.b16 %v360
    %v1978 = vunpack.c.l.b16 %v361
    %v1979 = vunpack.c.h.b16 %v361
    %v1980 = vunpack.c.l.b16 %v362
    %v1981 = vunpack.c.h.b16 %v362
    %v1982 = vunpack.c.l.b16 %v363
    %v1983 = vunpack.c.h.b16 %v363
    %v1984 = vunpack.c.l.b16 %v364
    %v1985 = vunpack.c.h.b16 %v364
    %v1986 = vunpack.c.l.b16 %v365
    %v1987 = vunpack.c.h.b16 %v365
    %v1988 = vunpack.c.l.b16 %v366
    %v1989 = vunpack.c.h.b16 %v366
    %v1990 = vunpack.c.l.b16 %v367
    %v1991 = vunpack.c.h.b16 %v367
    %v1992 = vunpack.c.l.b16 %v368
    %v1993 = vunpack.c.h.b16 %v368
    %v1994 = vunpack.c.l.b16 %v369
    %v1995 = vunpack.c.h.b16 %v369
    %v1996 = vunpack.c.l.b16 %v370
    %v1997 = vunpack.c.h.b16 %v370
    %v1998 = vunpack.c.l.b16 %v371
    %v1999 = vunpack.c.h.b16 %v371
    %v2000 = vunpack.c.l.b16 %v372
    %v2001 = vunpack.c.h.b16 %v372
    %v2002 = vunpack.c.l.b16 %v373
    %v2003 = vunpack.c.h.b16 %v373
    %v2004 = vunpack.c.l.b16 %v374
    %v2005 = vunpack.c.h.b16 %v374
    %v2006 = vunpack.c.l.b16 %v375
    %v2007 = vunpack.c.h.b16 %v375
    %v2008 = vunpack.c.l.b16 %v376
    %v2009 = vunpack.c.h.b16 %v376
    %v2010 = vunpack.c.l.b16 %v377
    %v2011 = vunpack.c.h.b16 %v377
    %v2012 = vunpack.c.l.b16 %v378
    %v2013 = vunpack.c.h.b16 %v378
    %v2014 = vunpack.c.l.b16 %v379
    %v2015 = vunpack.c.h.b16 %v379
    %v2016 = vunpack.c.l.b16 %v380
    %v2017 = vunpack.c.h.b16 %v380
    %v2018 = vunpack.c.l.b16 %v381
    %v2019 = vunpack.c.h.b16 %v381
    %v2020 = vunpack.c.l.b16 %v382
    %v2021 = vunpack.c.h.b16 %v382
    %v2022 = vunpack.c.l.b16 %v383
    %v2023 = vunpack.c.h.b16 %v383
    %v2024 = vunpack.c.l.b16 %v384
    %v2025 = vunpack.c.h.b16 %v384
    %v2026 = vunpack.c.l.b16 %v385
    %v2027 = vunpack.c.h.b16 %v385
    %v2028 = vunpack.c.l.b16 %v386
    %v2029 = vunpack.c.h.b16 %v386
    %v2030 = vunpack.c.l.b16 %v387
    %v2031 = vunpack.c.h.b16 %v387
    %v2032 = vunpack.c.l.b16 %v388
    %v2033 = vunpack.c.h.b16 %v388
    %v2034 = vunpack.c.l.b16 %v389
    %v2035 = vunpack.c.h.b16 %v389
    %v2036 = vunpack.c.l.b16 %v390
    %v2037 = vunpack.c.h.b16 %v390
    %v2038 = vunpack.c.l.b16 %v391
    %v2039 = vunpack.c.h.b16 %v391
    %v2040 = vunpack.c.l.b16 %v392
    %v2041 = vunpack.c.h.b16 %v392
    %v2042 = vunpack.c.l.b16 %v393
    %v2043 = vunpack.c.h.b16 %v393
    %v2044 = vunpack.c.l.b16 %v394
    %v2045 = vunpack.c.h.b16 %v394
    %v2046 = vunpack.c.l.b16 %v395
    %v2047 = vunpack.c.h.b16 %v395
    %v2048 = vunpack.c.l.b16 %v396
    %v2049 = vunpack.c.h.b16 %v396
    %v2050 = vunpack.c.l.b16 %v397
    %v2051 = vunpack.c.h.b16 %v397
    %v2052 = vunpack.c.l.b16 %v398
    %v2053 = vunpack.c.h.b16 %v398
    %v2054 = vunpack.c.l.b16 %v399
    %v2055 = vunpack.c.h.b16 %v399
    %v2056 = vunpack.c.l.b16 %v400
    %v2057 = vunpack.c.h.b16 %v400
    %v2058 = vunpack.c.l.b16 %v401
    %v2059 = vunpack.c.h.b16 %v401
    %v2060 = vunpack.c.l.b16 %v402
    %v2061 = vunpack.c.h.b16 %v402
    %v2062 = vunpack.c.l.b16 %v403
    %v2063 = vunpack.c.h.b16 %v403
    %v2064 = vunpack.c.l.b16 %v404
    %v2065 = vunpack.c.h.b16 %v404
    %v2066 = vunpack.c.l.b16 %v405
    %v2067 = vunpack.c.h.b16 %v405
    %v2068 = vunpack.c.l.b16 %v406
    %v2069 = vunpack.c.h.b16 %v406
    %v2070 = vunpack.c.l.b16 %v407
    %v2071 = vunpack.c.h.b16 %v407
    %v2072 = vunpack.c.l.b16 %v408
    %v2073 = vunpack.c.h.b16 %v408
    %v2074 = vunpack.c.l.b16 %v409
    %v2075 = vunpack.c.h.b16 %v409
    %v2076 = vunpack.c.l.b16 %v410
    %v2077 = vunpack.c.h.b16 %v410
    %v2078 = vunpack.c.l.b16 %v411
    %v2079 = vunpack.c.h.b16 %v411
    %v2080 = vunpack.c.l.b16 %v412
    %v2081 = vunpack.c.h.b16 %v412
    %v2082 = vunpack.c.l.b16 %v413
    %v2083 = vunpack.c.h.b16 %v413
    %v2084 = vunpack.c.l.b16 %v414
    %v2085 = vunpack.c.h.b16 %v414
    %v2086 = vunpack.c.l.b16 %v415
    %v2087 = vunpack.c.h.b16 %v415
    %v2088 = vunpack.c.l.b16 %v416
    %v2089 = vunpack.c.h.b16 %v416
    %v2090 = vunpack.c.l.b16 %v417
    %v2091 = vunpack.c.h.b16 %v417
    %v2092 = vunpack.c.l.b16 %v418
    %v2093 = vunpack.c.h.b16 %v418
    %v2094 = vunpack.c.l.b16 %v419
    %v2095 = vunpack.c.h.b16 %v419
    %v2096 = vunpack.c.l.b16 %v420
    %v2097 = vunpack.c.h.b16 %v420
    %v2098 = vunpack.c.l.b16 %v421
    %v2099 = vunpack.c.h.b16 %v421
    %v2100 = vunpack.c.l.b16 %v422
    %v2101 = vunpack.c.h.b16 %v422
    %v2102 = vunpack.c.l.b16 %v423
    %v2103 = vunpack.c.h.b16 %v423
    %v2104 = vunpack.c.l.b16 %v424
    %v2105 = vunpack.c.h.b16 %v424
    %v2106 = vunpack.c.l.b16 %v425
    %v2107 = vunpack.c.h.b16 %v425
    %v2108 = vunpack.c.l.b16 %v426
    %v2109 = vunpack.c.h.b16 %v426
    %v2110 = vunpack.c.l.b16 %v427
    %v2111 = vunpack.c.h.b16 %v427
    %v2112 = vunpack.c.l.b16 %v428
    %v2113 = vunpack.c.h.b16 %v428
    %v2114 = vunpack.c.l.b16 %v429
    %v2115 = vunpack.c.h.b16 %v429
    %v2116 = vunpack.c.l.b16 %v430
    %v2117 = vunpack.c.h.b16 %v430
    %v2118 = vunpack.c.l.b16 %v431
    %v2119 = vunpack.c.h.b16 %v431
    %v2120 = vunpack.c.l.b16 %v432
    %v2121 = vunpack.c.h.b16 %v432
    %v2122 = vunpack.c.l.b16 %v433
    %v2123 = vunpack.c.h.b16 %v433
    %v2124 = vunpack.c.l.b16 %v434
    %v2125 = vunpack.c.h.b16 %v434
    %v2126 = vunpack.c.l.b16 %v435
    %v2127 = vunpack.c.h.b16 %v435
    %v2128 = vunpack.c.l.b16 %v436
    %v2129 = vunpack.c.h.b16 %v436
    %v2130 = vunpack.c.l.b16 %v437
    %v2131 = vunpack.c.h.b16 %v437
    %v2132 = vunpack.c.l.b16 %v438
    %v2133 = vunpack.c.h.b16 %v438
    %v2134 = vunpack.c.l.b16 %v439
    %v2135 = vunpack.c.h.b16 %v439
    %v2136 = vunpack.c.l.b16 %v440
    %v2137 = vunpack.c.h.b16 %v440
    %v2138 = vunpack.c.l.b16 %v441
    %v2139 = vunpack.c.h.b16 %v441
    %v2140 = vunpack.c.l.b16 %v442
    %v2141 = vunpack.c.h.b16 %v442
    %v2142 = vunpack.c.l.b16 %v443
    %v2143 = vunpack.c.h.b16 %v443
    %v2144 = vunpack.c.l.b16 %v444
    %v2145 = vunpack.c.h.b16 %v444
    %v2146 = vunpack.c.l.b16 %v445
    %v2147 = vunpack.c.h.b16 %v445
    %v2148 = vunpack.c.l.b16 %v446
    %v2149 = vunpack.c.h.b16 %v446
    %v2150 = vunpack.c.l.b16 %v447
    %v2151 = vunpack.c.h.b16 %v447
    %v2152 = vunpack.c.l.b16 %v448
    %v2153 = vunpack.c.h.b16 %v448
    %v2154 = vunpack.c.l.b16 %v449
    %v2155 = vunpack.c.h.b16 %v449
    %v2156 = vunpack.c.l.b16 %v450
    %v2157 = vunpack.c.h.b16 %v450
    %v2158 = vunpack.c.l.b16 %v451
    %v2159 = vunpack.c.h.b16 %v451
    %v2160 = vunpack.c.l.b16 %v452
    %v2161 = vunpack.c.h.b16 %v452
    %v2162 = vunpack.c.l.b16 %v453
    %v2163 = vunpack.c.h.b16 %v453
    %v2164 = vunpack.c.l.b16 %v454
    %v2165 = vunpack.c.h.b16 %v454
    %v2166 = vunpack.c.l.b16 %v455
    %v2167 = vunpack.c.h.b16 %v455
    %v2168 = vunpack.c.l.b16 %v456
    %v2169 = vunpack.c.h.b16 %v456
    %v2170 = vunpack.c.l.b16 %v457
    %v2171 = vunpack.c.h.b16 %v457
    %v2172 = vunpack.c.l.b16 %v458
    %v2173 = vunpack.c.h.b16 %v458
    %v2174 = vunpack.c.l.b16 %v459
    %v2175 = vunpack.c.h.b16 %v459
    %v2176 = vunpack.c.l.b16 %v460
    %v2177 = vunpack.c.h.b16 %v460
    %v2178 = vunpack.c.l.b16 %v461
    %v2179 = vunpack.c.h.b16 %v461
    %v2180 = vunpack.c.l.b16 %v462
    %v2181 = vunpack.c.h.b16 %v462
    %v2182 = vunpack.c.l.b16 %v463
    %v2183 = vunpack.c.h.b16 %v463
    %v2184 = vunpack.c.l.b16 %v464
    %v2185 = vunpack.c.h.b16 %v464
    %v2186 = vunpack.c.l.b16 %v465
    %v2187 = vunpack.c.h.b16 %v465
    %v2188 = vunpack.c.l.b16 %v466
    %v2189 = vunpack.c.h.b16 %v466
    %v2190 = vunpack.c.l.b16 %v467
    %v2191 = vunpack.c.h.b16 %v467
    %v2192 = vunpack.c.l.b16 %v468
    %v2193 = vunpack.c.h.b16 %v468
    %v2194 = vunpack.c.l.b16 %v469
    %v2195 = vunpack.c.h.b16 %v469
    %v2196 = vunpack.c.l.b16 %v470
    %v2197 = vunpack.c.h.b16 %v470
    %v2198 = vunpack.c.l.b16 %v471
    %v2199 = vunpack.c.h.b16 %v471
    %v2200 = vunpack.c.l.b16 %v472
    %v2201 = vunpack.c.h.b16 %v472
    %v2202 = vunpack.c.l.b16 %v473
    %v2203 = vunpack.c.h.b16 %v473
    %v2204 = vunpack.c.l.b16 %v474
    %v2205 = vunpack.c.h.b16 %v474
    %v2206 = vunpack.c.l.b16 %v475
    %v2207 = vunpack.c.h.b16 %v475
    %v2208 = vunpack.c.l.b16 %v476
    %v2209 = vunpack.c.h.b16 %v476
    %v2210 = vunpack.c.l.b16 %v477
    %v2211 = vunpack.c.h.b16 %v477
    %v2212 = vunpack.c.l.b16 %v478
    %v2213 = vunpack.c.h.b16 %v478
    %v2214 = vunpack.c.l.b16 %v479
    %v2215 = vunpack.c.h.b16 %v479
    %v2216 = vunpack.c.l.b16 %v480
    %v2217 = vunpack.c.h.b16 %v480
    %v2218 = vunpack.c.l.b16 %v481
    %v2219 = vunpack.c.h.b16 %v481
    %v2220 = vunpack.c.l.b16 %v482
    %v2221 = vunpack.c.h.b16 %v482
    %v2222 = vunpack.c.l.b16 %v483
    %v2223 = vunpack.c.h.b16 %v483
    %v2224 = vunpack.c.l.b16 %v484
    %v2225 = vunpack.c.h.b16 %v484
    %v2226 = vunpack.c.l.b16 %v485
    %v2227 = vunpack.c.h.b16 %v485
    %v2228 = vunpack.c.l.b16 %v486
    %v2229 = vunpack.c.h.b16 %v486
    %v2230 = vunpack.c.l.b16 %v487
    %v2231 = vunpack.c.h.b16 %v487
    %v2232 = vunpack.c.l.b16 %v488
    %v2233 = vunpack.c.h.b16 %v488
    %v2234 = vunpack.c.l.b16 %v489
    %v2235 = vunpack.c.h.b16 %v489
    %v2236 = vunpack.c.l.b16 %v490
    %v2237 = vunpack.c.h.b16 %v490
    %v2238 = vunpack.c.l.b16 %v491
    %v2239 = vunpack.c.h.b16 %v491
    %v2240 = vunpack.c.l.b16 %v492
    %v2241 = vunpack.c.h.b16 %v492
    %v2242 = vunpack.c.l.b16 %v493
    %v2243 = vunpack.c.h.b16 %v493
    %v2244 = vunpack.c.l.b16 %v494
    %v2245 = vunpack.c.h.b16 %v494
    %v2246 = vunpack.c.l.b16 %v495
    %v2247 = vunpack.c.h.b16 %v495
    %v2248 = vunpack.c.l.b16 %v496
    %v2249 = vunpack.c.h.b16 %v496
    %v2250 = vunpack.c.l.b16 %v497
    %v2251 = vunpack.c.h.b16 %v497
    %v2252 = vunpack.c.l.b16 %v498
    %v2253 = vunpack.c.h.b16 %v498
    %v2254 = vunpack.c.l.b16 %v499
    %v2255 = vunpack.c.h.b16 %v499
    %v2256 = vunpack.c.l.b16 %v500
    %v2257 = vunpack.c.h.b16 %v500
    %v2258 = vunpack.c.l.b16 %v501
    %v2259 = vunpack.c.h.b16 %v501
    %v2260 = vunpack.c.l.b16 %v502
    %v2261 = vunpack.c.h.b16 %v502
    %v2262 = vunpack.c.l.b16 %v503
    %v2263 = vunpack.c.h.b16 %v503
    %v2264 = vunpack.c.l.b16 %v504
    %v2265 = vunpack.c.h.b16 %v504
    %v2266 = vunpack.c.l.b16 %v505
    %v2267 = vunpack.c.h.b16 %v505
    %v2268 = vunpack.c.l.b16 %v506
    %v2269 = vunpack.c.h.b16 %v506
    %v2270 = vunpack.c.l.b16 %v507
    %v2271 = vunpack.c.h.b16 %v507
    %v2272 = vunpack.c.l.b16 %v508
    %v2273 = vunpack.c.h.b16 %v508
    %v2274 = vunpack.c.l.b16 %v509
    %v2275 = vunpack.c.h.b16 %v509
    %v2276 = vunpack.c.l.b16 %v510
    %v2277 = vunpack.c.h.b16 %v510
    %v2278 = vunpack.c.l.b16 %v511
    %v2279 = vunpack.c.h.b16 %v511
    %v2280 = vunpack.c.l.b16 %v512
    %v2281 = vunpack.c.h.b16 %v512
    %v2282 = vunpack.c.l.b16 %v513
    %v2283 = vunpack.c.h.b16 %v513
    %v2284 = vunpack.c.l.b16 %v514
    %v2285 = vunpack.c.h.b16 %v514
    %v2286 = vunpack.c.l.b16 %v515
    %v2287 = vunpack.c.h.b16 %v515
    %v2288 = vunpack.c.l.b16 %v516
    %v2289 = vunpack.c.h.b16 %v516
    %v2290 = vunpack.c.l.b16 %v517
    %v2291 = vunpack.c.h.b16 %v517
    %v2292 = vunpack.c.l.b16 %v518
    %v2293 = vunpack.c.h.b16 %v518
    %v2294 = vunpack.c.l.b16 %v519
    %v2295 = vunpack.c.h.b16 %v519
    %v2296 = vunpack.c.l.b16 %v520
    %v2297 = vunpack.c.h.b16 %v520
    %v2298 = vunpack.c.l.b16 %v521
    %v2299 = vunpack.c.h.b16 %v521
    %v2300 = vunpack.c.l.b16 %v522
    %v2301 = vunpack.c.h.b16 %v522
    %v2302 = vunpack.c.l.b16 %v523
    %v2303 = vunpack.c.h.b16 %v523
    %v2304 = vunpack.c.l.b16 %v524
    %v2305 = vunpack.c.h.b16 %v524
    %v2306 = vunpack.c.l.b16 %v525
    %v2307 = vunpack.c.h.b16 %v525
    %v2308 = vunpack.c.l.b16 %v526
    %v2309 = vunpack.c.h.b16 %v526
    %v2310 = vunpack.c.l.b16 %v527
    %v2311 = vunpack.c.h.b16 %v527
    %v2312 = vunpack.c.l.b16 %v528
    %v2313 = vunpack.c.h.b16 %v528
    %v2314 = vunpack.c.l.b16 %v529
    %v2315 = vunpack.c.h.b16 %v529
    %v2316 = vunpack.c.l.b16 %v530
    %v2317 = vunpack.c.h.b16 %v530
    %v2318 = vunpack.c.l.b16 %v531
    %v2319 = vunpack.c.h.b16 %v531
    %v2320 = vunpack.c.l.b16 %v532
    %v2321 = vunpack.c.h.b16 %v532
    %v2322 = vunpack.c.l.b16 %v533
    %v2323 = vunpack.c.h.b16 %v533
    %v2324 = vunpack.c.l.b16 %v534
    %v2325 = vunpack.c.h.b16 %v534
    %v2326 = vunpack.c.l.b16 %v535
    %v2327 = vunpack.c.h.b16 %v535
    %v2328 = vunpack.c.l.b16 %v536
    %v2329 = vunpack.c.h.b16 %v536
    %v2330 = vunpack.c.l.b16 %v537
    %v2331 = vunpack.c.h.b16 %v537
    %v2332 = vunpack.c.l.b16 %v538
    %v2333 = vunpack.c.h.b16 %v538
    %v2334 = vunpack.c.l.b16 %v539
    %v2335 = vunpack.c.h.b16 %v539
    %v2336 = vunpack.c.l.b16 %v540
    %v2337 = vunpack.c.h.b16 %v540
    %v2338 = vunpack.c.l.b16 %v541
    %v2339 = vunpack.c.h.b16 %v541
    %v2340 = vunpack.c.l.b16 %v542
    %v2341 = vunpack.c.h.b16 %v542
    %v2342 = vunpack.c.l.b16 %v543
    %v2343 = vunpack.c.h.b16 %v543
    %v2344 = vunpack.c.l.b16 %v544
    %v2345 = vunpack.c.h.b16 %v544
    %v2346 = vunpack.c.l.b16 %v545
    %v2347 = vunpack.c.h.b16 %v545
    %v2348 = vunpack.c.l.b16 %v546
    %v2349 = vunpack.c.h.b16 %v546
    %v2350 = vunpack.c.l.b16 %v547
    %v2351 = vunpack.c.h.b16 %v547
    %v2352 = vunpack.c.l.b16 %v548
    %v2353 = vunpack.c.h.b16 %v548
    %v2354 = vunpack.c.l.b16 %v549
    %v2355 = vunpack.c.h.b16 %v549
    %v2356 = vunpack.c.l.b16 %v550
    %v2357 = vunpack.c.h.b16 %v550
    %v2358 = vunpack.c.l.b16 %v551
    %v2359 = vunpack.c.h.b16 %v551
    %v2360 = vunpack.c.l.b16 %v552
    %v2361 = vunpack.c.h.b16 %v552
    %v2362 = vunpack.c.l.b16 %v553
    %v2363 = vunpack.c.h.b16 %v553
    %v2364 = vunpack.c.l.b16 %v554
    %v2365 = vunpack.c.h.b16 %v554
    %v2366 = vunpack.c.l.b16 %v555
    %v2367 = vunpack.c.h.b16 %v555
    %v2368 = vunpack.c.l.b16 %v556
    %v2369 = vunpack.c.h.b16 %v556
    %v2370 = vunpack.c.l.b16 %v557
    %v2371 = vunpack.c.h.b16 %v557
    %v2372 = vunpack.c.l.b16 %v558
    %v2373 = vunpack.c.h.b16 %v558
    %v2374 = vunpack.c.l.b16 %v559
    %v2375 = vunpack.c.h.b16 %v559
    %v2376 = vunpack.c.l.b16 %v560
    %v2377 = vunpack.c.h.b16 %v560
    %v2378 = vunpack.c.l.b16 %v561
    %v2379 = vunpack.c.h.b16 %v561
    %v2380 = vunpack.c.l.b16 %v562
    %v2381 = vunpack.c.h.b16 %v562
    %v2382 = vunpack.c.l.b16 %v563
    %v2383 = vunpack.c.h.b16 %v563
    %v2384 = vunpack.c.l.b16 %v564
    %v2385 = vunpack.c.h.b16 %v564
    %v2386 = vunpack.c.l.b16 %v565
    %v2387 = vunpack.c.h.b16 %v565
    %v2388 = vunpack.c.l.b16 %v566
    %v2389 = vunpack.c.h.b16 %v566
    %v2390 = vunpack.c.l.b16 %v567
    %v2391 = vunpack.c.h.b16 %v567
    %v2392 = vunpack.c.l.b16 %v568
    %v2393 = vunpack.c.h.b16 %v568
    %v2394 = vunpack.c.l.b16 %v569
    %v2395 = vunpack.c.h.b16 %v569
    %v2396 = vunpack.c.l.b16 %v570
    %v2397 = vunpack.c.h.b16 %v570
    %v2398 = vunpack.c.l.b16 %v571
    %v2399 = vunpack.c.h.b16 %v571
    %v2400 = vunpack.c.l.b16 %v572
    %v2401 = vunpack.c.h.b16 %v572
    %v2402 = vunpack.c.l.b16 %v573
    %v2403 = vunpack.c.h.b16 %v573
    %v2404 = vunpack.c.l.b16 %v574
    %v2405 = vunpack.c.h.b16 %v574
    %v2406 = vunpack.c.l.b16 %v575
    %v2407 = vunpack.c.h.b16 %v575
    %v2408 = vunpack.c.l.b16 %v576
    %v2409 = vunpack.c.h.b16 %v576
    %v2410 = vunpack.c.l.b16 %v577
    %v2411 = vunpack.c.h.b16 %v577
    %v2412 = vunpack.c.l.b16 %v578
    %v2413 = vunpack.c.h.b16 %v578
    %v2414 = vunpack.c.l.b16 %v579
    %v2415 = vunpack.c.h.b16 %v579
    %v2416 = vunpack.c.l.b16 %v580
    %v2417 = vunpack.c.h.b16 %v580
    %v2418 = vunpack.c.l.b16 %v581
    %v2419 = vunpack.c.h.b16 %v581
    %v2420 = vunpack.c.l.b16 %v582
    %v2421 = vunpack.c.h.b16 %v582
    %v2422 = vunpack.c.l.b16 %v583
    %v2423 = vunpack.c.h.b16 %v583
    %v2424 = vunpack.c.l.b16 %v584
    %v2425 = vunpack.c.h.b16 %v584
    %v2426 = vunpack.c.l.b16 %v585
    %v2427 = vunpack.c.h.b16 %v585
    %v2428 = vunpack.c.l.b16 %v586
    %v2429 = vunpack.c.h.b16 %v586
    %v2430 = vunpack.c.l.b16 %v587
    %v2431 = vunpack.c.h.b16 %v587
    %v2432 = vunpack.c.l.b16 %v588
    %v2433 = vunpack.c.h.b16 %v588
    %v2434 = vunpack.c.l.b16 %v589
    %v2435 = vunpack.c.h.b16 %v589
    %v2436 = vunpack.c.l.b16 %v590
    %v2437 = vunpack.c.h.b16 %v590
    %v2438 = vunpack.c.l.b16 %v591
    %v2439 = vunpack.c.h.b16 %v591
    %v2440 = vunpack.c.l.b16 %v592
    %v2441 = vunpack.c.h.b16 %v592
    %v2442 = vunpack.c.l.b16 %v593
    %v2443 = vunpack.c.h.b16 %v593
    %v2444 = vunpack.c.l.b16 %v594
    %v2445 = vunpack.c.h.b16 %v594
    %v2446 = vunpack.c.l.b16 %v595
    %v2447 = vunpack.c.h.b16 %v595
    %v2448 = vunpack.c.l.b16 %v596
    %v2449 = vunpack.c.h.b16 %v596
    %v2450 = vunpack.c.l.b16 %v597
    %v2451 = vunpack.c.h.b16 %v597
    %v2452 = vunpack.c.l.b16 %v598
    %v2453 = vunpack.c.h.b16 %v598
    %v2454 = vunpack.c.l.b16 %v599
    %v2455 = vunpack.c.h.b16 %v599
    %v2456 = vunpack.c.l.b16 %v600
    %v2457 = vunpack.c.h.b16 %v600
    %v2458 = vunpack.c.l.b16 %v601
    %v2459 = vunpack.c.h.b16 %v601
    %v2460 = vunpack.c.l.b16 %v602
    %v2461 = vunpack.c.h.b16 %v602
    %v2462 = vunpack.c.l.b16 %v603
    %v2463 = vunpack.c.h.b16 %v603
    %v2464 = vunpack.c.l.b16 %v604
    %v2465 = vunpack.c.h.b16 %v604
    %v2466 = vunpack.c.l.b16 %v605
    %v2467 = vunpack.c.h.b16 %v605
    %v2468 = vunpack.c.l.b16 %v606
    %v2469 = vunpack.c.h.b16 %v606
    %v2470 = vunpack.c.l.b16 %v607
    %v2471 = vunpack.c.h.b16 %v607
    %v2472 = vunpack.c.l.b16 %v608
    %v2473 = vunpack.c.h.b16 %v608
    %v2474 = vunpack.c.l.b16 %v609
    %v2475 = vunpack.c.h.b16 %v609
    %v2476 = vunpack.c.l.b16 %v610
    %v2477 = vunpack.c.h.b16 %v610
    %v2478 = vunpack.c.l.b16 %v611
    %v2479 = vunpack.c.h.b16 %v611
    %v2480 = vunpack.c.l.b16 %v612
    %v2481 = vunpack.c.h.b16 %v612
    %v2482 = vunpack.c.l.b16 %v613
    %v2483 = vunpack.c.h.b16 %v613
    %v2484 = vunpack.c.l.b16 %v614
    %v2485 = vunpack.c.h.b16 %v614
    %v2486 = vunpack.c.l.b16 %v615
    %v2487 = vunpack.c.h.b16 %v615
    %v2488 = vunpack.c.l.b16 %v616
    %v2489 = vunpack.c.h.b16 %v616
    %v2490 = vunpack.c.l.b16 %v617
    %v2491 = vunpack.c.h.b16 %v617
    %v2492 = vunpack.c.l.b16 %v618
    %v2493 = vunpack.c.h.b16 %v618
    %v2494 = vunpack.c.l.b16 %v619
    %v2495 = vunpack.c.h.b16 %v619
    %v2496 = vunpack.c.l.b16 %v620
    %v2497 = vunpack.c.h.b16 %v620
    %v2498 = vunpack.c.l.b16 %v621
    %v2499 = vunpack.c.h.b16 %v621
    %v2500 = vunpack.c.l.b16 %v622
    %v2501 = vunpack.c.h.b16 %v622
    %v2502 = vunpack.c.l.b16 %v623
    %v2503 = vunpack.c.h.b16 %v623
    %v2504 = vunpack.c.l.b16 %v624
    %v2505 = vunpack.c.h.b16 %v624
    %v2506 = vunpack.c.l.b16 %v625
    %v2507 = vunpack.c.h.b16 %v625
    %v2508 = vunpack.c.l.b16 %v626
    %v2509 = vunpack.c.h.b16 %v626
    %v2510 = vunpack.c.l.b16 %v627
    %v2511 = vunpack.c.h.b16 %v627
    %v2512 = vunpack.c.l.b16 %v628
    %v2513 = vunpack.c.h.b16 %v628
    %v2514 = vunpack.c.l.b16 %v629
    %v2515 = vunpack.c.h.b16 %v629
    %v2516 = vunpack.c.l.b16 %v630
    %v2517 = vunpack.c.h.b16 %v630
    %v2518 = vunpack.c.l.b16 %v631
    %v2519 = vunpack.c.h.b16 %v631
    %v2520 = vunpack.c.l.b16 %v632
    %v2521 = vunpack.c.h.b16 %v632
    %v2522 = vunpack.c.l.b16 %v633
    %v2523 = vunpack.c.h.b16 %v633
    %v2524 = vunpack.c.l.b16 %v634
    %v2525 = vunpack.c.h.b16 %v634
    %v2526 = vunpack.c.l.b16 %v635
    %v2527 = vunpack.c.h.b16 %v635
    %v2528 = vunpack.c.l.b16 %v636
    %v2529 = vunpack.c.h.b16 %v636
    %v2530 = vunpack.c.l.b16 %v637
    %v2531 = vunpack.c.h.b16 %v637
    %v2532 = vunpack.c.l.b16 %v638
    %v2533 = vunpack.c.h.b16 %v638
    %v2534 = vunpack.c.l.b16 %v639
    %v2535 = vunpack.c.h.b16 %v639
    %v2536 = vunpack.c.l.b16 %v640
    %v2537 = vunpack.c.h.b16 %v640
    %v2538 = vunpack.c.l.b16 %v641
    %v2539 = vunpack.c.h.b16 %v641
    %v2540 = vunpack.c.l.b16 %v642
    %v2541 = vunpack.c.h.b16 %v642
    %v2542 = vunpack.c.l.b16 %v643
    %v2543 = vunpack.c.h.b16 %v643
    %v2544 = vunpack.c.l.b16 %v644
    %v2545 = vunpack.c.h.b16 %v644
    %v2546 = vunpack.c.l.b16 %v645
    %v2547 = vunpack.c.h.b16 %v645
    %v2548 = vunpack.c.l.b16 %v646
    %v2549 = vunpack.c.h.b16 %v646
    %v2550 = vunpack.c.l.b16 %v647
    %v2551 = vunpack.c.h.b16 %v647
    %v2552 = vunpack.c.l.b16 %v648
    %v2553 = vunpack.c.h.b16 %v648
    %v2554 = vunpack.c.l.b16 %v649
    %v2555 = vunpack.c.h.b16 %v649
    %v2556 = vunpack.c.l.b16 %v650
    %v2557 = vunpack.c.h.b16 %v650
    %v2558 = vunpack.c.l.b16 %v651
    %v2559 = vunpack.c.h.b16 %v651
    %v2560 = vunpack.c.l.b16 %v652
    %v2561 = vunpack.c.h.b16 %v652
    %v2562 = vunpack.c.l.b16 %v653
    %v2563 = vunpack.c.h.b16 %v653
    %v2564 = vunpack.c.l.b16 %v654
    %v2565 = vunpack.c.h.b16 %v654
    %v2566 = vunpack.c.l.b16 %v655
    %v2567 = vunpack.c.h.b16 %v655
    %v2568 = vunpack.c.l.b16 %v656
    %v2569 = vunpack.c.h.b16 %v656
    %v2570 = vunpack.c.l.b16 %v657
    %v2571 = vunpack.c.h.b16 %v657
    %v2572 = vunpack.c.l.b16 %v658
    %v2573 = vunpack.c.h.b16 %v658
    %v2574 = vunpack.c.l.b16 %v659
    %v2575 = vunpack.c.h.b16 %v659
    %v2576 = vunpack.c.l.b16 %v660
    %v2577 = vunpack.c.h.b16 %v660
    %v2578 = vunpack.c.l.b16 %v661
    %v2579 = vunpack.c.h.b16 %v661
    %v2580 = vunpack.c.l.b16 %v662
    %v2581 = vunpack.c.h.b16 %v662
    %v2582 = vunpack.c.l.b16 %v663
    %v2583 = vunpack.c.h.b16 %v663
    %v2584 = vunpack.c.l.b16 %v664
    %v2585 = vunpack.c.h.b16 %v664
    %v2586 = vunpack.c.l.b16 %v665
    %v2587 = vunpack.c.h.b16 %v665
    %v2588 = vunpack.c.l.b16 %v666
    %v2589 = vunpack.c.h.b16 %v666
    %v2590 = vunpack.c.l.b16 %v667
    %v2591 = vunpack.c.h.b16 %v667
    %v2592 = vunpack.c.l.b16 %v668
    %v2593 = vunpack.c.h.b16 %v668
    %v2594 = vunpack.c.l.b16 %v669
    %v2595 = vunpack.c.h.b16 %v669
    %v2596 = vunpack.c.l.b16 %v670
    %v2597 = vunpack.c.h.b16 %v670
    %v2598 = vunpack.c.l.b16 %v671
    %v2599 = vunpack.c.h.b16 %v671
    %v2600 = vunpack.c.l.b16 %v672
    %v2601 = vunpack.c.h.b16 %v672
    %v2602 = vunpack.c.l.b16 %v673
    %v2603 = vunpack.c.h.b16 %v673
    %v2604 = vunpack.c.l.b16 %v674
    %v2605 = vunpack.c.h.b16 %v674
    %v2606 = vunpack.c.l.b16 %v675
    %v2607 = vunpack.c.h.b16 %v675
    %v2608 = vunpack.c.l.b16 %v676
    %v2609 = vunpack.c.h.b16 %v676
    %v2610 = vunpack.c.l.b16 %v677
    %v2611 = vunpack.c.h.b16 %v677
    %v2612 = vunpack.c.l.b16 %v678
    %v2613 = vunpack.c.h.b16 %v678
    %v2614 = vunpack.c.l.b16 %v679
    %v2615 = vunpack.c.h.b16 %v679
    %v2616 = vunpack.c.l.b16 %v680
    %v2617 = vunpack.c.h.b16 %v680
    %v2618 = vunpack.c.l.b16 %v681
    %v2619 = vunpack.c.h.b16 %v681
    %v2620 = vunpack.c.l.b16 %v682
    %v2621 = vunpack.c.h.b16 %v682
    %v2622 = vunpack.c.l.b16 %v683
    %v2623 = vunpack.c.h.b16 %v683
    %v2624 = vunpack.c.l.b16 %v684
    %v2625 = vunpack.c.h.b16 %v684
    %v2626 = vunpack.c.l.b16 %v685
    %v2627 = vunpack.c.h.b16 %v685
    %v2628 = vunpack.c.l.b16 %v686
    %v2629 = vunpack.c.h.b16 %v686
    %v2630 = vunpack.c.l.b16 %v687
    %v2631 = vunpack.c.h.b16 %v687
    %v2632 = vunpack.c.l.b16 %v688
    %v2633 = vunpack.c.h.b16 %v688
    %v2634 = vunpack.c.l.b16 %v689
    %v2635 = vunpack.c.h.b16 %v689
    %v2636 = vunpack.c.l.b16 %v690
    %v2637 = vunpack.c.h.b16 %v690
    %v2638 = vunpack.c.l.b16 %v691
    %v2639 = vunpack.c.h.b16 %v691
    %v2640 = vunpack.c.l.b16 %v692
    %v2641 = vunpack.c.h.b16 %v692
    %v2642 = vunpack.c.l.b16 %v693
    %v2643 = vunpack.c.h.b16 %v693
    %v2644 = vunpack.c.l.b16 %v694
    %v2645 = vunpack.c.h.b16 %v694
    %v2646 = vunpack.c.l.b16 %v695
    %v2647 = vunpack.c.h.b16 %v695
    %v2648 = vunpack.c.l.b16 %v696
    %v2649 = vunpack.c.h.b16 %v696
    %v2650 = vunpack.c.l.b16 %v697
    %v2651 = vunpack.c.h.b16 %v697
    %v2652 = vunpack.c.l.b16 %v698
    %v2653 = vunpack.c.h.b16 %v698
    %v2654 = vunpack.c.l.b16 %v699
    %v2655 = vunpack.c.h.b16 %v699
    %v2656 = vunpack.c.l.b16 %v700
    %v2657 = vunpack.c.h.b16 %v700
    %v2658 = vunpack.c.l.b16 %v701
    %v2659 = vunpack.c.h.b16 %v701
    %v2660 = vunpack.c.l.b16 %v702
    %v2661 = vunpack.c.h.b16 %v702
    %v2662 = vunpack.c.l.b16 %v703
    %v2663 = vunpack.c.h.b16 %v703
    %v2664 = vunpack.c.l.b16 %v704
    %v2665 = vunpack.c.h.b16 %v704
    %v2666 = vunpack.c.l.b16 %v705
    %v2667 = vunpack.c.h.b16 %v705
    %v2668 = vunpack.c.l.b16 %v706
    %v2669 = vunpack.c.h.b16 %v706
    %v2670 = vunpack.c.l.b16 %v707
    %v2671 = vunpack.c.h.b16 %v707
    %v2672 = vunpack.c.l.b16 %v708
    %v2673 = vunpack.c.h.b16 %v708
    %v2674 = vunpack.c.l.b16 %v709
    %v2675 = vunpack.c.h.b16 %v709
    %v2676 = vunpack.c.l.b16 %v710
    %v2677 = vunpack.c.h.b16 %v710
    %v2678 = vunpack.c.l.b16 %v711
    %v2679 = vunpack.c.h.b16 %v711
    %v2680 = vunpack.c.l.b16 %v712
    %v2681 = vunpack.c.h.b16 %v712
    %v2682 = vunpack.c.l.b16 %v713
    %v2683 = vunpack.c.h.b16 %v713
    %v2684 = vunpack.c.l.b16 %v714
    %v2685 = vunpack.c.h.b16 %v714
    %v2686 = vunpack.c.l.b16 %v715
    %v2687 = vunpack.c.h.b16 %v715
    %v2688 = vunpack.c.l.b16 %v716
    %v2689 = vunpack.c.h.b16 %v716
    %v2690 = vunpack.c.l.b16 %v717
    %v2691 = vunpack.c.h.b16 %v717
    %v2692 = vunpack.c.l.b16 %v718
    %v2693 = vunpack.c.h.b16 %v718
    %v2694 = vunpack.c.l.b16 %v719
    %v2695 = vunpack.c.h.b16 %v719
    %v2696 = vunpack.c.l.b16 %v720
    %v2697 = vunpack.c.h.b16 %v720
    %v2698 = vunpack.c.l.b16 %v721
    %v2699 = vunpack.c.h.b16 %v721
    %v2700 = vunpack.c.l.b16 %v722
    %v2701 = vunpack.c.h.b16 %v722
    %v2702 = vunpack.c.l.b16 %v723
    %v2703 = vunpack.c.h.b16 %v723
    %v2704 = vunpack.c.l.b16 %v724
    %v2705 = vunpack.c.h.b16 %v724
    %v2706 = vunpack.c.l.b16 %v725
    %v2707 = vunpack.c.h.b16 %v725
    %v2708 = vunpack.c.l.b16 %v726
    %v2709 = vunpack.c.h.b16 %v726
    %v2710 = vunpack.c.l.b16 %v727
    %v2711 = vunpack.c.h.b16 %v727
    %v2712 = vunpack.c.l.b16 %v728
    %v2713 = vunpack.c.h.b16 %v728
    %v2714 = vunpack.c.l.b16 %v729
    %v2715 = vunpack.c.h.b16 %v729
    %v2716 = vunpack.c.l.b16 %v730
    %v2717 = vunpack.c.h.b16 %v730
    %v2718 = vunpack.c.l.b16 %v731
    %v2719 = vunpack.c.h.b16 %v731
    %v2720 = vunpack.c.l.b16 %v732
    %v2721 = vunpack.c.h.b16 %v732
    %v2722 = vunpack.c.l.b16 %v733
    %v2723 = vunpack.c.h.b16 %v733
    %v2724 = vunpack.c.l.b16 %v734
    %v2725 = vunpack.c.h.b16 %v734
    %v2726 = vunpack.c.l.b16 %v735
    %v2727 = vunpack.c.h.b16 %v735
    %v2728 = vunpack.c.l.b16 %v736
    %v2729 = vunpack.c.h.b16 %v736
    %v2730 = vunpack.c.l.b16 %v737
    %v2731 = vunpack.c.h.b16 %v737
    %v2732 = vunpack.c.l.b16 %v738
    %v2733 = vunpack.c.h.b16 %v738
    %v2734 = vunpack.c.l.b16 %v739
    %v2735 = vunpack.c.h.b16 %v739
    %v2736 = vunpack.c.l.b16 %v740
    %v2737 = vunpack.c.h.b16 %v740
    %v2738 = vunpack.c.l.b16 %v741
    %v2739 = vunpack.c.h.b16 %v741
    %v2740 = vunpack.c.l.b16 %v742
    %v2741 = vunpack.c.h.b16 %v742
    %v2742 = vunpack.c.l.b16 %v743
    %v2743 = vunpack.c.h.b16 %v743
    %v2744 = vunpack.c.l.b16 %v744
    %v2745 = vunpack.c.h.b16 %v744
    %v2746 = vunpack.c.l.b16 %v745
    %v2747 = vunpack.c.h.b16 %v745
    %v2748 = vunpack.c.l.b16 %v746
    %v2749 = vunpack.c.h.b16 %v746
    %v2750 = vunpack.c.l.b16 %v747
    %v2751 = vunpack.c.h.b16 %v747
    %v2752 = vunpack.c.l.b16 %v748
    %v2753 = vunpack.c.h.b16 %v748
    %v2754 = vunpack.c.l.b16 %v749
    %v2755 = vunpack.c.h.b16 %v749
    %v2756 = vunpack.c.l.b16 %v750
    %v2757 = vunpack.c.h.b16 %v750
    %v2758 = vunpack.c.l.b16 %v751
    %v2759 = vunpack.c.h.b16 %v751
    %v2760 = vunpack.c.l.b16 %v752
    %v2761 = vunpack.c.h.b16 %v752
    %v2762 = vunpack.c.l.b16 %v753
    %v2763 = vunpack.c.h.b16 %v753
    %v2764 = vunpack.c.l.b16 %v754
    %v2765 = vunpack.c.h.b16 %v754
    %v2766 = vunpack.c.l.b16 %v755
    %v2767 = vunpack.c.h.b16 %v755
    %v2768 = vunpack.c.l.b16 %v756
    %v2769 = vunpack.c.h.b16 %v756
    %v2770 = vunpack.c.l.b16 %v757
    %v2771 = vunpack.c.h.b16 %v757
    %v2772 = vunpack.c.l.b16 %v758
    %v2773 = vunpack.c.h.b16 %v758
    %v2774 = vunpack.c.l.b16 %v759
    %v2775 = vunpack.c.h.b16 %v759
    %v2776 = vunpack.c.l.b16 %v760
    %v2777 = vunpack.c.h.b16 %v760
    %v2778 = vunpack.c.l.b16 %v761
    %v2779 = vunpack.c.h.b16 %v761
    %v2780 = vunpack.c.l.b16 %v762
    %v2781 = vunpack.c.h.b16 %v762
    %v2782 = vunpack.c.l.b16 %v763
    %v2783 = vunpack.c.h.b16 %v763
    %v2784 = vunpack.c.l.b16 %v764
    %v2785 = vunpack.c.h.b16 %v764
    %v2786 = vunpack.c.l.b16 %v765
    %v2787 = vunpack.c.h.b16 %v765
    %v2788 = vunpack.c.l.b16 %v766
    %v2789 = vunpack.c.h.b16 %v766
    %v2790 = vunpack.c.l.b16 %v767
    %v2791 = vunpack.c.h.b16 %v767
    %v2792 = vunpack.c.l.b16 %v768
    %v2793 = vunpack.c.h.b16 %v768
    %v2794 = vunpack.c.l.b16 %v769
    %v2795 = vunpack.c.h.b16 %v769
    %v2796 = vunpack.c.l.b16 %v770
    %v2797 = vunpack.c.h.b16 %v770
    %v2798 = vunpack.c.l.b16 %v771
    %v2799 = vunpack.c.h.b16 %v771
    %v2800 = vunpack.c.l.b16 %v772
    %v2801 = vunpack.c.h.b16 %v772
    %v2802 = vunpack.c.l.b16 %v773
    %v2803 = vunpack.c.h.b16 %v773
    %v2804 = vunpack.c.l.b16 %v774
    %v2805 = vunpack.c.h.b16 %v774
    %v2806 = vunpack.c.l.b16 %v775
    %v2807 = vunpack.c.h.b16 %v775
    %v2808 = vunpack.c.l.b16 %v776
    %v2809 = vunpack.c.h.b16 %v776
    %v2810 = vunpack.c.l.b16 %v777
    %v2811 = vunpack.c.h.b16 %v777
    %v2812 = vunpack.c.l.b16 %v778
    %v2813 = vunpack.c.h.b16 %v778
    %v2814 = vunpack.c.l.b16 %v779
    %v2815 = vunpack.c.h.b16 %v779
    %v2816 = vunpack.c.l.b16 %v780
    %v2817 = vunpack.c.h.b16 %v780
    %v2818 = vunpack.c.l.b16 %v781
    %v2819 = vunpack.c.h.b16 %v781
    %v2820 = vunpack.c.l.b16 %v782
    %v2821 = vunpack.c.h.b16 %v782
    %v2822 = vunpack.c.l.b16 %v783
    %v2823 = vunpack.c.h.b16 %v783
    %v2824 = vunpack.c.l.b16 %v784
    %v2825 = vunpack.c.h.b16 %v784
    %v2826 = vunpack.c.l.b16 %v785
    %v2827 = vunpack.c.h.b16 %v785
    %v2828 = vunpack.c.l.b16 %v786
    %v2829 = vunpack.c.h.b16 %v786
    %v2830 = vunpack.c.l.b16 %v787
    %v2831 = vunpack.c.h.b16 %v787
    %v2832 = vunpack.c.l.b16 %v788
    %v2833 = vunpack.c.h.b16 %v788
    %v2834 = vunpack.c.l.b16 %v789
    %v2835 = vunpack.c.h.b16 %v789
    %v2836 = vunpack.c.l.b16 %v790
    %v2837 = vunpack.c.h.b16 %v790
    %v2838 = vunpack.c.l.b16 %v791
    %v2839 = vunpack.c.h.b16 %v791
    %v2840 = vunpack.c.l.b16 %v792
    %v2841 = vunpack.c.h.b16 %v792
    %v2842 = vunpack.c.l.b16 %v793
    %v2843 = vunpack.c.h.b16 %v793
    %v2844 = vunpack.c.l.b16 %v794
    %v2845 = vunpack.c.h.b16 %v794
    %v2846 = vunpack.c.l.b16 %v795
    %v2847 = vunpack.c.h.b16 %v795
    %v2848 = vunpack.c.l.b16 %v796
    %v2849 = vunpack.c.h.b16 %v796
    %v2850 = vunpack.c.l.b16 %v797
    %v2851 = vunpack.c.h.b16 %v797
    %v2852 = vunpack.c.l.b16 %v798
    %v2853 = vunpack.c.h.b16 %v798
    %v2854 = vunpack.c.l.b16 %v799
    %v2855 = vunpack.c.h.b16 %v799
    %v2856 = vunpack.c.l.b16 %v800
    %v2857 = vunpack.c.h.b16 %v800
    %v2858 = vunpack.c.l.b16 %v801
    %v2859 = vunpack.c.h.b16 %v801
    %v2860 = vunpack.c.l.b16 %v802
    %v2861 = vunpack.c.h.b16 %v802
    %v2862 = vunpack.c.l.b16 %v803
    %v2863 = vunpack.c.h.b16 %v803
    %v2864 = vunpack.c.l.b16 %v804
    %v2865 = vunpack.c.h.b16 %v804
    %v2866 = vpack.c.b16 %v1502, %v1500
    %v2867 = vpack.c.b16 %v1503, %v1501
    %v2868 = vpack.c.b16 %v1506, %v1504
    %v2869 = vpack.c.b16 %v1507, %v1505
    %v2870 = vpack.c.b16 %v1510, %v1508
    %v2871 = vpack.c.b16 %v1511, %v1509
    %v2872 = vpack.c.b16 %v1514, %v1512
    %v2873 = vpack.c.b16 %v1515, %v1513
    %v2874 = vpack.c.b16 %v1518, %v1516
    %v2875 = vpack.c.b16 %v1519, %v1517
    %v2876 = vpack.c.b16 %v1522, %v1520
    %v2877 = vpack.c.b16 %v1523, %v1521
    %v2878 = vpack.c.b16 %v1526, %v1524
    %v2879 = vpack.c.b16 %v1527, %v1525
    %v2880 = vpack.c.b16 %v1530, %v1528
    %v2881 = vpack.c.b16 %v1531, %v1529
    %v2882 = vpack.c.b16 %v1534, %v1532
    %v2883 = vpack.c.b16 %v1535, %v1533
    %v2884 = vpack.c.b16 %v1538, %v1536
    %v2885 = vpack.c.b16 %v1539, %v1537
    %v2886 = vpack.c.b16 %v1542, %v1540
    %v2887 = vpack.c.b16 %v1543, %v1541
    %v2888 = vpack.c.b16 %v1546, %v1544
    %v2889 = vpack.c.b16 %v1547, %v1545
    %v2890 = vpack.c.b16 %v1550, %v1548
    %v2891 = vpack.c.b16 %v1551, %v1549
    %v2892 = vpack.c.b16 %v1554, %v1552
    %v2893 = vpack.c.b16 %v1555, %v1553
    %v2894 = vpack.c.b16 %v1558, %v1556
    %v2895 = vpack.c.b16 %v1559, %v1557
    %v2896 = vpack.c.b16 %v1562, %v1560
    %v2897 = vpack.c.b16 %v1563, %v1561
    %v2898 = vpack.c.b16 %v1566, %v1564
    %v2899 = vpack.c.b16 %v1567, %v1565
    %v2900 = vpack.c.b16 %v1570, %v1568
    %v2901 = vpack.c.b16 %v1571, %v1569
    %v2902 = vpack.c.b16 %v1574, %v1572
    %v2903 = vpack.c.b16 %v1575, %v1573
    %v2904 = vpack.c.b16 %v1578, %v1576
    %v2905 = vpack.c.b16 %v1579, %v1577
    %v2906 = vpack.c.b16 %v1582, %v1580
    %v2907 = vpack.c.b16 %v1583, %v1581
    %v2908 = vpack.c.b16 %v1586, %v1584
    %v2909 = vpack.c.b16 %v1587, %v1585
    %v2910 = vpack.c.b16 %v1590, %v1588
    %v2911 = vpack.c.b16 %v1591, %v1589
    %v2912 = vpack.c.b16 %v1594, %v1592
    %v2913 = vpack.c.b16 %v1595, %v1593
    %v2914 = vpack.c.b16 %v1598, %v1596
    %v2915 = vpack.c.b16 %v1599, %v1597
    %v2916 = vpack.c.b16 %v1602, %v1600
    %v2917 = vpack.c.b16 %v1603, %v1601
    %v2918 = vpack.c.b16 %v1606, %v1604
    %v2919 = vpack.c.b16 %v1607, %v1605
    %v2920 = vpack.c.b16 %v1610, %v1608
    %v2921 = vpack.c.b16 %v1611, %v1609
    %v2922 = vpack.c.b16 %v1614, %v1612
    %v2923 = vpack.c.b16 %v1615, %v1613
    %v2924 = vpack.c.b16 %v1618, %v1616
    %v2925 = vpack.c.b16 %v1619, %v1617
    %v2926 = vpack.c.b16 %v1622, %v1620
    %v2927 = vpack.c.b16 %v1623, %v1621
    %v2928 = vpack.c.b16 %v1626, %v1624
    %v2929 = vpack.c.b16 %v1627, %v1625
    %v2930 = vpack.c.b16 %v1630, %v1628
    %v2931 = vpack.c.b16 %v1631, %v1629
    %v2932 = vpack.c.b16 %v1634, %v1632
    %v2933 = vpack.c.b16 %v1635, %v1633
    %v2934 = vpack.c.b16 %v1638, %v1636
    %v2935 = vpack.c.b16 %v1639, %v1637
    %v2936 = vpack.c.b16 %v1642, %v1640
    %v2937 = vpack.c.b16 %v1643, %v1641
    %v2938 = vpack.c.b16 %v1646, %v1644
    %v2939 = vpack.c.b16 %v1647, %v1645
    %v2940 = vpack.c.b16 %v1650, %v1648
    %v2941 = vpack.c.b16 %v1651, %v1649
    %v2942 = vpack.c.b16 %v1654, %v1652
    %v2943 = vpack.c.b16 %v1655, %v1653
    %v2944 = vpack.c.b16 %v1658, %v1656
    %v2945 = vpack.c.b16 %v1659, %v1657
    %v2946 = vpack.c.b16 %v1662, %v1660
    %v2947 = vpack.c.b16 %v1663, %v1661
    %v2948 = vpack.c.b16 %v1666, %v1664
    %v2949 = vpack.c.b16 %v1667, %v1665
    %v2950 = vpack.c.b16 %v1670, %v1668
    %v2951 = vpack.c.b16 %v1671, %v1669
    %v2952 = vpack.c.b16 %v1674, %v1672
    %v2953 = vpack.c.b16 %v1675, %v1673
    %v2954 = vpack.c.b16 %v1678, %v1676
    %v2955 = vpack.c.b16 %v1679, %v1677
    %v2956 = vpack.c.b16 %v1682, %v1680
    %v2957 = vpack.c.b16 %v1683, %v1681
    %v2958 = vpack.c.b16 %v1686, %v1684
    %v2959 = vpack.c.b16 %v1687, %v1685
    %v2960 = vpack.c.b16 %v1690, %v1688
    %v2961 = vpack.c.b16 %v1691, %v1689
    %v2962 = vpack.c.b16 %v1694, %v1692
    %v2963 = vpack.c.b16 %v1695, %v1693
    %v2964 = vpack.c.b16 %v1698, %v1696
    %v2965 = vpack.c.b16 %v1699, %v1697
    %v2966 = vpack.c.b16 %v1702, %v1700
    %v2967 = vpack.c.b16 %v1703, %v1701
    %v2968 = vpack.c.b16 %v1706, %v1704
    %v2969 = vpack.c.b16 %v1707, %v1705
    %v2970 = vpack.c.b16 %v1710, %v1708
    %v2971 = vpack.c.b16 %v1711, %v1709
    %v2972 = vpack.c.b16 %v1714, %v1712
    %v2973 = vpack.c.b16 %v1715, %v1713
    %v2974 = vpack.c.b16 %v1718, %v1716
    %v2975 = vpack.c.b16 %v1719, %v1717
    %v2976 = vpack.c.b16 %v1722, %v1720
    %v2977 = vpack.c.b16 %v1723, %v1721
    %v2978 = vpack.c.b16 %v1726, %v1724
    %v2979 = vpack.c.b16 %v1727, %v1725
    %v2980 = vpack.c.b16 %v1730, %v1728
    %v2981 = vpack.c.b16 %v1731, %v1729
    %v2982 = vpack.c.b16 %v1734, %v1732
    %v2983 = vpack.c.b16 %v1735, %v1733
    %v2984 = vpack.c.b16 %v1738, %v1736
    %v2985 = vpack.c.b16 %v1739, %v1737
    %v2986 = vpack.c.b16 %v1742, %v1740
    %v2987 = vpack.c.b16 %v1743, %v1741
    %v2988 = vpack.c.b16 %v1746, %v1744
    %v2989 = vpack.c.b16 %v1747, %v1745
    %v2990 = vpack.c.b16 %v1750, %v1748
    %v2991 = vpack.c.b16 %v1751, %v1749
    %v2992 = vpack.c.b16 %v1754, %v1752
    %v2993 = vpack.c.b16 %v1755, %v1753
    %v2994 = vpack.c.b16 %v1758, %v1756
    %v2995 = vpack.c.b16 %v1759, %v1757
    %v2996 = vpack.c.b16 %v1762, %v1760
    %v2997 = vpack.c.b16 %v1763, %v1761
    %v2998 = vpack.c.b16 %v1766, %v1764
    %v2999 = vpack.c.b16 %v1767, %v1765
    %v3000 = vpack.c.b16 %v1770, %v1768
    %v3001 = vpack.c.b16 %v1771, %v1769
    %v3002 = vpack.c.b16 %v1774, %v1772
    %v3003 = vpack.c.b16 %v1775, %v1773
    %v3004 = vpack.c.b16 %v1778, %v1776
    %v3005 = vpack.c.b16 %v1779, %v1777
    %v3006 = vpack.c.b16 %v1782, %v1780
    %v3007 = vpack.c.b16 %v1783, %v1781
    %v3008 = vpack.c.b16 %v1786, %v1784
    %v3009 = vpack.c.b16 %v1787, %v1785
    %v3010 = vpack.c.b16 %v1790, %v1788
    %v3011 = vpack.c.b16 %v1791, %v1789
    %v3012 = vpack.c.b16 %v1794, %v1792
    %v3013 = vpack.c.b16 %v1795, %v1793
    %v3014 = vpack.c.b16 %v1798, %v1796
    %v3015 = vpack.c.b16 %v1799, %v1797
    %v3016 = vpack.c.b16 %v1802, %v1800
    %v3017 = vpack.c.b16 %v1803, %v1801
    %v3018 = vpack.c.b16 %v1806, %v1804
    %v3019 = vpack.c.b16 %v1807, %v1805
    %v3020 = vpack.c.b16 %v1810, %v1808
    %v3021 = vpack.c.b16 %v1811, %v1809
    %v3022 = vpack.c.b16 %v1814, %v1812
    %v3023 = vpack.c.b16 %v1815, %v1813
    %v3024 = vpack.c.b16 %v1818, %v1816
    %v3025 = vpack.c.b16 %v1819, %v1817
    %v3026 = vpack.c.b16 %v1822, %v1820
    %v3027 = vpack.c.b16 %v1823, %v1821
    %v3028 = vpack.c.b16 %v1826, %v1824
    %v3029 = vpack.c.b16 %v1827, %v1825
    %v3030 = vpack.c.b16 %v1830, %v1828
    %v3031 = vpack.c.b16 %v1831, %v1829
    %v3032 = vpack.c.b16 %v1834, %v1832
    %v3033 = vpack.c.b16 %v1835, %v1833
    %v3034 = vpack.c.b16 %v1838, %v1836
    %v3035 = vpack.c.b16 %v1839, %v1837
    %v3036 = vpack.c.b16 %v1842, %v1840
    %v3037 = vpack.c.b16 %v1843, %v1841
    %v3038 = vpack.c.b16 %v1846, %v1844
    %v3039 = vpack.c.b16 %v1847, %v1845
    %v3040 = vpack.c.b16 %v1850, %v1848
    %v3041 = vpack.c.b16 %v1851, %v1849
    %v3042 = vpack.c.b16 %v1854, %v1852
    %v3043 = vpack.c.b16 %v1855, %v1853
    %v3044 = vpack.c.b16 %v1858, %v1856
    %v3045 = vpack.c.b16 %v1859, %v1857
    %v3046 = vpack.c.b16 %v1862, %v1860
    %v3047 = vpack.c.b16 %v1863, %v1861
    %v3048 = vpack.c.b16 %v1866, %v1864
    %v3049 = vpack.c.b16 %v1867, %v1865
    %v3050 = vpack.c.b16 %v1870, %v1868
    %v3051 = vpack.c.b16 %v1871, %v1869
    %v3052 = vpack.c.b16 %v1874, %v1872
    %v3053 = vpack.c.b16 %v1875, %v1873
    %v3054 = vpack.c.b16 %v1878, %v1876
    %v3055 = vpack.c.b16 %v1879, %v1877
    %v3056 = vpack.c.b16 %v1882, %v1880
    %v3057 = vpack.c.b16 %v1883, %v1881
    %v3058 = vpack.c.b16 %v1886, %v1884
    %v3059 = vpack.c.b16 %v1887, %v1885
    %v3060 = vpack.c.b16 %v1890, %v1888
    %v3061 = vpack.c.b16 %v1891, %v1889
    %v3062 = vpack.c.b16 %v1894, %v1892
    %v3063 = vpack.c.b16 %v1895, %v1893
    %v3064 = vpack.c.b16 %v1898, %v1896
    %v3065 = vpack.c.b16 %v1899, %v1897
    %v3066 = vpack.c.b16 %v1902, %v1900
    %v3067 = vpack.c.b16 %v1903, %v1901
    %v3068 = vpack.c.b16 %v1906, %v1904
    %v3069 = vpack.c.b16 %v1907, %v1905
    %v3070 = vpack.c.b16 %v1910, %v1908
    %v3071 = vpack.c.b16 %v1911, %v1909
    %v3072 = vpack.c.b16 %v1914, %v1912
    %v3073 = vpack.c.b16 %v1915, %v1913
    %v3074 = vpack.c.b16 %v1918, %v1916
    %v3075 = vpack.c.b16 %v1919, %v1917
    %v3076 = vpack.c.b16 %v1922, %v1920
    %v3077 = vpack.c.b16 %v1923, %v1921
    %v3078 = vpack.c.b16 %v1926, %v1924
    %v3079 = vpack.c.b16 %v1927, %v1925
    %v3080 = vpack.c.b16 %v1930, %v1928
    %v3081 = vpack.c.b16 %v1931, %v1929
    %v3082 = vpack.c.b16 %v1934, %v1932
    %v3083 = vpack.c.b16 %v1935, %v1933
    %v3084 = vpack.c.b16 %v1938, %v1936
    %v3085 = vpack.c.b16 %v1939, %v1937
    %v3086 = vpack.c.b16 %v1942, %v1940
    %v3087 = vpack.c.b16 %v1943, %v1941
    %v3088 = vpack.c.b16 %v1946, %v1944
    %v3089 = vpack.c.b16 %v1947, %v1945
    %v3090 = vpack.c.b16 %v1950, %v1948
    %v3091 = vpack.c.b16 %v1951, %v1949
    %v3092 = vpack.c.b16 %v1954, %v1952
    %v3093 = vpack.c.b16 %v1955, %v1953
    %v3094 = vpack.c.b16 %v1958, %v1956
    %v3095 = vpack.c.b16 %v1959, %v1957
    %v3096 = vpack.c.b16 %v1962, %v1960
    %v3097 = vpack.c.b16 %v1963, %v1961
    %v3098 = vpack.c.b16 %v1966, %v1964
    %v3099 = vpack.c.b16 %v1967, %v1965
    %v3100 = vpack.c.b16 %v1970, %v1968
    %v3101 = vpack.c.b16 %v1971, %v1969
    %v3102 = vpack.c.b16 %v1974, %v1972
    %v3103 = vpack.c.b16 %v1975, %v1973
    %v3104 = vpack.c.b16 %v1978, %v1976
    %v3105 = vpack.c.b16 %v1979, %v1977
    %v3106 = vpack.c.b16 %v1982, %v1980
    %v3107 = vpack.c.b16 %v1983, %v1981
    %v3108 = vpack.c.b16 %v1986, %v1984
    %v3109 = vpack.c.b16 %v1987, %v1985
    %v3110 = vpack.c.b16 %v1990, %v1988
    %v3111 = vpack.c.b16 %v1991, %v1989
    %v3112 = vpack.c.b16 %v1994, %v1992
    %v3113 = vpack.c.b16 %v1995, %v1993
    %v3114 = vpack.c.b16 %v1998, %v1996
    %v3115 = vpack.c.b16 %v1999, %v1997
    %v3116 = vpack.c.b16 %v2002, %v2000
    %v3117 = vpack.c.b16 %v2003, %v2001
    %v3118 = vpack.c.b16 %v2006, %v2004
    %v3119 = vpack.c.b16 %v2007, %v2005
    %v3120 = vpack.c.b16 %v2010, %v2008
    %v3121 = vpack.c.b16 %v2011, %v2009
    %v3122 = vpack.c.b16 %v2014, %v2012
    %v3123 = vpack.c.b16 %v2015, %v2013
    %v3124 = vpack.c.b16 %v2018, %v2016
    %v3125 = vpack.c.b16 %v2019, %v2017
    %v3126 = vpack.c.b16 %v2022, %v2020
    %v3127 = vpack.c.b16 %v2023, %v2021
    %v3128 = vpack.c.b16 %v2026, %v2024
    %v3129 = vpack.c.b16 %v2027, %v2025
    %v3130 = vpack.c.b16 %v2030, %v2028
    %v3131 = vpack.c.b16 %v2031, %v2029
    %v3132 = vpack.c.b16 %v2034, %v2032
    %v3133 = vpack.c.b16 %v2035, %v2033
    %v3134 = vpack.c.b16 %v2038, %v2036
    %v3135 = vpack.c.b16 %v2039, %v2037
    %v3136 = vpack.c.b16 %v2042, %v2040
    %v3137 = vpack.c.b16 %v2043, %v2041
    %v3138 = vpack.c.b16 %v2046, %v2044
    %v3139 = vpack.c.b16 %v2047, %v2045
    %v3140 = vpack.c.b16 %v2050, %v2048
    %v3141 = vpack.c.b16 %v2051, %v2049
    %v3142 = vpack.c.b16 %v2054, %v2052
    %v3143 = vpack.c.b16 %v2055, %v2053
    %v3144 = vpack.c.b16 %v2058, %v2056
    %v3145 = vpack.c.b16 %v2059, %v2057
    %v3146 = vpack.c.b16 %v2062, %v2060
    %v3147 = vpack.c.b16 %v2063, %v2061
    %v3148 = vpack.c.b16 %v2066, %v2064
    %v3149 = vpack.c.b16 %v2067, %v2065
    %v3150 = vpack.c.b16 %v2070, %v2068
    %v3151 = vpack.c.b16 %v2071, %v2069
    %v3152 = vpack.c.b16 %v2074, %v2072
    %v3153 = vpack.c.b16 %v2075, %v2073
    %v3154 = vpack.c.b16 %v2078, %v2076
    %v3155 = vpack.c.b16 %v2079, %v2077
    %v3156 = vpack.c.b16 %v2082, %v2080
    %v3157 = vpack.c.b16 %v2083, %v2081
    %v3158 = vpack.c.b16 %v2086, %v2084
    %v3159 = vpack.c.b16 %v2087, %v2085
    %v3160 = vpack.c.b16 %v2090, %v2088
    %v3161 = vpack.c.b16 %v2091, %v2089
    %v3162 = vpack.c.b16 %v2094, %v2092
    %v3163 = vpack.c.b16 %v2095, %v2093
    %v3164 = vpack.c.b16 %v2098, %v2096
    %v3165 = vpack.c.b16 %v2099, %v2097
    %v3166 = vpack.c.b16 %v2102, %v2100
    %v3167 = vpack.c.b16 %v2103, %v2101
    %v3168 = vpack.c.b16 %v2106, %v2104
    %v3169 = vpack.c.b16 %v2107, %v2105
    %v3170 = vpack.c.b16 %v2110, %v2108
    %v3171 = vpack.c.b16 %v2111, %v2109
    %v3172 = vpack.c.b16 %v2114, %v2112
    %v3173 = vpack.c.b16 %v2115, %v2113
    %v3174 = vpack.c.b16 %v2118, %v2116
    %v3175 = vpack.c.b16 %v2119, %v2117
    %v3176 = vpack.c.b16 %v2122, %v2120
    %v3177 = vpack.c.b16 %v2123, %v2121
    %v3178 = vpack.c.b16 %v2126, %v2124
    %v3179 = vpack.c.b16 %v2127, %v2125
    %v3180 = vpack.c.b16 %v2130, %v2128
    %v3181 = vpack.c.b16 %v2131, %v2129
    %v3182 = vpack.c.b16 %v2134, %v2132
    %v3183 = vpack.c.b16 %v2135, %v2133
    %v3184 = vpack.c.b16 %v2138, %v2136
    %v3185 = vpack.c.b16 %v2139, %v2137
    %v3186 = vpack.c.b16 %v2142, %v2140
    %v3187 = vpack.c.b16 %v2143, %v2141
    %v3188 = vpack.c.b16 %v2146, %v2144
    %v3189 = vpack.c.b16 %v2147, %v2145
    %v3190 = vpack.c.b16 %v2150, %v2148
    %v3191 = vpack.c.b16 %v2151, %v2149
    %v3192 = vpack.c.b16 %v2154, %v2152
    %v3193 = vpack.c.b16 %v2155, %v2153
    %v3194 = vpack.c.b16 %v2158, %v2156
    %v3195 = vpack.c.b16 %v2159, %v2157
    %v3196 = vpack.c.b16 %v2162, %v2160
    %v3197 = vpack.c.b16 %v2163, %v2161
    %v3198 = vpack.c.b16 %v2166, %v2164
    %v3199 = vpack.c.b16 %v2167, %v2165
    %v3200 = vpack.c.b16 %v2170, %v2168
    %v3201 = vpack.c.b16 %v2171, %v2169
    %v3202 = vpack.c.b16 %v2174, %v2172
    %v3203 = vpack.c.b16 %v2175, %v2173
    %v3204 = vpack.c.b16 %v2178, %v2176
    %v3205 = vpack.c.b16 %v2179, %v2177
    %v3206 = vpack.c.b16 %v2182, %v2180
    %v3207 = vpack.c.b16 %v2183, %v2181
    %v3208 = vpack.c.b16 %v2186, %v2184
    %v3209 = vpack.c.b16 %v2187, %v2185
    %v3210 = vpack.c.b16 %v2190, %v2188
    %v3211 = vpack.c.b16 %v2191, %v2189
    %v3212 = vpack.c.b16 %v2194, %v2192
    %v3213 = vpack.c.b16 %v2195, %v2193
    %v3214 = vpack.c.b16 %v2198, %v2196
    %v3215 = vpack.c.b16 %v2199, %v2197
    %v3216 = vpack.c.b16 %v2202, %v2200
    %v3217 = vpack.c.b16 %v2203, %v2201
    %v3218 = vpack.c.b16 %v2206, %v2204
    %v3219 = vpack.c.b16 %v2207, %v2205
    %v3220 = vpack.c.b16 %v2210, %v2208
    %v3221 = vpack.c.b16 %v2211, %v2209
    %v3222 = vpack.c.b16 %v2214, %v2212
    %v3223 = vpack.c.b16 %v2215, %v2213
    %v3224 = vpack.c.b16 %v2218, %v2216
    %v3225 = vpack.c.b16 %v2219, %v2217
    %v3226 = vpack.c.b16 %v2222, %v2220
    %v3227 = vpack.c.b16 %v2223, %v2221
    %v3228 = vpack.c.b16 %v2226, %v2224
    %v3229 = vpack.c.b16 %v2227, %v2225
    %v3230 = vpack.c.b16 %v2230, %v2228
    %v3231 = vpack.c.b16 %v2231, %v2229
    %v3232 = vpack.c.b16 %v2234, %v2232
    %v3233 = vpack.c.b16 %v2235, %v2233
    %v3234 = vpack.c.b16 %v2238, %v2236
    %v3235 = vpack.c.b16 %v2239, %v2237
    %v3236 = vpack.c.b16 %v2242, %v2240
    %v3237 = vpack.c.b16 %v2243, %v2241
    %v3238 = vpack.c.b16 %v2246, %v2244
    %v3239 = vpack.c.b16 %v2247, %v2245
    %v3240 = vpack.c.b16 %v2250, %v2248
    %v3241 = vpack.c.b16 %v2251, %v2249
    %v3242 = vpack.c.b16 %v2254, %v2252
    %v3243 = vpack.c.b16 %v2255, %v2253
    %v3244 = vpack.c.b16 %v2258, %v2256
    %v3245 = vpack.c.b16 %v2259, %v2257
    %v3246 = vpack.c.b16 %v2262, %v2260
    %v3247 = vpack.c.b16 %v2263, %v2261
    %v3248 = vpack.c.b16 %v2266, %v2264
    %v3249 = vpack.c.b16 %v2267, %v2265
    %v3250 = vpack.c.b16 %v2270, %v2268
    %v3251 = vpack.c.b16 %v2271, %v2269
    %v3252 = vpack.c.b16 %v2274, %v2272
    %v3253 = vpack.c.b16 %v2275, %v2273
    %v3254 = vpack.c.b16 %v2278, %v2276
    %v3255 = vpack.c.b16 %v2279, %v2277
    %v3256 = vpack.c.b16 %v2282, %v2280
    %v3257 = vpack.c.b16 %v2283, %v2281
    %v3258 = vpack.c.b16 %v2286, %v2284
    %v3259 = vpack.c.b16 %v2287, %v2285
    %v3260 = vpack.c.b16 %v2290, %v2288
    %v3261 = vpack.c.b16 %v2291, %v2289
    %v3262 = vpack.c.b16 %v2294, %v2292
    %v3263 = vpack.c.b16 %v2295, %v2293
    %v3264 = vpack.c.b16 %v2298, %v2296
    %v3265 = vpack.c.b16 %v2299, %v2297
    %v3266 = vpack.c.b16 %v2302, %v2300
    %v3267 = vpack.c.b16 %v2303, %v2301
    %v3268 = vpack.c.b16 %v2306, %v2304
    %v3269 = vpack.c.b16 %v2307, %v2305
    %v3270 = vpack.c.b16 %v2310, %v2308
    %v3271 = vpack.c.b16 %v2311, %v2309
    %v3272 = vpack.c.b16 %v2314, %v2312
    %v3273 = vpack.c.b16 %v2315, %v2313
    %v3274 = vpack.c.b16 %v2318, %v2316
    %v3275 = vpack.c.b16 %v2319, %v2317
    %v3276 = vpack.c.b16 %v2322, %v2320
    %v3277 = vpack.c.b16 %v2323, %v2321
    %v3278 = vpack.c.b16 %v2326, %v2324
    %v3279 = vpack.c.b16 %v2327, %v2325
    %v3280 = vpack.c.b16 %v2330, %v2328
    %v3281 = vpack.c.b16 %v2331, %v2329
    %v3282 = vpack.c.b16 %v2334, %v2332
    %v3283 = vpack.c.b16 %v2335, %v2333
    %v3284 = vpack.c.b16 %v2338, %v2336
    %v3285 = vpack.c.b16 %v2339, %v2337
    %v3286 = vpack.c.b16 %v2342, %v2340
    %v3287 = vpack.c.b16 %v2343, %v2341
    %v3288 = vpack.c.b16 %v2346, %v2344
    %v3289 = vpack.c.b16 %v2347, %v2345
    %v3290 = vpack.c.b16 %v2350, %v2348
    %v3291 = vpack.c.b16 %v2351, %v2349
    %v3292 = vpack.c.b16 %v2354, %v2352
    %v3293 = vpack.c.b16 %v2355, %v2353
    %v3294 = vpack.c.b16 %v2358, %v2356
    %v3295 = vpack.c.b16 %v2359, %v2357
    %v3296 = vpack.c.b16 %v2362, %v2360
    %v3297 = vpack.c.b16 %v2363, %v2361
    %v3298 = vpack.c.b16 %v2366, %v2364
    %v3299 = vpack.c.b16 %v2367, %v2365
    %v3300 = vpack.c.b16 %v2370, %v2368
    %v3301 = vpack.c.b16 %v2371, %v2369
    %v3302 = vpack.c.b16 %v2374, %v2372
    %v3303 = vpack.c.b16 %v2375, %v2373
    %v3304 = vpack.c.b16 %v2378, %v2376
    %v3305 = vpack.c.b16 %v2379, %v2377
    %v3306 = vpack.c.b16 %v2382, %v2380
    %v3307 = vpack.c.b16 %v2383, %v2381
    %v3308 = vpack.c.b16 %v2386, %v2384
    %v3309 = vpack.c.b16 %v2387, %v2385
    %v3310 = vpack.c.b16 %v2390, %v2388
    %v3311 = vpack.c.b16 %v2391, %v2389
    %v3312 = vpack.c.b16 %v2394, %v2392
    %v3313 = vpack.c.b16 %v2395, %v2393
    %v3314 = vpack.c.b16 %v2398, %v2396
    %v3315 = vpack.c.b16 %v2399, %v2397
    %v3316 = vpack.c.b16 %v2402, %v2400
    %v3317 = vpack.c.b16 %v2403, %v2401
    %v3318 = vpack.c.b16 %v2406, %v2404
    %v3319 = vpack.c.b16 %v2407, %v2405
    %v3320 = vpack.c.b16 %v2410, %v2408
    %v3321 = vpack.c.b16 %v2411, %v2409
    %v3322 = vpack.c.b16 %v2414, %v2412
    %v3323 = vpack.c.b16 %v2415, %v2413
    %v3324 = vpack.c.b16 %v2418, %v2416
    %v3325 = vpack.c.b16 %v2419, %v2417
    %v3326 = vpack.c.b16 %v2422, %v2420
    %v3327 = vpack.c.b16 %v2423, %v2421
    %v3328 = vpack.c.b16 %v2426, %v2424
    %v3329 = vpack.c.b16 %v2427, %v2425
    %v3330 = vpack.c.b16 %v2430, %v2428
    %v3331 = vpack.c.b16 %v2431, %v2429
    %v3332 = vpack.c.b16 %v2434, %v2432
    %v3333 = vpack.c.b16 %v2435, %v2433
    %v3334 = vpack.c.b16 %v2438, %v2436
    %v3335 = vpack.c.b16 %v2439, %v2437
    %v3336 = vpack.c.b16 %v2442, %v2440
    %v3337 = vpack.c.b16 %v2443, %v2441
    %v3338 = vpack.c.b16 %v2446, %v2444
    %v3339 = vpack.c.b16 %v2447, %v2445
    %v3340 = vpack.c.b16 %v2450, %v2448
    %v3341 = vpack.c.b16 %v2451, %v2449
    %v3342 = vpack.c.b16 %v2454, %v2452
    %v3343 = vpack.c.b16 %v2455, %v2453
    %v3344 = vpack.c.b16 %v2458, %v2456
    %v3345 = vpack.c.b16 %v2459, %v2457
    %v3346 = vpack.c.b16 %v2462, %v2460
    %v3347 = vpack.c.b16 %v2463, %v2461
    %v3348 = vpack.c.b16 %v2466, %v2464
    %v3349 = vpack.c.b16 %v2467, %v2465
    %v3350 = vpack.c.b16 %v2470, %v2468
    %v3351 = vpack.c.b16 %v2471, %v2469
    %v3352 = vpack.c.b16 %v2474, %v2472
    %v3353 = vpack.c.b16 %v2475, %v2473
    %v3354 = vpack.c.b16 %v2478, %v2476
    %v3355 = vpack.c.b16 %v2479, %v2477
    %v3356 = vpack.c.b16 %v2482, %v2480
    %v3357 = vpack.c.b16 %v2483, %v2481
    %v3358 = vpack.c.b16 %v2486, %v2484
    %v3359 = vpack.c.b16 %v2487, %v2485
    %v3360 = vpack.c.b16 %v2490, %v2488
    %v3361 = vpack.c.b16 %v2491, %v2489
    %v3362 = vpack.c.b16 %v2494, %v2492
    %v3363 = vpack.c.b16 %v2495, %v2493
    %v3364 = vpack.c.b16 %v2498, %v2496
    %v3365 = vpack.c.b16 %v2499, %v2497
    %v3366 = vpack.c.b16 %v2502, %v2500
    %v3367 = vpack.c.b16 %v2503, %v2501
    %v3368 = vpack.c.b16 %v2506, %v2504
    %v3369 = vpack.c.b16 %v2507, %v2505
    %v3370 = vpack.c.b16 %v2510, %v2508
    %v3371 = vpack.c.b16 %v2511, %v2509
    %v3372 = vpack.c.b16 %v2514, %v2512
    %v3373 = vpack.c.b16 %v2515, %v2513
    %v3374 = vpack.c.b16 %v2518, %v2516
    %v3375 = vpack.c.b16 %v2519, %v2517
    %v3376 = vpack.c.b16 %v2522, %v2520
    %v3377 = vpack.c.b16 %v2523, %v2521
    %v3378 = vpack.c.b16 %v2526, %v2524
    %v3379 = vpack.c.b16 %v2527, %v2525
    %v3380 = vpack.c.b16 %v2530, %v2528
    %v3381 = vpack.c.b16 %v2531, %v2529
    %v3382 = vpack.c.b16 %v2534, %v2532
    %v3383 = vpack.c.b16 %v2535, %v2533
    %v3384 = vpack.c.b16 %v2538, %v2536
    %v3385 = vpack.c.b16 %v2539, %v2537
    %v3386 = vpack.c.b16 %v2542, %v2540
    %v3387 = vpack.c.b16 %v2543, %v2541
    %v3388 = vpack.c.b16 %v2546, %v2544
    %v3389 = vpack.c.b16 %v2547, %v2545
    %v3390 = vpack.c.b16 %v2550, %v2548
    %v3391 = vpack.c.b16 %v2551, %v2549
    %v3392 = vpack.c.b16 %v2554, %v2552
    %v3393 = vpack.c.b16 %v2555, %v2553
    %v3394 = vpack.c.b16 %v2558, %v2556
    %v3395 = vpack.c.b16 %v2559, %v2557
    %v3396 = vpack.c.b16 %v2562, %v2560
    %v3397 = vpack.c.b16 %v2563, %v2561
    %v3398 = vpack.c.b16 %v2566, %v2564
    %v3399 = vpack.c.b16 %v2567, %v2565
    %v3400 = vpack.c.b16 %v2570, %v2568
    %v3401 = vpack.c.b16 %v2571, %v2569
    %v3402 = vpack.c.b16 %v2574, %v2572
    %v3403 = vpack.c.b16 %v2575, %v2573
    %v3404 = vpack.c.b16 %v2578, %v2576
    %v3405 = vpack.c.b16 %v2579, %v2577
    %v3406 = vpack.c.b16 %v2582, %v2580
    %v3407 = vpack.c.b16 %v2583, %v2581
    %v3408 = vpack.c.b16 %v2586, %v2584
    %v3409 = vpack.c.b16 %v2587, %v2585
    %v3410 = vpack.c.b16 %v2590, %v2588
    %v3411 = vpack.c.b16 %v2591, %v2589
    %v3412 = vpack.c.b16 %v2594, %v2592
    %v3413 = vpack.c.b16 %v2595, %v2593
    %v3414 = vpack.c.b16 %v2598, %v2596
    %v3415 = vpack.c.b16 %v2599, %v2597
    %v3416 = vpack.c.b16 %v2602, %v2600
    %v3417 = vpack.c.b16 %v2603, %v2601
    %v3418 = vpack.c.b16 %v2606, %v2604
    %v3419 = vpack.c.b16 %v2607, %v2605
    %v3420 = vpack.c.b16 %v2610, %v2608
    %v3421 = vpack.c.b16 %v2611, %v2609
    %v3422 = vpack.c.b16 %v2614, %v2612
    %v3423 = vpack.c.b16 %v2615, %v2613
    %v3424 = vpack.c.b16 %v2618, %v2616
    %v3425 = vpack.c.b16 %v2619, %v2617
    %v3426 = vpack.c.b16 %v2622, %v2620
    %v3427 = vpack.c.b16 %v2623, %v2621
    %v3428 = vpack.c.b16 %v2626, %v2624
    %v3429 = vpack.c.b16 %v2627, %v2625
    %v3430 = vpack.c.b16 %v2630, %v2628
    %v3431 = vpack.c.b16 %v2631, %v2629
    %v3432 = vpack.c.b16 %v2634, %v2632
    %v3433 = vpack.c.b16 %v2635, %v2633
    %v3434 = vpack.c.b16 %v2638, %v2636
    %v3435 = vpack.c.b16 %v2639, %v2637
    %v3436 = vpack.c.b16 %v2642, %v2640
    %v3437 = vpack.c.b16 %v2643, %v2641
    %v3438 = vpack.c.b16 %v2646, %v2644
    %v3439 = vpack.c.b16 %v2647, %v2645
    %v3440 = vpack.c.b16 %v2650, %v2648
    %v3441 = vpack.c.b16 %v2651, %v2649
    %v3442 = vpack.c.b16 %v2654, %v2652
    %v3443 = vpack.c.b16 %v2655, %v2653
    %v3444 = vpack.c.b16 %v2658, %v2656
    %v3445 = vpack.c.b16 %v2659, %v2657
    %v3446 = vpack.c.b16 %v2662, %v2660
    %v3447 = vpack.c.b16 %v2663, %v2661
    %v3448 = vpack.c.b16 %v2666, %v2664
    %v3449 = vpack.c.b16 %v2667, %v2665
    %v3450 = vpack.c.b16 %v2670, %v2668
    %v3451 = vpack.c.b16 %v2671, %v2669
    %v3452 = vpack.c.b16 %v2674, %v2672
    %v3453 = vpack.c.b16 %v2675, %v2673
    %v3454 = vpack.c.b16 %v2678, %v2676
    %v3455 = vpack.c.b16 %v2679, %v2677
    %v3456 = vpack.c.b16 %v2682, %v2680
    %v3457 = vpack.c.b16 %v2683, %v2681
    %v3458 = vpack.c.b16 %v2686, %v2684
    %v3459 = vpack.c.b16 %v2687, %v2685
    %v3460 = vpack.c.b16 %v2690, %v2688
    %v3461 = vpack.c.b16 %v2691, %v2689
    %v3462 = vpack.c.b16 %v2694, %v2692
    %v3463 = vpack.c.b16 %v2695, %v2693
    %v3464 = vpack.c.b16 %v2698, %v2696
    %v3465 = vpack.c.b16 %v2699, %v2697
    %v3466 = vpack.c.b16 %v2702, %v2700
    %v3467 = vpack.c.b16 %v2703, %v2701
    %v3468 = vpack.c.b16 %v2706, %v2704
    %v3469 = vpack.c.b16 %v2707, %v2705
    %v3470 = vpack.c.b16 %v2710, %v2708
    %v3471 = vpack.c.b16 %v2711, %v2709
    %v3472 = vpack.c.b16 %v2714, %v2712
    %v3473 = vpack.c.b16 %v2715, %v2713
    %v3474 = vpack.c.b16 %v2718, %v2716
    %v3475 = vpack.c.b16 %v2719, %v2717
    %v3476 = vpack.c.b16 %v2722, %v2720
    %v3477 = vpack.c.b16 %v2723, %v2721
    %v3478 = vpack.c.b16 %v2726, %v2724
    %v3479 = vpack.c.b16 %v2727, %v2725
    %v3480 = vpack.c.b16 %v2730, %v2728
    %v3481 = vpack.c.b16 %v2731, %v2729
    %v3482 = vpack.c.b16 %v2734, %v2732
    %v3483 = vpack.c.b16 %v2735, %v2733
    %v3484 = vpack.c.b16 %v2738, %v2736
    %v3485 = vpack.c.b16 %v2739, %v2737
    %v3486 = vpack.c.b16 %v2742, %v2740
    %v3487 = vpack.c.b16 %v2743, %v2741
    %v3488 = vpack.c.b16 %v2746, %v2744
    %v3489 = vpack.c.b16 %v2747, %v2745
    %v3490 = vpack.c.b16 %v2750, %v2748
    %v3491 = vpack.c.b16 %v2751, %v2749
    %v3492 = vpack.c.b16 %v2754, %v2752
    %v3493 = vpack.c.b16 %v2755, %v2753
    %v3494 = vpack.c.b16 %v2758, %v2756
    %v3495 = vpack.c.b16 %v2759, %v2757
    %v3496 = vpack.c.b16 %v2762, %v2760
    %v3497 = vpack.c.b16 %v2763, %v2761
    %v3498 = vpack.c.b16 %v2766, %v2764
    %v3499 = vpack.c.b16 %v2767, %v2765
    %v3500 = vpack.c.b16 %v2770, %v2768
    %v3501 = vpack.c.b16 %v2771, %v2769
    %v3502 = vpack.c.b16 %v2774, %v2772
    %v3503 = vpack.c.b16 %v2775, %v2773
    %v3504 = vpack.c.b16 %v2778, %v2776
    %v3505 = vpack.c.b16 %v2779, %v2777
    %v3506 = vpack.c.b16 %v2782, %v2780
    %v3507 = vpack.c.b16 %v2783, %v2781
    %v3508 = vpack.c.b16 %v2786, %v2784
    %v3509 = vpack.c.b16 %v2787, %v2785
    %v3510 = vpack.c.b16 %v2790, %v2788
    %v3511 = vpack.c.b16 %v2791, %v2789
    %v3512 = vpack.c.b16 %v2794, %v2792
    %v3513 = vpack.c.b16 %v2795, %v2793
    %v3514 = vpack.c.b16 %v2798, %v2796
    %v3515 = vpack.c.b16 %v2799, %v2797
    %v3516 = vpack.c.b16 %v2802, %v2800
    %v3517 = vpack.c.b16 %v2803, %v2801
    %v3518 = vpack.c.b16 %v2806, %v2804
    %v3519 = vpack.c.b16 %v2807, %v2805
    %v3520 = vpack.c.b16 %v2810, %v2808
    %v3521 = vpack.c.b16 %v2811, %v2809
    %v3522 = vpack.c.b16 %v2814, %v2812
    %v3523 = vpack.c.b16 %v2815, %v2813
    %v3524 = vpack.c.b16 %v2818, %v2816
    %v3525 = vpack.c.b16 %v2819, %v2817
    %v3526 = vpack.c.b16 %v2822, %v2820
    %v3527 = vpack.c.b16 %v2823, %v2821
    %v3528 = vpack.c.b16 %v2826, %v2824
    %v3529 = vpack.c.b16 %v2827, %v2825
    %v3530 = vpack.c.b16 %v2830, %v2828
    %v3531 = vpack.c.b16 %v2831, %v2829
    %v3532 = vpack.c.b16 %v2834, %v2832
    %v3533 = vpack.c.b16 %v2835, %v2833
    %v3534 = vpack.c.b16 %v2838, %v2836
    %v3535 = vpack.c.b16 %v2839, %v2837
    %v3536 = vpack.c.b16 %v2842, %v2840
    %v3537 = vpack.c.b16 %v2843, %v2841
    %v3538 = vpack.c.b16 %v2846, %v2844
    %v3539 = vpack.c.b16 %v2847, %v2845
    %v3540 = vpack.c.b16 %v2850, %v2848
    %v3541 = vpack.c.b16 %v2851, %v2849
    %v3542 = vpack.c.b16 %v2854, %v2852
    %v3543 = vpack.c.b16 %v2855, %v2853
    %v3544 = vpack.c.b16 %v2858, %v2856
    %v3545 = vpack.c.b16 %v2859, %v2857
    %v3546 = vpack.c.b16 %v2862, %v2860
    %v3547 = vpack.c.b16 %v2863, %v2861
    %v3548 = vpack.c.b16 %v2864, %v2864
    %v3549 = vpack.c.b16 %v2865, %v2865
    %vm4232 = vcmask 687104
    %v4234 = vsel %vm4232, %v121, 0
    %vm4236 = vcmask 1041408
    %v4238 = vsel %vm4236, %v3548, 0
    %v4241 = vsel %vm4236, %v3549, 0
    %4243 = vmatprep.subr.bf16.mxu0 %v2867
    %4244 = vmatpush1.bf16.msra.mxu0 %v2866
    %4245 = vmatprep.subr.bf16.mxu0 %v2869
    %4246 = vmatpush1.bf16.msra.mxu0 %v2868
    %4247 = vmatprep.subr.bf16.mxu0 %v2871
    %4248 = vmatpush1.bf16.msra.mxu0 %v2870
    %4249 = vmatprep.subr.bf16.mxu0 %v2873
    %4250 = vmatpush1.bf16.msra.mxu0 %v2872
    %4251 = vmatprep.subr.bf16.mxu0 %v2875
    %4252 = vmatpush1.bf16.msra.mxu0 %v2874
    %4253 = vmatprep.subr.bf16.mxu0 %v2877
    %4254 = vmatpush1.bf16.msra.mxu0 %v2876
    %4255 = vmatprep.subr.bf16.mxu0 %v2879
    %4256 = vmatpush1.bf16.msra.mxu0 %v2878
    %4257 = vmatprep.subr.bf16.mxu0 %v2881
    %4258 = vmatpush1.bf16.msra.mxu0 %v2880
    %4259 = vmatprep.subr.bf16.mxu0 %v2883
    %4260 = vmatpush1.bf16.msra.mxu0 %v2882
    %4261 = vmatprep.subr.bf16.mxu0 %v2885
    %4262 = vmatpush1.bf16.msra.mxu0 %v2884
    %4263 = vmatprep.subr.bf16.mxu0 %v2887
    %4264 = vmatpush1.bf16.msra.mxu0 %v2886
    %4265 = vmatprep.subr.bf16.mxu0 %v2889
    %4266 = vmatpush1.bf16.msra.mxu0 %v2888
    %4267 = vmatprep.subr.bf16.mxu0 %v2891
    %4268 = vmatpush1.bf16.msra.mxu0 %v2890
    %4269 = vmatprep.subr.bf16.mxu0 %v2893
    %4270 = vmatpush1.bf16.msra.mxu0 %v2892
    %4271 = vmatprep.subr.bf16.mxu0 %v2895
    %4272 = vmatpush1.bf16.msra.mxu0 %v2894
    %4273 = vmatprep.subr.bf16.mxu0 %v2897
    %4274 = vmatpush1.bf16.msra.mxu0 %v2896
    %4275 = vmatprep.mubr.bf16.mxu0 %v80
    %4276 = vmatmul.mubr.bf16.gmra.mrb[0].mxu0 %v79
    %v4277 = vpop.f32.mrb[0].mxu0
    %v4278 = vadd.f32 %v810, %v4277
    %v4279 = vpop.f32.mrb[0].mxu0
    %v4280 = vadd.f32 %v814, %v4279
    %v4281 = vpop.f32.mrb[0].mxu0
    %v4282 = vpop.f32.mrb[0].mxu0
    %4283 = vdwg.mxu0
    %4284 = vmatprep.subr.bf16.mxu0 %v2899
    %4285 = vmatpush1.bf16.msra.mxu0 %v2898
    %4286 = vmatprep.subr.bf16.mxu0 %v2901
    %4287 = vmatpush1.bf16.msra.mxu0 %v2900
    %4288 = vmatprep.subr.bf16.mxu0 %v2903
    %4289 = vmatpush1.bf16.msra.mxu0 %v2902
    %4290 = vmatprep.subr.bf16.mxu0 %v2905
    %4291 = vmatpush1.bf16.msra.mxu0 %v2904
    %4292 = vmatprep.subr.bf16.mxu0 %v2907
    %4293 = vmatpush1.bf16.msra.mxu0 %v2906
    %4294 = vmatprep.subr.bf16.mxu0 %v2909
    %4295 = vmatpush1.bf16.msra.mxu0 %v2908
    %4296 = vmatprep.subr.bf16.mxu0 %v2911
    %4297 = vmatpush1.bf16.msra.mxu0 %v2910
    %4298 = vmatprep.subr.bf16.mxu0 %v2913
    %4299 = vmatpush1.bf16.msra.mxu0 %v2912
    %4300 = vmatprep.subr.bf16.mxu0 %v2915
    %4301 = vmatpush1.bf16.msra.mxu0 %v2914
    %4302 = vmatprep.subr.bf16.mxu0 %v2917
    %4303 = vmatpush1.bf16.msra.mxu0 %v2916
    %4304 = vmatprep.subr.bf16.mxu0 %v2919
    %4305 = vmatpush1.bf16.msra.mxu0 %v2918
    %4306 = vmatprep.subr.bf16.mxu0 %v2921
    %4307 = vmatpush1.bf16.msra.mxu0 %v2920
    %4308 = vmatprep.subr.bf16.mxu0 %v2923
    %4309 = vmatpush1.bf16.msra.mxu0 %v2922
    %4310 = vmatprep.subr.bf16.mxu0 %v2925
    %4311 = vmatpush1.bf16.msra.mxu0 %v2924
    %4312 = vmatprep.subr.bf16.mxu0 %v2927
    %4313 = vmatpush1.bf16.msra.mxu0 %v2926
    %4314 = vmatprep.subr.bf16.mxu0 %v2929
    %4315 = vmatpush1.bf16.msra.mxu0 %v2928
    %4316 = vmatprep.mubr.bf16.mxu0 %v82
    %4317 = vmatmul.mubr.bf16.gmra.mrb[0].mxu0 %v81
    %v4318 = vpop.f32.mrb[0].mxu0
    %v4319 = vadd.f32 %v4278, %v4318
    %v4320 = vpop.f32.mrb[0].mxu0
    %v4321 = vadd.f32 %v4280, %v4320
    %v4322 = vpop.f32.mrb[0].mxu0
    %v4323 = vpop.f32.mrb[0].mxu0
    %4324 = vdwg.mxu0
    %4325 = vmatprep.subr.bf16.mxu0 %v2931
    %4326 = vmatpush1.bf16.msra.mxu0 %v2930
    %4327 = vmatprep.subr.bf16.mxu0 %v2933
    %4328 = vmatpush1.bf16.msra.mxu0 %v2932
    %4329 = vmatprep.subr.bf16.mxu0 %v2935
    %4330 = vmatpush1.bf16.msra.mxu0 %v2934
    %4331 = vmatprep.subr.bf16.mxu0 %v2937
    %4332 = vmatpush1.bf16.msra.mxu0 %v2936
    %4333 = vmatprep.subr.bf16.mxu0 %v2939
    %4334 = vmatpush1.bf16.msra.mxu0 %v2938
    %4335 = vmatprep.subr.bf16.mxu0 %v2941
    %4336 = vmatpush1.bf16.msra.mxu0 %v2940
    %4337 = vmatprep.subr.bf16.mxu0 %v2943
    %4338 = vmatpush1.bf16.msra.mxu0 %v2942
    %4339 = vmatprep.subr.bf16.mxu0 %v2945
    %4340 = vmatpush1.bf16.msra.mxu0 %v2944
    %4341 = vmatprep.subr.bf16.mxu0 %v2947
    %4342 = vmatpush1.bf16.msra.mxu0 %v2946
    %4343 = vmatprep.subr.bf16.mxu0 %v2949
    %4344 = vmatpush1.bf16.msra.mxu0 %v2948
    %4345 = vmatprep.subr.bf16.mxu0 %v2951
    %4346 = vmatpush1.bf16.msra.mxu0 %v2950
    %4347 = vmatprep.subr.bf16.mxu0 %v2953
    %4348 = vmatpush1.bf16.msra.mxu0 %v2952
    %4349 = vmatprep.subr.bf16.mxu0 %v2955
    %4350 = vmatpush1.bf16.msra.mxu0 %v2954
    %4351 = vmatprep.subr.bf16.mxu0 %v2957
    %4352 = vmatpush1.bf16.msra.mxu0 %v2956
    %4353 = vmatprep.subr.bf16.mxu0 %v2959
    %4354 = vmatpush1.bf16.msra.mxu0 %v2958
    %4355 = vmatprep.subr.bf16.mxu0 %v2961
    %4356 = vmatpush1.bf16.msra.mxu0 %v2960
    %4357 = vmatprep.mubr.bf16.mxu0 %v84
    %4358 = vmatmul.mubr.bf16.gmra.mrb[0].mxu0 %v83
    %v4359 = vpop.f32.mrb[0].mxu0
    %v4360 = vadd.f32 %v4319, %v4359
    %v4361 = vpop.f32.mrb[0].mxu0
    %v4362 = vadd.f32 %v4321, %v4361
    %v4363 = vpop.f32.mrb[0].mxu0
    %v4364 = vpop.f32.mrb[0].mxu0
    %4365 = vdwg.mxu0
    %4366 = vmatprep.subr.bf16.mxu0 %v2963
    %4367 = vmatpush1.bf16.msra.mxu0 %v2962
    %4368 = vmatprep.subr.bf16.mxu0 %v2965
    %4369 = vmatpush1.bf16.msra.mxu0 %v2964
    %4370 = vmatprep.subr.bf16.mxu0 %v2967
    %4371 = vmatpush1.bf16.msra.mxu0 %v2966
    %4372 = vmatprep.subr.bf16.mxu0 %v2969
    %4373 = vmatpush1.bf16.msra.mxu0 %v2968
    %4374 = vmatprep.subr.bf16.mxu0 %v2971
    %4375 = vmatpush1.bf16.msra.mxu0 %v2970
    %4376 = vmatprep.subr.bf16.mxu0 %v2973
    %4377 = vmatpush1.bf16.msra.mxu0 %v2972
    %4378 = vmatprep.subr.bf16.mxu0 %v2975
    %4379 = vmatpush1.bf16.msra.mxu0 %v2974
    %4380 = vmatprep.subr.bf16.mxu0 %v2977
    %4381 = vmatpush1.bf16.msra.mxu0 %v2976
    %4382 = vmatprep.subr.bf16.mxu0 %v2979
    %4383 = vmatpush1.bf16.msra.mxu0 %v2978
    %4384 = vmatprep.subr.bf16.mxu0 %v2981
    %4385 = vmatpush1.bf16.msra.mxu0 %v2980
    %4386 = vmatprep.subr.bf16.mxu0 %v2983
    %4387 = vmatpush1.bf16.msra.mxu0 %v2982
    %4388 = vmatprep.subr.bf16.mxu0 %v2985
    %4389 = vmatpush1.bf16.msra.mxu0 %v2984
    %4390 = vmatprep.subr.bf16.mxu0 %v2987
    %4391 = vmatpush1.bf16.msra.mxu0 %v2986
    %4392 = vmatprep.subr.bf16.mxu0 %v2989
    %4393 = vmatpush1.bf16.msra.mxu0 %v2988
    %4394 = vmatprep.subr.bf16.mxu0 %v2991
    %4395 = vmatpush1.bf16.msra.mxu0 %v2990
    %4396 = vmatprep.subr.bf16.mxu0 %v2993
    %4397 = vmatpush1.bf16.msra.mxu0 %v2992
    %4398 = vmatprep.mubr.bf16.mxu0 %v86
    %4399 = vmatmul.mubr.bf16.gmra.mrb[0].mxu0 %v85
    %v4400 = vpop.f32.mrb[0].mxu0
    %v4401 = vadd.f32 %v4360, %v4400
    %v4402 = vpop.f32.mrb[0].mxu0
    %v4403 = vadd.f32 %v4362, %v4402
    %v4404 = vpop.f32.mrb[0].mxu0
    %v4405 = vpop.f32.mrb[0].mxu0
    %4406 = vdwg.mxu0
    %4407 = vmatprep.subr.bf16.mxu0 %v2995
    %4408 = vmatpush1.bf16.msra.mxu0 %v2994
    %4409 = vmatprep.subr.bf16.mxu0 %v2997
    %4410 = vmatpush1.bf16.msra.mxu0 %v2996
    %4411 = vmatprep.subr.bf16.mxu0 %v2999
    %4412 = vmatpush1.bf16.msra.mxu0 %v2998
    %4413 = vmatprep.subr.bf16.mxu0 %v3001
    %4414 = vmatpush1.bf16.msra.mxu0 %v3000
    %4415 = vmatprep.subr.bf16.mxu0 %v3003
    %4416 = vmatpush1.bf16.msra.mxu0 %v3002
    %4417 = vmatprep.subr.bf16.mxu0 %v3005
    %4418 = vmatpush1.bf16.msra.mxu0 %v3004
    %4419 = vmatprep.subr.bf16.mxu0 %v3007
    %4420 = vmatpush1.bf16.msra.mxu0 %v3006
    %4421 = vmatprep.subr.bf16.mxu0 %v3009
    %4422 = vmatpush1.bf16.msra.mxu0 %v3008
    %4423 = vmatprep.subr.bf16.mxu0 %v3011
    %4424 = vmatpush1.bf16.msra.mxu0 %v3010
    %4425 = vmatprep.subr.bf16.mxu0 %v3013
    %4426 = vmatpush1.bf16.msra.mxu0 %v3012
    %4427 = vmatprep.subr.bf16.mxu0 %v3015
    %4428 = vmatpush1.bf16.msra.mxu0 %v3014
    %4429 = vmatprep.subr.bf16.mxu0 %v3017
    %4430 = vmatpush1.bf16.msra.mxu0 %v3016
    %4431 = vmatprep.subr.bf16.mxu0 %v3019
    %4432 = vmatpush1.bf16.msra.mxu0 %v3018
    %4433 = vmatprep.subr.bf16.mxu0 %v3021
    %4434 = vmatpush1.bf16.msra.mxu0 %v3020
    %4435 = vmatprep.subr.bf16.mxu0 %v3023
    %4436 = vmatpush1.bf16.msra.mxu0 %v3022
    %4437 = vmatprep.subr.bf16.mxu0 %v3025
    %4438 = vmatpush1.bf16.msra.mxu0 %v3024
    %4439 = vmatprep.mubr.bf16.mxu0 %v88
    %4440 = vmatmul.mubr.bf16.gmra.mrb[0].mxu0 %v87
    %v4441 = vpop.f32.mrb[0].mxu0
    %v4442 = vadd.f32 %v4401, %v4441
    %v4443 = vpop.f32.mrb[0].mxu0
    %v4444 = vadd.f32 %v4403, %v4443
    %v4445 = vpop.f32.mrb[0].mxu0
    %v4446 = vpop.f32.mrb[0].mxu0
    %4447 = vdwg.mxu0
    %4448 = vmatprep.subr.bf16.mxu0 %v3027
    %4449 = vmatpush1.bf16.msra.mxu0 %v3026
    %4450 = vmatprep.subr.bf16.mxu0 %v3029
    %4451 = vmatpush1.bf16.msra.mxu0 %v3028
    %4452 = vmatprep.subr.bf16.mxu0 %v3031
    %4453 = vmatpush1.bf16.msra.mxu0 %v3030
    %4454 = vmatprep.subr.bf16.mxu0 %v3033
    %4455 = vmatpush1.bf16.msra.mxu0 %v3032
    %4456 = vmatprep.subr.bf16.mxu0 %v3035
    %4457 = vmatpush1.bf16.msra.mxu0 %v3034
    %4458 = vmatprep.subr.bf16.mxu0 %v3037
    %4459 = vmatpush1.bf16.msra.mxu0 %v3036
    %4460 = vmatprep.subr.bf16.mxu0 %v3039
    %4461 = vmatpush1.bf16.msra.mxu0 %v3038
    %4462 = vmatprep.subr.bf16.mxu0 %v3041
    %4463 = vmatpush1.bf16.msra.mxu0 %v3040
    %4464 = vmatprep.subr.bf16.mxu0 %v3043
    %4465 = vmatpush1.bf16.msra.mxu0 %v3042
    %4466 = vmatprep.subr.bf16.mxu0 %v3045
    %4467 = vmatpush1.bf16.msra.mxu0 %v3044
    %4468 = vmatprep.subr.bf16.mxu0 %v3047
    %4469 = vmatpush1.bf16.msra.mxu0 %v3046
    %4470 = vmatprep.subr.bf16.mxu0 %v3049
    %4471 = vmatpush1.bf16.msra.mxu0 %v3048
    %4472 = vmatprep.subr.bf16.mxu0 %v3051
    %4473 = vmatpush1.bf16.msra.mxu0 %v3050
    %4474 = vmatprep.subr.bf16.mxu0 %v3053
    %4475 = vmatpush1.bf16.msra.mxu0 %v3052
    %4476 = vmatprep.subr.bf16.mxu0 %v3055
    %4477 = vmatpush1.bf16.msra.mxu0 %v3054
    %4478 = vmatprep.subr.bf16.mxu0 %v3057
    %4479 = vmatpush1.bf16.msra.mxu0 %v3056
    %4480 = vmatprep.mubr.bf16.mxu0 %v90
    %4481 = vmatmul.mubr.bf16.gmra.mrb[0].mxu0 %v89
    %v4482 = vpop.f32.mrb[0].mxu0
    %v4483 = vadd.f32 %v4442, %v4482
    %v4484 = vpop.f32.mrb[0].mxu0
    %v4485 = vadd.f32 %v4444, %v4484
    %v4486 = vpop.f32.mrb[0].mxu0
    %v4487 = vpop.f32.mrb[0].mxu0
    %4488 = vdwg.mxu0
    %4489 = vmatprep.subr.bf16.mxu0 %v3059
    %4490 = vmatpush1.bf16.msra.mxu0 %v3058
    %4491 = vmatprep.subr.bf16.mxu0 %v3061
    %4492 = vmatpush1.bf16.msra.mxu0 %v3060
    %4493 = vmatprep.subr.bf16.mxu0 %v3063
    %4494 = vmatpush1.bf16.msra.mxu0 %v3062
    %4495 = vmatprep.subr.bf16.mxu0 %v3065
    %4496 = vmatpush1.bf16.msra.mxu0 %v3064
    %4497 = vmatprep.subr.bf16.mxu0 %v3067
    %4498 = vmatpush1.bf16.msra.mxu0 %v3066
    %4499 = vmatprep.subr.bf16.mxu0 %v3069
    %4500 = vmatpush1.bf16.msra.mxu0 %v3068
    %4501 = vmatprep.subr.bf16.mxu0 %v3071
    %4502 = vmatpush1.bf16.msra.mxu0 %v3070
    %4503 = vmatprep.subr.bf16.mxu0 %v3073
    %4504 = vmatpush1.bf16.msra.mxu0 %v3072
    %4505 = vmatprep.subr.bf16.mxu0 %v3075
    %4506 = vmatpush1.bf16.msra.mxu0 %v3074
    %4507 = vmatprep.subr.bf16.mxu0 %v3077
    %4508 = vmatpush1.bf16.msra.mxu0 %v3076
    %4509 = vmatprep.subr.bf16.mxu0 %v3079
    %4510 = vmatpush1.bf16.msra.mxu0 %v3078
    %4511 = vmatprep.subr.bf16.mxu0 %v3081
    %4512 = vmatpush1.bf16.msra.mxu0 %v3080
    %4513 = vmatprep.subr.bf16.mxu0 %v3083
    %4514 = vmatpush1.bf16.msra.mxu0 %v3082
    %4515 = vmatprep.subr.bf16.mxu0 %v3085
    %4516 = vmatpush1.bf16.msra.mxu0 %v3084
    %4517 = vmatprep.subr.bf16.mxu0 %v3087
    %4518 = vmatpush1.bf16.msra.mxu0 %v3086
    %4519 = vmatprep.subr.bf16.mxu0 %v3089
    %4520 = vmatpush1.bf16.msra.mxu0 %v3088
    %4521 = vmatprep.mubr.bf16.mxu0 %v92
    %4522 = vmatmul.mubr.bf16.gmra.mrb[0].mxu0 %v91
    %v4523 = vpop.f32.mrb[0].mxu0
    %v4524 = vadd.f32 %v4483, %v4523
    %v4525 = vpop.f32.mrb[0].mxu0
    %v4526 = vadd.f32 %v4485, %v4525
    %v4527 = vpop.f32.mrb[0].mxu0
    %v4528 = vpop.f32.mrb[0].mxu0
    %4529 = vdwg.mxu0
    %4530 = vmatprep.subr.bf16.mxu0 %v3091
    %4531 = vmatpush1.bf16.msra.mxu0 %v3090
    %4532 = vmatprep.subr.bf16.mxu0 %v3093
    %4533 = vmatpush1.bf16.msra.mxu0 %v3092
    %4534 = vmatprep.subr.bf16.mxu0 %v3095
    %4535 = vmatpush1.bf16.msra.mxu0 %v3094
    %4536 = vmatprep.subr.bf16.mxu0 %v3097
    %4537 = vmatpush1.bf16.msra.mxu0 %v3096
    %4538 = vmatprep.subr.bf16.mxu0 %v3099
    %4539 = vmatpush1.bf16.msra.mxu0 %v3098
    %4540 = vmatprep.subr.bf16.mxu0 %v3101
    %4541 = vmatpush1.bf16.msra.mxu0 %v3100
    %4542 = vmatprep.subr.bf16.mxu0 %v3103
    %4543 = vmatpush1.bf16.msra.mxu0 %v3102
    %4544 = vmatprep.subr.bf16.mxu0 %v3105
    %4545 = vmatpush1.bf16.msra.mxu0 %v3104
    %4546 = vmatprep.subr.bf16.mxu0 %v3107
    %4547 = vmatpush1.bf16.msra.mxu0 %v3106
    %4548 = vmatprep.subr.bf16.mxu0 %v3109
    %4549 = vmatpush1.bf16.msra.mxu0 %v3108
    %4550 = vmatprep.subr.bf16.mxu0 %v3111
    %4551 = vmatpush1.bf16.msra.mxu0 %v3110
    %4552 = vmatprep.subr.bf16.mxu0 %v3113
    %4553 = vmatpush1.bf16.msra.mxu0 %v3112
    %4554 = vmatprep.subr.bf16.mxu0 %v3115
    %4555 = vmatpush1.bf16.msra.mxu0 %v3114
    %4556 = vmatprep.subr.bf16.mxu0 %v3117
    %4557 = vmatpush1.bf16.msra.mxu0 %v3116
    %4558 = vmatprep.subr.bf16.mxu0 %v3119
    %4559 = vmatpush1.bf16.msra.mxu0 %v3118
    %4560 = vmatprep.subr.bf16.mxu0 %v3121
    %4561 = vmatpush1.bf16.msra.mxu0 %v3120
    %4562 = vmatprep.mubr.bf16.mxu0 %v94
    %4563 = vmatmul.mubr.bf16.gmra.mrb[0].mxu0 %v93
    %v4564 = vpop.f32.mrb[0].mxu0
    %v4565 = vadd.f32 %v4524, %v4564
    %v4566 = vpop.f32.mrb[0].mxu0
    %v4567 = vadd.f32 %v4526, %v4566
    %v4568 = vpop.f32.mrb[0].mxu0
    %v4569 = vpop.f32.mrb[0].mxu0
    %4570 = vdwg.mxu0
    %4571 = vmatprep.subr.bf16.mxu0 %v3123
    %4572 = vmatpush1.bf16.msra.mxu0 %v3122
    %4573 = vmatprep.subr.bf16.mxu0 %v3125
    %4574 = vmatpush1.bf16.msra.mxu0 %v3124
    %4575 = vmatprep.subr.bf16.mxu0 %v3127
    %4576 = vmatpush1.bf16.msra.mxu0 %v3126
    %4577 = vmatprep.subr.bf16.mxu0 %v3129
    %4578 = vmatpush1.bf16.msra.mxu0 %v3128
    %4579 = vmatprep.subr.bf16.mxu0 %v3131
    %4580 = vmatpush1.bf16.msra.mxu0 %v3130
    %4581 = vmatprep.subr.bf16.mxu0 %v3133
    %4582 = vmatpush1.bf16.msra.mxu0 %v3132
    %4583 = vmatprep.subr.bf16.mxu0 %v3135
    %4584 = vmatpush1.bf16.msra.mxu0 %v3134
    %4585 = vmatprep.subr.bf16.mxu0 %v3137
    %4586 = vmatpush1.bf16.msra.mxu0 %v3136
    %4587 = vmatprep.subr.bf16.mxu0 %v3139
    %4588 = vmatpush1.bf16.msra.mxu0 %v3138
    %4589 = vmatprep.subr.bf16.mxu0 %v3141
    %4590 = vmatpush1.bf16.msra.mxu0 %v3140
    %4591 = vmatprep.subr.bf16.mxu0 %v3143
    %4592 = vmatpush1.bf16.msra.mxu0 %v3142
    %4593 = vmatprep.subr.bf16.mxu0 %v3145
    %4594 = vmatpush1.bf16.msra.mxu0 %v3144
    %4595 = vmatprep.subr.bf16.mxu0 %v3147
    %4596 = vmatpush1.bf16.msra.mxu0 %v3146
    %4597 = vmatprep.subr.bf16.mxu0 %v3149
    %4598 = vmatpush1.bf16.msra.mxu0 %v3148
    %4599 = vmatprep.subr.bf16.mxu0 %v3151
    %4600 = vmatpush1.bf16.msra.mxu0 %v3150
    %4601 = vmatprep.subr.bf16.mxu0 %v3153
    %4602 = vmatpush1.bf16.msra.mxu0 %v3152
    %4603 = vmatprep.mubr.bf16.mxu0 %v96
    %4604 = vmatmul.mubr.bf16.gmra.mrb[0].mxu0 %v95
    %v4605 = vpop.f32.mrb[0].mxu0
    %v4606 = vadd.f32 %v4565, %v4605
    %v4607 = vpop.f32.mrb[0].mxu0
    %v4608 = vadd.f32 %v4567, %v4607
    %v4609 = vpop.f32.mrb[0].mxu0
    %v4610 = vpop.f32.mrb[0].mxu0
    %4611 = vdwg.mxu0
    %4612 = vmatprep.subr.bf16.mxu0 %v3155
    %4613 = vmatpush1.bf16.msra.mxu0 %v3154
    %4614 = vmatprep.subr.bf16.mxu0 %v3157
    %4615 = vmatpush1.bf16.msra.mxu0 %v3156
    %4616 = vmatprep.subr.bf16.mxu0 %v3159
    %4617 = vmatpush1.bf16.msra.mxu0 %v3158
    %4618 = vmatprep.subr.bf16.mxu0 %v3161
    %4619 = vmatpush1.bf16.msra.mxu0 %v3160
    %4620 = vmatprep.subr.bf16.mxu0 %v3163
    %4621 = vmatpush1.bf16.msra.mxu0 %v3162
    %4622 = vmatprep.subr.bf16.mxu0 %v3165
    %4623 = vmatpush1.bf16.msra.mxu0 %v3164
    %4624 = vmatprep.subr.bf16.mxu0 %v3167
    %4625 = vmatpush1.bf16.msra.mxu0 %v3166
    %4626 = vmatprep.subr.bf16.mxu0 %v3169
    %4627 = vmatpush1.bf16.msra.mxu0 %v3168
    %4628 = vmatprep.subr.bf16.mxu0 %v3171
    %4629 = vmatpush1.bf16.msra.mxu0 %v3170
    %4630 = vmatprep.subr.bf16.mxu0 %v3173
    %4631 = vmatpush1.bf16.msra.mxu0 %v3172
    %4632 = vmatprep.subr.bf16.mxu0 %v3175
    %4633 = vmatpush1.bf16.msra.mxu0 %v3174
    %4634 = vmatprep.subr.bf16.mxu0 %v3177
    %4635 = vmatpush1.bf16.msra.mxu0 %v3176
    %4636 = vmatprep.subr.bf16.mxu0 %v3179
    %4637 = vmatpush1.bf16.msra.mxu0 %v3178
    %4638 = vmatprep.subr.bf16.mxu0 %v3181
    %4639 = vmatpush1.bf16.msra.mxu0 %v3180
    %4640 = vmatprep.subr.bf16.mxu0 %v3183
    %4641 = vmatpush1.bf16.msra.mxu0 %v3182
    %4642 = vmatprep.subr.bf16.mxu0 %v3185
    %4643 = vmatpush1.bf16.msra.mxu0 %v3184
    %4644 = vmatprep.mubr.bf16.mxu0 %v98
    %4645 = vmatmul.mubr.bf16.gmra.mrb[0].mxu0 %v97
    %v4646 = vpop.f32.mrb[0].mxu0
    %v4647 = vadd.f32 %v4606, %v4646
    %v4648 = vpop.f32.mrb[0].mxu0
    %v4649 = vadd.f32 %v4608, %v4648
    %v4650 = vpop.f32.mrb[0].mxu0
    %v4651 = vpop.f32.mrb[0].mxu0
    %4652 = vdwg.mxu0
    %4653 = vmatprep.subr.bf16.mxu0 %v3187
    %4654 = vmatpush1.bf16.msra.mxu0 %v3186
    %4655 = vmatprep.subr.bf16.mxu0 %v3189
    %4656 = vmatpush1.bf16.msra.mxu0 %v3188
    %4657 = vmatprep.subr.bf16.mxu0 %v3191
    %4658 = vmatpush1.bf16.msra.mxu0 %v3190
    %4659 = vmatprep.subr.bf16.mxu0 %v3193
    %4660 = vmatpush1.bf16.msra.mxu0 %v3192
    %4661 = vmatprep.subr.bf16.mxu0 %v3195
    %4662 = vmatpush1.bf16.msra.mxu0 %v3194
    %4663 = vmatprep.subr.bf16.mxu0 %v3197
    %4664 = vmatpush1.bf16.msra.mxu0 %v3196
    %4665 = vmatprep.subr.bf16.mxu0 %v3199
    %4666 = vmatpush1.bf16.msra.mxu0 %v3198
    %4667 = vmatprep.subr.bf16.mxu0 %v3201
    %4668 = vmatpush1.bf16.msra.mxu0 %v3200
    %4669 = vmatprep.subr.bf16.mxu0 %v3203
    %4670 = vmatpush1.bf16.msra.mxu0 %v3202
    %4671 = vmatprep.subr.bf16.mxu0 %v3205
    %4672 = vmatpush1.bf16.msra.mxu0 %v3204
    %4673 = vmatprep.subr.bf16.mxu0 %v3207
    %4674 = vmatpush1.bf16.msra.mxu0 %v3206
    %4675 = vmatprep.subr.bf16.mxu0 %v3209
    %4676 = vmatpush1.bf16.msra.mxu0 %v3208
    %4677 = vmatprep.subr.bf16.mxu0 %v3211
    %4678 = vmatpush1.bf16.msra.mxu0 %v3210
    %4679 = vmatprep.subr.bf16.mxu0 %v3213
    %4680 = vmatpush1.bf16.msra.mxu0 %v3212
    %4681 = vmatprep.subr.bf16.mxu0 %v3215
    %4682 = vmatpush1.bf16.msra.mxu0 %v3214
    %4683 = vmatprep.subr.bf16.mxu0 %v3217
    %4684 = vmatpush1.bf16.msra.mxu0 %v3216
    %4685 = vmatprep.mubr.bf16.mxu0 %v100
    %4686 = vmatmul.mubr.bf16.gmra.mrb[0].mxu0 %v99
    %v4687 = vpop.f32.mrb[0].mxu0
    %v4688 = vadd.f32 %v4647, %v4687
    %v4689 = vpop.f32.mrb[0].mxu0
    %v4690 = vadd.f32 %v4649, %v4689
    %v4691 = vpop.f32.mrb[0].mxu0
    %v4692 = vpop.f32.mrb[0].mxu0
    %4693 = vdwg.mxu0
    %4694 = vmatprep.subr.bf16.mxu0 %v3219
    %4695 = vmatpush1.bf16.msra.mxu0 %v3218
    %4696 = vmatprep.subr.bf16.mxu0 %v3221
    %4697 = vmatpush1.bf16.msra.mxu0 %v3220
    %4698 = vmatprep.subr.bf16.mxu0 %v3223
    %4699 = vmatpush1.bf16.msra.mxu0 %v3222
    %4700 = vmatprep.subr.bf16.mxu0 %v3225
    %4701 = vmatpush1.bf16.msra.mxu0 %v3224
    %4702 = vmatprep.subr.bf16.mxu0 %v3227
    %4703 = vmatpush1.bf16.msra.mxu0 %v3226
    %4704 = vmatprep.subr.bf16.mxu0 %v3229
    %4705 = vmatpush1.bf16.msra.mxu0 %v3228
    %4706 = vmatprep.subr.bf16.mxu0 %v3231
    %4707 = vmatpush1.bf16.msra.mxu0 %v3230
    %4708 = vmatprep.subr.bf16.mxu0 %v3233
    %4709 = vmatpush1.bf16.msra.mxu0 %v3232
    %4710 = vmatprep.subr.bf16.mxu0 %v3235
    %4711 = vmatpush1.bf16.msra.mxu0 %v3234
    %4712 = vmatprep.subr.bf16.mxu0 %v3237
    %4713 = vmatpush1.bf16.msra.mxu0 %v3236
    %4714 = vmatprep.subr.bf16.mxu0 %v3239
    %4715 = vmatpush1.bf16.msra.mxu0 %v3238
    %4716 = vmatprep.subr.bf16.mxu0 %v3241
    %4717 = vmatpush1.bf16.msra.mxu0 %v3240
    %4718 = vmatprep.subr.bf16.mxu0 %v3243
    %4719 = vmatpush1.bf16.msra.mxu0 %v3242
    %4720 = vmatprep.subr.bf16.mxu0 %v3245
    %4721 = vmatpush1.bf16.msra.mxu0 %v3244
    %4722 = vmatprep.subr.bf16.mxu0 %v3247
    %4723 = vmatpush1.bf16.msra.mxu0 %v3246
    %4724 = vmatprep.subr.bf16.mxu0 %v3249
    %4725 = vmatpush1.bf16.msra.mxu0 %v3248
    %4726 = vmatprep.mubr.bf16.mxu0 %v102
    %4727 = vmatmul.mubr.bf16.gmra.mrb[0].mxu0 %v101
    %v4728 = vpop.f32.mrb[0].mxu0
    %v4729 = vadd.f32 %v4688, %v4728
    %v4730 = vpop.f32.mrb[0].mxu0
    %v4731 = vadd.f32 %v4690, %v4730
    %v4732 = vpop.f32.mrb[0].mxu0
    %v4733 = vpop.f32.mrb[0].mxu0
    %4734 = vdwg.mxu0
    %4735 = vmatprep.subr.bf16.mxu0 %v3251
    %4736 = vmatpush1.bf16.msra.mxu0 %v3250
    %4737 = vmatprep.subr.bf16.mxu0 %v3253
    %4738 = vmatpush1.bf16.msra.mxu0 %v3252
    %4739 = vmatprep.subr.bf16.mxu0 %v3255
    %4740 = vmatpush1.bf16.msra.mxu0 %v3254
    %4741 = vmatprep.subr.bf16.mxu0 %v3257
    %4742 = vmatpush1.bf16.msra.mxu0 %v3256
    %4743 = vmatprep.subr.bf16.mxu0 %v3259
    %4744 = vmatpush1.bf16.msra.mxu0 %v3258
    %4745 = vmatprep.subr.bf16.mxu0 %v3261
    %4746 = vmatpush1.bf16.msra.mxu0 %v3260
    %4747 = vmatprep.subr.bf16.mxu0 %v3263
    %4748 = vmatpush1.bf16.msra.mxu0 %v3262
    %4749 = vmatprep.subr.bf16.mxu0 %v3265
    %4750 = vmatpush1.bf16.msra.mxu0 %v3264
    %4751 = vmatprep.subr.bf16.mxu0 %v3267
    %4752 = vmatpush1.bf16.msra.mxu0 %v3266
    %4753 = vmatprep.subr.bf16.mxu0 %v3269
    %4754 = vmatpush1.bf16.msra.mxu0 %v3268
    %4755 = vmatprep.subr.bf16.mxu0 %v3271
    %4756 = vmatpush1.bf16.msra.mxu0 %v3270
    %4757 = vmatprep.subr.bf16.mxu0 %v3273
    %4758 = vmatpush1.bf16.msra.mxu0 %v3272
    %4759 = vmatprep.subr.bf16.mxu0 %v3275
    %4760 = vmatpush1.bf16.msra.mxu0 %v3274
    %4761 = vmatprep.subr.bf16.mxu0 %v3277
    %4762 = vmatpush1.bf16.msra.mxu0 %v3276
    %4763 = vmatprep.subr.bf16.mxu0 %v3279
    %4764 = vmatpush1.bf16.msra.mxu0 %v3278
    %4765 = vmatprep.subr.bf16.mxu0 %v3281
    %4766 = vmatpush1.bf16.msra.mxu0 %v3280
    %4767 = vmatprep.mubr.bf16.mxu0 %v104
    %4768 = vmatmul.mubr.bf16.gmra.mrb[0].mxu0 %v103
    %v4769 = vpop.f32.mrb[0].mxu0
    %v4770 = vadd.f32 %v4729, %v4769
    %v4771 = vpop.f32.mrb[0].mxu0
    %v4772 = vadd.f32 %v4731, %v4771
    %v4773 = vpop.f32.mrb[0].mxu0
    %v4774 = vpop.f32.mrb[0].mxu0
    %4775 = vdwg.mxu0
    %4776 = vmatprep.subr.bf16.mxu0 %v3283
    %4777 = vmatpush1.bf16.msra.mxu0 %v3282
    %4778 = vmatprep.subr.bf16.mxu0 %v3285
    %4779 = vmatpush1.bf16.msra.mxu0 %v3284
    %4780 = vmatprep.subr.bf16.mxu0 %v3287
    %4781 = vmatpush1.bf16.msra.mxu0 %v3286
    %4782 = vmatprep.subr.bf16.mxu0 %v3289
    %4783 = vmatpush1.bf16.msra.mxu0 %v3288
    %4784 = vmatprep.subr.bf16.mxu0 %v3291
    %4785 = vmatpush1.bf16.msra.mxu0 %v3290
    %4786 = vmatprep.subr.bf16.mxu0 %v3293
    %4787 = vmatpush1.bf16.msra.mxu0 %v3292
    %4788 = vmatprep.subr.bf16.mxu0 %v3295
    %4789 = vmatpush1.bf16.msra.mxu0 %v3294
    %4790 = vmatprep.subr.bf16.mxu0 %v3297
    %4791 = vmatpush1.bf16.msra.mxu0 %v3296
    %4792 = vmatprep.subr.bf16.mxu0 %v3299
    %4793 = vmatpush1.bf16.msra.mxu0 %v3298
    %4794 = vmatprep.subr.bf16.mxu0 %v3301
    %4795 = vmatpush1.bf16.msra.mxu0 %v3300
    %4796 = vmatprep.subr.bf16.mxu0 %v3303
    %4797 = vmatpush1.bf16.msra.mxu0 %v3302
    %4798 = vmatprep.subr.bf16.mxu0 %v3305
    %4799 = vmatpush1.bf16.msra.mxu0 %v3304
    %4800 = vmatprep.subr.bf16.mxu0 %v3307
    %4801 = vmatpush1.bf16.msra.mxu0 %v3306
    %4802 = vmatprep.subr.bf16.mxu0 %v3309
    %4803 = vmatpush1.bf16.msra.mxu0 %v3308
    %4804 = vmatprep.subr.bf16.mxu0 %v3311
    %4805 = vmatpush1.bf16.msra.mxu0 %v3310
    %4806 = vmatprep.subr.bf16.mxu0 %v3313
    %4807 = vmatpush1.bf16.msra.mxu0 %v3312
    %4808 = vmatprep.mubr.bf16.mxu0 %v106
    %4809 = vmatmul.mubr.bf16.gmra.mrb[0].mxu0 %v105
    %v4810 = vpop.f32.mrb[0].mxu0
    %v4811 = vadd.f32 %v4770, %v4810
    %v4812 = vpop.f32.mrb[0].mxu0
    %v4813 = vadd.f32 %v4772, %v4812
    %v4814 = vpop.f32.mrb[0].mxu0
    %v4815 = vpop.f32.mrb[0].mxu0
    %4816 = vdwg.mxu0
    %4817 = vmatprep.subr.bf16.mxu0 %v3315
    %4818 = vmatpush1.bf16.msra.mxu0 %v3314
    %4819 = vmatprep.subr.bf16.mxu0 %v3317
    %4820 = vmatpush1.bf16.msra.mxu0 %v3316
    %4821 = vmatprep.subr.bf16.mxu0 %v3319
    %4822 = vmatpush1.bf16.msra.mxu0 %v3318
    %4823 = vmatprep.subr.bf16.mxu0 %v3321
    %4824 = vmatpush1.bf16.msra.mxu0 %v3320
    %4825 = vmatprep.subr.bf16.mxu0 %v3323
    %4826 = vmatpush1.bf16.msra.mxu0 %v3322
    %4827 = vmatprep.subr.bf16.mxu0 %v3325
    %4828 = vmatpush1.bf16.msra.mxu0 %v3324
    %4829 = vmatprep.subr.bf16.mxu0 %v3327
    %4830 = vmatpush1.bf16.msra.mxu0 %v3326
    %4831 = vmatprep.subr.bf16.mxu0 %v3329
    %4832 = vmatpush1.bf16.msra.mxu0 %v3328
    %4833 = vmatprep.subr.bf16.mxu0 %v3331
    %4834 = vmatpush1.bf16.msra.mxu0 %v3330
    %4835 = vmatprep.subr.bf16.mxu0 %v3333
    %4836 = vmatpush1.bf16.msra.mxu0 %v3332
    %4837 = vmatprep.subr.bf16.mxu0 %v3335
    %4838 = vmatpush1.bf16.msra.mxu0 %v3334
    %4839 = vmatprep.subr.bf16.mxu0 %v3337
    %4840 = vmatpush1.bf16.msra.mxu0 %v3336
    %4841 = vmatprep.subr.bf16.mxu0 %v3339
    %4842 = vmatpush1.bf16.msra.mxu0 %v3338
    %4843 = vmatprep.subr.bf16.mxu0 %v3341
    %4844 = vmatpush1.bf16.msra.mxu0 %v3340
    %4845 = vmatprep.subr.bf16.mxu0 %v3343
    %4846 = vmatpush1.bf16.msra.mxu0 %v3342
    %4847 = vmatprep.subr.bf16.mxu0 %v3345
    %4848 = vmatpush1.bf16.msra.mxu0 %v3344
    %4849 = vmatprep.mubr.bf16.mxu0 %v108
    %4850 = vmatmul.mubr.bf16.gmra.mrb[0].mxu0 %v107
    %v4851 = vpop.f32.mrb[0].mxu0
    %v4852 = vadd.f32 %v4811, %v4851
    %v4853 = vpop.f32.mrb[0].mxu0
    %v4854 = vadd.f32 %v4813, %v4853
    %v4855 = vpop.f32.mrb[0].mxu0
    %v4856 = vpop.f32.mrb[0].mxu0
    %4857 = vdwg.mxu0
    %4858 = vmatprep.subr.bf16.mxu0 %v3347
    %4859 = vmatpush1.bf16.msra.mxu0 %v3346
    %4860 = vmatprep.subr.bf16.mxu0 %v3349
    %4861 = vmatpush1.bf16.msra.mxu0 %v3348
    %4862 = vmatprep.subr.bf16.mxu0 %v3351
    %4863 = vmatpush1.bf16.msra.mxu0 %v3350
    %4864 = vmatprep.subr.bf16.mxu0 %v3353
    %4865 = vmatpush1.bf16.msra.mxu0 %v3352
    %4866 = vmatprep.subr.bf16.mxu0 %v3355
    %4867 = vmatpush1.bf16.msra.mxu0 %v3354
    %4868 = vmatprep.subr.bf16.mxu0 %v3357
    %4869 = vmatpush1.bf16.msra.mxu0 %v3356
    %4870 = vmatprep.subr.bf16.mxu0 %v3359
    %4871 = vmatpush1.bf16.msra.mxu0 %v3358
    %4872 = vmatprep.subr.bf16.mxu0 %v3361
    %4873 = vmatpush1.bf16.msra.mxu0 %v3360
    %4874 = vmatprep.subr.bf16.mxu0 %v3363
    %4875 = vmatpush1.bf16.msra.mxu0 %v3362
    %4876 = vmatprep.subr.bf16.mxu0 %v3365
    %4877 = vmatpush1.bf16.msra.mxu0 %v3364
    %4878 = vmatprep.subr.bf16.mxu0 %v3367
    %4879 = vmatpush1.bf16.msra.mxu0 %v3366
    %4880 = vmatprep.subr.bf16.mxu0 %v3369
    %4881 = vmatpush1.bf16.msra.mxu0 %v3368
    %4882 = vmatprep.subr.bf16.mxu0 %v3371
    %4883 = vmatpush1.bf16.msra.mxu0 %v3370
    %4884 = vmatprep.subr.bf16.mxu0 %v3373
    %4885 = vmatpush1.bf16.msra.mxu0 %v3372
    %4886 = vmatprep.subr.bf16.mxu0 %v3375
    %4887 = vmatpush1.bf16.msra.mxu0 %v3374
    %4888 = vmatprep.subr.bf16.mxu0 %v3377
    %4889 = vmatpush1.bf16.msra.mxu0 %v3376
    %4890 = vmatprep.mubr.bf16.mxu0 %v110
    %4891 = vmatmul.mubr.bf16.gmra.mrb[0].mxu0 %v109
    %v4892 = vpop.f32.mrb[0].mxu0
    %v4893 = vadd.f32 %v4852, %v4892
    %v4894 = vpop.f32.mrb[0].mxu0
    %v4895 = vadd.f32 %v4854, %v4894
    %v4896 = vpop.f32.mrb[0].mxu0
    %v4897 = vpop.f32.mrb[0].mxu0
    %4898 = vdwg.mxu0
    %4899 = vmatprep.subr.bf16.mxu0 %v3379
    %4900 = vmatpush1.bf16.msra.mxu0 %v3378
    %4901 = vmatprep.subr.bf16.mxu0 %v3381
    %4902 = vmatpush1.bf16.msra.mxu0 %v3380
    %4903 = vmatprep.subr.bf16.mxu0 %v3383
    %4904 = vmatpush1.bf16.msra.mxu0 %v3382
    %4905 = vmatprep.subr.bf16.mxu0 %v3385
    %4906 = vmatpush1.bf16.msra.mxu0 %v3384
    %4907 = vmatprep.subr.bf16.mxu0 %v3387
    %4908 = vmatpush1.bf16.msra.mxu0 %v3386
    %4909 = vmatprep.subr.bf16.mxu0 %v3389
    %4910 = vmatpush1.bf16.msra.mxu0 %v3388
    %4911 = vmatprep.subr.bf16.mxu0 %v3391
    %4912 = vmatpush1.bf16.msra.mxu0 %v3390
    %4913 = vmatprep.subr.bf16.mxu0 %v3393
    %4914 = vmatpush1.bf16.msra.mxu0 %v3392
    %4915 = vmatprep.subr.bf16.mxu0 %v3395
    %4916 = vmatpush1.bf16.msra.mxu0 %v3394
    %4917 = vmatprep.subr.bf16.mxu0 %v3397
    %4918 = vmatpush1.bf16.msra.mxu0 %v3396
    %4919 = vmatprep.subr.bf16.mxu0 %v3399
    %4920 = vmatpush1.bf16.msra.mxu0 %v3398
    %4921 = vmatprep.subr.bf16.mxu0 %v3401
    %4922 = vmatpush1.bf16.msra.mxu0 %v3400
    %4923 = vmatprep.subr.bf16.mxu0 %v3403
    %4924 = vmatpush1.bf16.msra.mxu0 %v3402
    %4925 = vmatprep.subr.bf16.mxu0 %v3405
    %4926 = vmatpush1.bf16.msra.mxu0 %v3404
    %4927 = vmatprep.subr.bf16.mxu0 %v3407
    %4928 = vmatpush1.bf16.msra.mxu0 %v3406
    %4929 = vmatprep.subr.bf16.mxu0 %v3409
    %4930 = vmatpush1.bf16.msra.mxu0 %v3408
    %4931 = vmatprep.mubr.bf16.mxu0 %v112
    %4932 = vmatmul.mubr.bf16.gmra.mrb[0].mxu0 %v111
    %v4933 = vpop.f32.mrb[0].mxu0
    %v4934 = vadd.f32 %v4893, %v4933
    %v4935 = vpop.f32.mrb[0].mxu0
    %v4936 = vadd.f32 %v4895, %v4935
    %v4937 = vpop.f32.mrb[0].mxu0
    %v4938 = vpop.f32.mrb[0].mxu0
    %4939 = vdwg.mxu0
    %4940 = vmatprep.subr.bf16.mxu0 %v3411
    %4941 = vmatpush1.bf16.msra.mxu0 %v3410
    %4942 = vmatprep.subr.bf16.mxu0 %v3413
    %4943 = vmatpush1.bf16.msra.mxu0 %v3412
    %4944 = vmatprep.subr.bf16.mxu0 %v3415
    %4945 = vmatpush1.bf16.msra.mxu0 %v3414
    %4946 = vmatprep.subr.bf16.mxu0 %v3417
    %4947 = vmatpush1.bf16.msra.mxu0 %v3416
    %4948 = vmatprep.subr.bf16.mxu0 %v3419
    %4949 = vmatpush1.bf16.msra.mxu0 %v3418
    %4950 = vmatprep.subr.bf16.mxu0 %v3421
    %4951 = vmatpush1.bf16.msra.mxu0 %v3420
    %4952 = vmatprep.subr.bf16.mxu0 %v3423
    %4953 = vmatpush1.bf16.msra.mxu0 %v3422
    %4954 = vmatprep.subr.bf16.mxu0 %v3425
    %4955 = vmatpush1.bf16.msra.mxu0 %v3424
    %4956 = vmatprep.subr.bf16.mxu0 %v3427
    %4957 = vmatpush1.bf16.msra.mxu0 %v3426
    %4958 = vmatprep.subr.bf16.mxu0 %v3429
    %4959 = vmatpush1.bf16.msra.mxu0 %v3428
    %4960 = vmatprep.subr.bf16.mxu0 %v3431
    %4961 = vmatpush1.bf16.msra.mxu0 %v3430
    %4962 = vmatprep.subr.bf16.mxu0 %v3433
    %4963 = vmatpush1.bf16.msra.mxu0 %v3432
    %4964 = vmatprep.subr.bf16.mxu0 %v3435
    %4965 = vmatpush1.bf16.msra.mxu0 %v3434
    %4966 = vmatprep.subr.bf16.mxu0 %v3437
    %4967 = vmatpush1.bf16.msra.mxu0 %v3436
    %4968 = vmatprep.subr.bf16.mxu0 %v3439
    %4969 = vmatpush1.bf16.msra.mxu0 %v3438
    %4970 = vmatprep.subr.bf16.mxu0 %v3441
    %4971 = vmatpush1.bf16.msra.mxu0 %v3440
    %4972 = vmatprep.mubr.bf16.mxu0 %v114
    %4973 = vmatmul.mubr.bf16.gmra.mrb[0].mxu0 %v113
    %v4974 = vpop.f32.mrb[0].mxu0
    %v4975 = vadd.f32 %v4934, %v4974
    %v4976 = vpop.f32.mrb[0].mxu0
    %v4977 = vadd.f32 %v4936, %v4976
    %v4978 = vpop.f32.mrb[0].mxu0
    %v4979 = vpop.f32.mrb[0].mxu0
    %4980 = vdwg.mxu0
    %4981 = vmatprep.subr.bf16.mxu0 %v3443
    %4982 = vmatpush1.bf16.msra.mxu0 %v3442
    %4983 = vmatprep.subr.bf16.mxu0 %v3445
    %4984 = vmatpush1.bf16.msra.mxu0 %v3444
    %4985 = vmatprep.subr.bf16.mxu0 %v3447
    %4986 = vmatpush1.bf16.msra.mxu0 %v3446
    %4987 = vmatprep.subr.bf16.mxu0 %v3449
    %4988 = vmatpush1.bf16.msra.mxu0 %v3448
    %4989 = vmatprep.subr.bf16.mxu0 %v3451
    %4990 = vmatpush1.bf16.msra.mxu0 %v3450
    %4991 = vmatprep.subr.bf16.mxu0 %v3453
    %4992 = vmatpush1.bf16.msra.mxu0 %v3452
    %4993 = vmatprep.subr.bf16.mxu0 %v3455
    %4994 = vmatpush1.bf16.msra.mxu0 %v3454
    %4995 = vmatprep.subr.bf16.mxu0 %v3457
    %4996 = vmatpush1.bf16.msra.mxu0 %v3456
    %4997 = vmatprep.subr.bf16.mxu0 %v3459
    %4998 = vmatpush1.bf16.msra.mxu0 %v3458
    %4999 = vmatprep.subr.bf16.mxu0 %v3461
    %5000 = vmatpush1.bf16.msra.mxu0 %v3460
    %5001 = vmatprep.subr.bf16.mxu0 %v3463
    %5002 = vmatpush1.bf16.msra.mxu0 %v3462
    %5003 = vmatprep.subr.bf16.mxu0 %v3465
    %5004 = vmatpush1.bf16.msra.mxu0 %v3464
    %5005 = vmatprep.subr.bf16.mxu0 %v3467
    %5006 = vmatpush1.bf16.msra.mxu0 %v3466
    %5007 = vmatprep.subr.bf16.mxu0 %v3469
    %5008 = vmatpush1.bf16.msra.mxu0 %v3468
    %5009 = vmatprep.subr.bf16.mxu0 %v3471
    %5010 = vmatpush1.bf16.msra.mxu0 %v3470
    %5011 = vmatprep.subr.bf16.mxu0 %v3473
    %5012 = vmatpush1.bf16.msra.mxu0 %v3472
    %5013 = vmatprep.mubr.bf16.mxu0 %v116
    %5014 = vmatmul.mubr.bf16.gmra.mrb[0].mxu0 %v115
    %v5015 = vpop.f32.mrb[0].mxu0
    %v5016 = vadd.f32 %v4975, %v5015
    %v5017 = vpop.f32.mrb[0].mxu0
    %v5018 = vadd.f32 %v4977, %v5017
    %v5019 = vpop.f32.mrb[0].mxu0
    %v5020 = vpop.f32.mrb[0].mxu0
    %5021 = vdwg.mxu0
    %5022 = vmatprep.subr.bf16.mxu0 %v3475
    %5023 = vmatpush1.bf16.msra.mxu0 %v3474
    %5024 = vmatprep.subr.bf16.mxu0 %v3477
    %5025 = vmatpush1.bf16.msra.mxu0 %v3476
    %5026 = vmatprep.subr.bf16.mxu0 %v3479
    %5027 = vmatpush1.bf16.msra.mxu0 %v3478
    %5028 = vmatprep.subr.bf16.mxu0 %v3481
    %5029 = vmatpush1.bf16.msra.mxu0 %v3480
    %5030 = vmatprep.subr.bf16.mxu0 %v3483
    %5031 = vmatpush1.bf16.msra.mxu0 %v3482
    %5032 = vmatprep.subr.bf16.mxu0 %v3485
    %5033 = vmatpush1.bf16.msra.mxu0 %v3484
    %5034 = vmatprep.subr.bf16.mxu0 %v3487
    %5035 = vmatpush1.bf16.msra.mxu0 %v3486
    %5036 = vmatprep.subr.bf16.mxu0 %v3489
    %5037 = vmatpush1.bf16.msra.mxu0 %v3488
    %5038 = vmatprep.subr.bf16.mxu0 %v3491
    %5039 = vmatpush1.bf16.msra.mxu0 %v3490
    %5040 = vmatprep.subr.bf16.mxu0 %v3493
    %5041 = vmatpush1.bf16.msra.mxu0 %v3492
    %5042 = vmatprep.subr.bf16.mxu0 %v3495
    %5043 = vmatpush1.bf16.msra.mxu0 %v3494
    %5044 = vmatprep.subr.bf16.mxu0 %v3497
    %5045 = vmatpush1.bf16.msra.mxu0 %v3496
    %5046 = vmatprep.subr.bf16.mxu0 %v3499
    %5047 = vmatpush1.bf16.msra.mxu0 %v3498
    %5048 = vmatprep.subr.bf16.mxu0 %v3501
    %5049 = vmatpush1.bf16.msra.mxu0 %v3500
    %5050 = vmatprep.subr.bf16.mxu0 %v3503
    %5051 = vmatpush1.bf16.msra.mxu0 %v3502
    %5052 = vmatprep.subr.bf16.mxu0 %v3505
    %5053 = vmatpush1.bf16.msra.mxu0 %v3504
    %5054 = vmatprep.mubr.bf16.mxu0 %v118
    %5055 = vmatmul.mubr.bf16.gmra.mrb[0].mxu0 %v117
    %v5056 = vpop.f32.mrb[0].mxu0
    %v5057 = vadd.f32 %v5016, %v5056
    %v5058 = vpop.f32.mrb[0].mxu0
    %v5059 = vadd.f32 %v5018, %v5058
    %v5060 = vpop.f32.mrb[0].mxu0
    %v5061 = vpop.f32.mrb[0].mxu0
    %5062 = vdwg.mxu0
    %5063 = vmatprep.subr.bf16.mxu0 %v3507
    %5064 = vmatpush1.bf16.msra.mxu0 %v3506
    %5065 = vmatprep.subr.bf16.mxu0 %v3509
    %5066 = vmatpush1.bf16.msra.mxu0 %v3508
    %5067 = vmatprep.subr.bf16.mxu0 %v3511
    %5068 = vmatpush1.bf16.msra.mxu0 %v3510
    %5069 = vmatprep.subr.bf16.mxu0 %v3513
    %5070 = vmatpush1.bf16.msra.mxu0 %v3512
    %5071 = vmatprep.subr.bf16.mxu0 %v3515
    %5072 = vmatpush1.bf16.msra.mxu0 %v3514
    %5073 = vmatprep.subr.bf16.mxu0 %v3517
    %5074 = vmatpush1.bf16.msra.mxu0 %v3516
    %5075 = vmatprep.subr.bf16.mxu0 %v3519
    %5076 = vmatpush1.bf16.msra.mxu0 %v3518
    %5077 = vmatprep.subr.bf16.mxu0 %v3521
    %5078 = vmatpush1.bf16.msra.mxu0 %v3520
    %5079 = vmatprep.subr.bf16.mxu0 %v3523
    %5080 = vmatpush1.bf16.msra.mxu0 %v3522
    %5081 = vmatprep.subr.bf16.mxu0 %v3525
    %5082 = vmatpush1.bf16.msra.mxu0 %v3524
    %5083 = vmatprep.subr.bf16.mxu0 %v3527
    %5084 = vmatpush1.bf16.msra.mxu0 %v3526
    %5085 = vmatprep.subr.bf16.mxu0 %v3529
    %5086 = vmatpush1.bf16.msra.mxu0 %v3528
    %5087 = vmatprep.subr.bf16.mxu0 %v3531
    %5088 = vmatpush1.bf16.msra.mxu0 %v3530
    %5089 = vmatprep.subr.bf16.mxu0 %v3533
    %5090 = vmatpush1.bf16.msra.mxu0 %v3532
    %5091 = vmatprep.subr.bf16.mxu0 %v3535
    %5092 = vmatpush1.bf16.msra.mxu0 %v3534
    %5093 = vmatprep.subr.bf16.mxu0 %v3537
    %5094 = vmatpush1.bf16.msra.mxu0 %v3536
    %5095 = vmatprep.mubr.bf16.mxu0 %v120
    %5096 = vmatmul.mubr.bf16.gmra.mrb[0].mxu0 %v119
    %v5097 = vpop.f32.mrb[0].mxu0
    %v5098 = vadd.f32 %v5057, %v5097
    %v5099 = vpop.f32.mrb[0].mxu0
    %v5100 = vadd.f32 %v5059, %v5099
    %v5101 = vpop.f32.mrb[0].mxu0
    %v5102 = vpop.f32.mrb[0].mxu0
    %5103 = vdwg.mxu0
    %5104 = vmatprep.subr.bf16.mxu0 %v3539
    %5105 = vmatpush1.bf16.msra.mxu0 %v3538
    %5106 = vmatprep.subr.bf16.mxu0 %v3541
    %5107 = vmatpush1.bf16.msra.mxu0 %v3540
    %5108 = vmatprep.subr.bf16.mxu0 %v3543
    %5109 = vmatpush1.bf16.msra.mxu0 %v3542
    %5110 = vmatprep.subr.bf16.mxu0 %v3545
    %5111 = vmatpush1.bf16.msra.mxu0 %v3544
    %5112 = vmatprep.subr.bf16.mxu0 %v3547
    %5113 = vmatpush1.bf16.msra.mxu0 %v3546
    %5114 = vmatprep.subr.bf16.mxu0 %v4241
    %5115 = vmatpush1.bf16.msra.mxu0 %v4238
    %5116 = vmatprep.subr.bf16.mxu0 0
    %5117 = vmatpush1.bf16.msra.mxu0 0
    %5118 = vmatprep.subr.bf16.mxu0 0
    %5119 = vmatpush1.bf16.msra.mxu0 0
    %5120 = vmatprep.subr.bf16.mxu0 0
    %5121 = vmatpush1.bf16.msra.mxu0 0
    %5122 = vmatprep.subr.bf16.mxu0 0
    %5123 = vmatpush1.bf16.msra.mxu0 0
    %5124 = vmatprep.subr.bf16.mxu0 0
    %5125 = vmatpush1.bf16.msra.mxu0 0
    %5126 = vmatprep.subr.bf16.mxu0 0
    %5127 = vmatpush1.bf16.msra.mxu0 0
    %5128 = vmatprep.subr.bf16.mxu0 0
    %5129 = vmatpush1.bf16.msra.mxu0 0
    %5130 = vmatprep.subr.bf16.mxu0 0
    %5131 = vmatpush1.bf16.msra.mxu0 0
    %5132 = vmatprep.subr.bf16.mxu0 0
    %5133 = vmatpush1.bf16.msra.mxu0 0
    %5134 = vmatprep.subr.bf16.mxu0 0
    %5135 = vmatpush1.bf16.msra.mxu0 0
    %5136 = vmatprep.mubr.bf16.mxu0 0
    %5137 = vmatmul.mubr.bf16.gmra.mrb[0].mxu0 %v4234
    %v5138 = vpop.f32.mrb[0].mxu0
    %v5139 = vadd.f32 %v5098, %v5138
    %v5140 = vpop.f32.mrb[0].mxu0
    %v5141 = vadd.f32 %v5100, %v5140
    %v5142 = vpop.f32.mrb[0].mxu0
    %v5143 = vpop.f32.mrb[0].mxu0
    %5144 = vdwg.mxu0
    %v5145 = vmax.f32 %v5139, 0.0
    %v5146 = vmax.f32 %v5141, 0.0
    %v5147 = vpack.c.bf16 %v5145, %v5145
    %v5148 = vpack.c.bf16 %v5146, %v5146
    %v5149 = vld [vmem:[%s3] sm:$0xf]
    %v5150 = vld [vmem:[%s3 + $0x4] sm:$0xf]
    %v5151 = vld [vmem:[%s3 + $0x8] sm:$0xf]
    %v5152 = vld [vmem:[%s3 + $0xc] sm:$0xf]
    %v5153 = vld [vmem:[%s3 + $0x10] sm:$0xf]
    %v5154 = vld [vmem:[%s3 + $0x14] sm:$0xf]
    %v5155 = vld [vmem:[%s3 + $0x18] sm:$0xf]
    %v5156 = vld [vmem:[%s3 + $0x1c] sm:$0xf]
    %v5157 = vld [vmem:[%s3 + $0x20] sm:$0xf]
    %v5158 = vld [vmem:[%s3 + $0x24] sm:$0xf]
    %v5159 = vld [vmem:[%s3 + $0x28] sm:$0xf]
    %v5160 = vld [vmem:[%s3 + $0x2c] sm:$0xf]
    %v5161 = vld [vmem:[%s3 + $0x30] sm:$0xf]
    %v5162 = vld [vmem:[%s3 + $0x34] sm:$0xf]
    %v5163 = vld [vmem:[%s3 + $0x38] sm:$0xf]
    %v5164 = vld [vmem:[%s3 + $0x3c] sm:$0xf]
    %v5165 = vld [vmem:[%s3 + $0x40] sm:$0xf]
    %v5166 = vld [vmem:[%s3 + $0x44] sm:$0xf]
    %v5167 = vld [vmem:[%s3 + $0x48] sm:$0xf]
    %v5168 = vld [vmem:[%s3 + $0x4c] sm:$0xf]
    %v5169 = vld [vmem:[%s3 + $0x50] sm:$0xf]
    %v5170 = vld [vmem:[%s3 + $0x54] sm:$0xf]
    %v5171 = vld [vmem:[%s3 + $0x58] sm:$0xf]
    %v5172 = vld [vmem:[%s3 + $0x5c] sm:$0xf]
    %v5173 = vld [vmem:[%s3 + $0x60] sm:$0xf]
    %v5174 = vld [vmem:[%s3 + $0x64] sm:$0xf]
    %v5175 = vld [vmem:[%s3 + $0x68] sm:$0xf]
    %v5176 = vld [vmem:[%s3 + $0x6c] sm:$0xf]
    %v5177 = vld [vmem:[%s3 + $0x70] sm:$0xf]
    %v5178 = vld [vmem:[%s3 + $0x74] sm:$0xf]
    %v5179 = vld [vmem:[%s3 + $0x78] sm:$0xf]
    %v5180 = vld [vmem:[%s3 + $0x7c] sm:$0xf]
    %v5181 = vld [vmem:[%s4] sm:$0x1]
    %v5183 = vlaneseq
    %v5184 = vshrl.u32 %v5183, 7
    %v5185 = vsub.s32 0, %v5184
    %v5186 = vrot.slane %v5181, %v5185
    %v5220 = vunpack.c.l.b16 %v5149
    %v5221 = vunpack.c.l.b16 %v5150
    %v5222 = vunpack.c.l.b16 %v5151
    %v5223 = vunpack.c.l.b16 %v5152
    %v5224 = vunpack.c.l.b16 %v5153
    %v5225 = vunpack.c.l.b16 %v5154
    %v5226 = vunpack.c.l.b16 %v5155
    %v5227 = vunpack.c.l.b16 %v5156
    %v5228 = vunpack.c.l.b16 %v5157
    %v5229 = vunpack.c.l.b16 %v5158
    %v5230 = vunpack.c.l.b16 %v5159
    %v5231 = vunpack.c.l.b16 %v5160
    %v5232 = vunpack.c.l.b16 %v5161
    %v5233 = vunpack.c.l.b16 %v5162
    %v5234 = vunpack.c.l.b16 %v5163
    %v5235 = vunpack.c.l.b16 %v5164
    %v5236 = vunpack.c.l.b16 %v5165
    %v5237 = vunpack.c.l.b16 %v5166
    %v5238 = vunpack.c.l.b16 %v5167
    %v5239 = vunpack.c.l.b16 %v5168
    %v5240 = vunpack.c.l.b16 %v5169
    %v5241 = vunpack.c.l.b16 %v5170
    %v5242 = vunpack.c.l.b16 %v5171
    %v5243 = vunpack.c.l.b16 %v5172
    %v5244 = vunpack.c.l.b16 %v5173
    %v5245 = vunpack.c.l.b16 %v5174
    %v5246 = vunpack.c.l.b16 %v5175
    %v5247 = vunpack.c.l.b16 %v5176
    %v5248 = vunpack.c.l.b16 %v5177
    %v5249 = vunpack.c.l.b16 %v5178
    %v5250 = vunpack.c.l.b16 %v5179
    %v5251 = vunpack.c.l.b16 %v5180
    %v5252 = vpack.c.b16 %v5221, %v5220
    %v5253 = vpack.c.b16 %v5223, %v5222
    %v5254 = vpack.c.b16 %v5225, %v5224
    %v5255 = vpack.c.b16 %v5227, %v5226
    %v5256 = vpack.c.b16 %v5229, %v5228
    %v5257 = vpack.c.b16 %v5231, %v5230
    %v5258 = vpack.c.b16 %v5233, %v5232
    %v5259 = vpack.c.b16 %v5235, %v5234
    %v5260 = vpack.c.b16 %v5237, %v5236
    %v5261 = vpack.c.b16 %v5239, %v5238
    %v5262 = vpack.c.b16 %v5241, %v5240
    %v5263 = vpack.c.b16 %v5243, %v5242
    %v5264 = vpack.c.b16 %v5245, %v5244
    %v5265 = vpack.c.b16 %v5247, %v5246
    %v5266 = vpack.c.b16 %v5249, %v5248
    %v5267 = vpack.c.b16 %v5251, %v5250
    %5284 = vmatprep.subr.bf16.mxu0 0
    %5285 = vmatpush1.bf16.msra.mxu0 %v5252
    %5286 = vmatprep.subr.bf16.mxu0 0
    %5287 = vmatpush1.bf16.msra.mxu0 %v5253
    %5288 = vmatprep.subr.bf16.mxu0 0
    %5289 = vmatpush1.bf16.msra.mxu0 %v5254
    %5290 = vmatprep.subr.bf16.mxu0 0
    %5291 = vmatpush1.bf16.msra.mxu0 %v5255
    %5292 = vmatprep.subr.bf16.mxu0 0
    %5293 = vmatpush1.bf16.msra.mxu0 %v5256
    %5294 = vmatprep.subr.bf16.mxu0 0
    %5295 = vmatpush1.bf16.msra.mxu0 %v5257
    %5296 = vmatprep.subr.bf16.mxu0 0
    %5297 = vmatpush1.bf16.msra.mxu0 %v5258
    %5298 = vmatprep.subr.bf16.mxu0 0
    %5299 = vmatpush1.bf16.msra.mxu0 %v5259
    %5300 = vmatprep.subr.bf16.mxu0 0
    %5301 = vmatpush1.bf16.msra.mxu0 %v5260
    %5302 = vmatprep.subr.bf16.mxu0 0
    %5303 = vmatpush1.bf16.msra.mxu0 %v5261
    %5304 = vmatprep.subr.bf16.mxu0 0
    %5305 = vmatpush1.bf16.msra.mxu0 %v5262
    %5306 = vmatprep.subr.bf16.mxu0 0
    %5307 = vmatpush1.bf16.msra.mxu0 %v5263
    %5308 = vmatprep.subr.bf16.mxu0 0
    %5309 = vmatpush1.bf16.msra.mxu0 %v5264
    %5310 = vmatprep.subr.bf16.mxu0 0
    %5311 = vmatpush1.bf16.msra.mxu0 %v5265
    %5312 = vmatprep.subr.bf16.mxu0 0
    %5313 = vmatpush1.bf16.msra.mxu0 %v5266
    %5314 = vmatprep.subr.bf16.mxu0 0
    %5315 = vmatpush1.bf16.msra.mxu0 %v5267
    %5316 = vmatprep.mubr.bf16.mxu0 %v5148
    %5317 = vmatmul.mubr.bf16.gmra.mrb[0].mxu0 %v5147
    %v5318 = vpop.f32.mrb[0].mxu0
    %v5319 = vadd.f32 %v5186, %v5318
    %v5320 = vpop.f32.mrb[0].mxu0
    %v5321 = vpop.f32.mrb[0].mxu0
    %v5322 = vpop.f32.mrb[0].mxu0
    %5323 = vdwg.mxu0
    %v5324 = vmax.f32 %v5319, 0.0
    %v5325 = vpack.c.bf16 %v5324, %v5324
    %v5326 = vld [vmem:[%s5] sm:$0xf]
    %v5327 = vld [vmem:[%s5 + $0x4] sm:$0xf]
    %v5328 = vld [vmem:[%s5 + $0x8] sm:$0xf]
    %v5329 = vld [vmem:[%s5 + $0xc] sm:$0xf]
    %v5330 = vld [vmem:[%s5 + $0x10] sm:$0xf]
    %v5331 = vld [vmem:[%s5 + $0x14] sm:$0xf]
    %v5332 = vld [vmem:[%s5 + $0x18] sm:$0xf]
    %v5333 = vld [vmem:[%s5 + $0x1c] sm:$0xf]
    %v5334 = vld [vmem:[%s5 + $0x20] sm:$0xf]
    %v5335 = vld [vmem:[%s5 + $0x24] sm:$0xf]
    %v5336 = vld [vmem:[%s5 + $0x28] sm:$0xf]
    %v5337 = vld [vmem:[%s5 + $0x2c] sm:$0xf]
    %v5338 = vld [vmem:[%s5 + $0x30] sm:$0xf]
    %v5339 = vld [vmem:[%s5 + $0x34] sm:$0xf]
    %v5340 = vld [vmem:[%s5 + $0x38] sm:$0xf]
    %v5341 = vld [vmem:[%s5 + $0x3c] sm:$0xf]
    %v5342 = vld [vmem:[%s6] sm:$0x1]
    %v5344 = vlaneseq
    %v5345 = vshrl.u32 %v5344, 7
    %v5346 = vsub.s32 0, %v5345
    %v5347 = vrot.slane %v5342, %v5346
    %v5365 = vunpack.c.l.b16 %v5326
    %v5366 = vunpack.c.l.b16 %v5327
    %v5367 = vunpack.c.l.b16 %v5328
    %v5368 = vunpack.c.l.b16 %v5329
    %v5369 = vunpack.c.l.b16 %v5330
    %v5370 = vunpack.c.l.b16 %v5331
    %v5371 = vunpack.c.l.b16 %v5332
    %v5372 = vunpack.c.l.b16 %v5333
    %v5373 = vunpack.c.l.b16 %v5334
    %v5374 = vunpack.c.l.b16 %v5335
    %v5375 = vunpack.c.l.b16 %v5336
    %v5376 = vunpack.c.l.b16 %v5337
    %v5377 = vunpack.c.l.b16 %v5338
    %v5378 = vunpack.c.l.b16 %v5339
    %v5379 = vunpack.c.l.b16 %v5340
    %v5380 = vunpack.c.l.b16 %v5341
    %v5381 = vpack.c.b16 %v5366, %v5365
    %v5382 = vpack.c.b16 %v5368, %v5367
    %v5383 = vpack.c.b16 %v5370, %v5369
    %v5384 = vpack.c.b16 %v5372, %v5371
    %v5385 = vpack.c.b16 %v5374, %v5373
    %v5386 = vpack.c.b16 %v5376, %v5375
    %v5387 = vpack.c.b16 %v5378, %v5377
    %v5388 = vpack.c.b16 %v5380, %v5379
    %5397 = vmatprep.subr.bf16.mxu0 0
    %5398 = vmatpush1.bf16.msra.mxu0 %v5381
    %5399 = vmatprep.subr.bf16.mxu0 0
    %5400 = vmatpush1.bf16.msra.mxu0 %v5382
    %5401 = vmatprep.subr.bf16.mxu0 0
    %5402 = vmatpush1.bf16.msra.mxu0 %v5383
    %5403 = vmatprep.subr.bf16.mxu0 0
    %5404 = vmatpush1.bf16.msra.mxu0 %v5384
    %5405 = vmatprep.subr.bf16.mxu0 0
    %5406 = vmatpush1.bf16.msra.mxu0 %v5385
    %5407 = vmatprep.subr.bf16.mxu0 0
    %5408 = vmatpush1.bf16.msra.mxu0 %v5386
    %5409 = vmatprep.subr.bf16.mxu0 0
    %5410 = vmatpush1.bf16.msra.mxu0 %v5387
    %5411 = vmatprep.subr.bf16.mxu0 0
    %5412 = vmatpush1.bf16.msra.mxu0 %v5388
    %5413 = vmatprep.subr.bf16.mxu0 0
    %5414 = vmatpush1.bf16.msra.mxu0 0
    %5415 = vmatprep.subr.bf16.mxu0 0
    %5416 = vmatpush1.bf16.msra.mxu0 0
    %5417 = vmatprep.subr.bf16.mxu0 0
    %5418 = vmatpush1.bf16.msra.mxu0 0
    %5419 = vmatprep.subr.bf16.mxu0 0
    %5420 = vmatpush1.bf16.msra.mxu0 0
    %5421 = vmatprep.subr.bf16.mxu0 0
    %5422 = vmatpush1.bf16.msra.mxu0 0
    %5423 = vmatprep.subr.bf16.mxu0 0
    %5424 = vmatpush1.bf16.msra.mxu0 0
    %5425 = vmatprep.subr.bf16.mxu0 0
    %5426 = vmatpush1.bf16.msra.mxu0 0
    %5427 = vmatprep.subr.bf16.mxu0 0
    %5428 = vmatpush1.bf16.msra.mxu0 0
    %5429 = vmatprep.mubr.bf16.mxu0 0
    %5430 = vmatmul.mubr.bf16.gmra.mrb[0].mxu0 %v5325
    %v5431 = vpop.f32.mrb[0].mxu0
    %v5432 = vadd.f32 %v5347, %v5431
    %v5433 = vpop.f32.mrb[0].mxu0
    %v5434 = vpop.f32.mrb[0].mxu0
    %v5435 = vpop.f32.mrb[0].mxu0
    %5436 = vdwg.mxu0
    %v5437 = vmax.f32 %v5432, 0.0
    %v5438 = vld [vmem:[%s7] sm:$0x1]
    %v5439 = vpack.c.bf16 %v5437, %v5437
    %v5440 = vld [vmem:[#allocation2] sm:$0x1]
    %5442 = vset.pattern.permute.xlu0 0
    %5443 = vperm.xlu0 %5442, %v5440
    %v5444 = vpop.permute.xlu0 %5443
    %v5446 = vlaneseq
    %v5447 = vshrl.u32 %v5446, 7
    %v5448 = vsub.s32 0, %v5447
    %v5449 = vrot.slane %v5444, %v5448
    %5450 = vmatprep.subr.bf16.mxu0 0
    %5451 = vmatpush1.bf16.xpose.msra.mxu0 %v5439
    %5452 = vmatprep.subr.bf16.mxu0 0
    %5453 = vmatpush1.bf16.xpose.msra.mxu0 0
    %5454 = vmatprep.subr.bf16.mxu0 0
    %5455 = vmatpush1.bf16.xpose.msra.mxu0 0
    %5456 = vmatprep.subr.bf16.mxu0 0
    %5457 = vmatpush1.bf16.xpose.msra.mxu0 0
    %5458 = vmatprep.subr.bf16.mxu0 0
    %5459 = vmatpush1.bf16.xpose.msra.mxu0 0
    %5460 = vmatprep.subr.bf16.mxu0 0
    %5461 = vmatpush1.bf16.xpose.msra.mxu0 0
    %5462 = vmatprep.subr.bf16.mxu0 0
    %5463 = vmatpush1.bf16.xpose.msra.mxu0 0
    %5464 = vmatprep.subr.bf16.mxu0 0
    %5465 = vmatpush1.bf16.xpose.msra.mxu0 0
    %5466 = vmatprep.subr.bf16.mxu0 0
    %5467 = vmatpush1.bf16.xpose.msra.mxu0 0
    %5468 = vmatprep.subr.bf16.mxu0 0
    %5469 = vmatpush1.bf16.xpose.msra.mxu0 0
    %5470 = vmatprep.subr.bf16.mxu0 0
    %5471 = vmatpush1.bf16.xpose.msra.mxu0 0
    %5472 = vmatprep.subr.bf16.mxu0 0
    %5473 = vmatpush1.bf16.xpose.msra.mxu0 0
    %5474 = vmatprep.subr.bf16.mxu0 0
    %5475 = vmatpush1.bf16.xpose.msra.mxu0 0
    %5476 = vmatprep.subr.bf16.mxu0 0
    %5477 = vmatpush1.bf16.xpose.msra.mxu0 0
    %5478 = vmatprep.subr.bf16.mxu0 0
    %5479 = vmatpush1.bf16.xpose.msra.mxu0 0
    %5480 = vmatprep.subr.bf16.mxu0 0
    %5481 = vmatpush1.bf16.xpose.msra.mxu0 0
    %5482 = vmatprep.mubr.bf16.mxu0 0
    %5483 = vmatmul.mubr.bf16.gmra.mrb[0].mxu0 %v5438
    %v5484 = vpop.f32.mrb[0].mxu0
    %v5485 = vadd.f32 %v5449, %v5484
    %v5486 = vpop.f32.mrb[0].mxu0
    %v5487 = vpop.f32.mrb[0].mxu0
    %v5488 = vpop.f32.mrb[0].mxu0
    %5489 = vdwg.mxu0
    %v5490 = vxor.u32 %v5485, 2147483648
    %v5491 = vmul.f32 %v5490, 1.442695
    %v5492 = vpow.pop %v5491
    %v5493 = vadd.f32 %v5492, 1.0
    %v5494 = vrcp.pop %v5493
    %v5495 = vmul.f32 1.0, %v5494
    %vm5496 = vcmask 57344
    %5497 = vst.msk [vmem:[#allocation3] sm:$0x1] %vm5496, %v5495
    // Predicated region
    $region38: #{_forward_jit.1} parent=1 // pred_check
      _
    $region39: #{_forward_jit.1} parent=1 // pred_check_branch
      %5499 = sbr.rel (0) target = $region41
    $region40: #{_forward_jit.1} parent=1 // pred_region
      %s5501 = ssub.s32 16, 16
      %5502 = vsyncadd [#allocation4], %s5501
      %s5504 = sshll.u32 [#allocation3], 4
      %s5505 = int_to_ptr.vmem [resolvable:$true] %s5504
      %5507 = dma.vmem_to_hbm [thread:$0]  %s5505, 16, %s9, [#allocation4]
    $region41: #{_forward_jit.1} parent=1 // pred_fallthru
      _
    // Predicated region
    $region42: #{_forward_jit.1} parent=1 // pred_check
      _
    $region43: #{_forward_jit.1} parent=1 // pred_check_branch
      %5509 = sbr.rel (0) target = $region45
    $region44: #{_forward_jit.1} parent=1 // pred_region
      %5510 = dma.done [#allocation4], 16
    $region45: #{_forward_jit.1} parent=1 // pred_fallthru
      _
    %5511 = vsyncpa [#allocation4], 1

</llo_original>
